<compile_context>
chip_gen: v7x
topology: tpu7x:2x2x1
jax: 0.10.0
libtpu: 0.0.40
codegen_flags: <defaults>
</compile_context>

<pallas_src>
import functools
import math

import jax
import jax.numpy as jnp
from jax.experimental import pallas as pl
from jax.experimental.pallas import tpu as pltpu


def _layer_norm(x, gamma, beta, eps=1e-6):
    # eps=1e-6 matches the jadore801120 Transformer (nn.LayerNorm default 1e-5).
    mean = jnp.mean(x, axis=-1, keepdims=True)
    var = jnp.mean((x - mean) ** 2, axis=-1, keepdims=True)
    return (x - mean) * jax.lax.rsqrt(var + eps) * gamma + beta


def encoder_layer_kernel(n_head, d_k, d_v, tq, matmul_dtype, approx_recip,
                         x_ref, mask_ref,
                         wq_ref, wk_ref, wv_ref, wfc_ref,
                         ln1_g_ref, ln1_b_ref,
                         w1_ref, b1_ref, w2_ref, b2_ref,
                         ln2_g_ref, ln2_b_ref,
                         out_ref, attn_ref,
                         k_scratch, v_scratch):
    dt = matmul_dtype
    qi = pl.program_id(1)

    # K / V projections: computed once per batch element (at qi == 0) into
    # persistent VMEM scratch, reused by all query tiles of this batch row.
    @pl.when(qi == 0)
    def _():
        xkv = x_ref[0].astype(dt)                                     # (S, D)
        k_scratch[...] = jnp.dot(
            xkv, wk_ref[...], preferred_element_type=jnp.float32).astype(dt)
        v_scratch[...] = jnp.dot(
            xkv, wv_ref[...], preferred_element_type=jnp.float32).astype(dt)

    # Query rows for this grid step, sliced out of the resident (S, D) block
    # (no separate duplicated query input / DMA).
    start = pl.multiple_of(qi * tq, tq)
    xq = x_ref[0, pl.ds(start, tq), :]                            # (tq, D) f32
    residual = xq

    q = jnp.dot(xq.astype(dt), wq_ref[...], preferred_element_type=jnp.float32)
    q = (q * (1.0 / math.sqrt(d_k))).astype(dt)     # fold 1/sqrt(d_k) in once

    # Mask -> additive bias, computed once per step. Shape (1, S) or (tq, S).
    mask_bias = jnp.where(mask_ref[0] == 0, -1e9, 0.0).astype(jnp.float32)

    out_heads = []
    # TODO(synk): for very large n_head express this loop as one batched
    # lax.dot_general ((H,tq,d_k) x (H,S,d_k)); for long sequences add a
    # key-axis tile (flash-style online softmax) so intermediates are
    # O(tq*tk) instead of O(tq*S).
    for h in range(n_head):
        qh = q[:, h * d_k:(h + 1) * d_k]                          # (tq, d_k)
        kh = k_scratch[:, h * d_k:(h + 1) * d_k]                  # (S,  d_k)
        vh = v_scratch[:, h * d_v:(h + 1) * d_v]                  # (S,  d_v)

        # qh @ kh.T without materializing the transpose.
        scores = jax.lax.dot_general(
            qh, kh, (((1,), (1,)), ((), ())),
            preferred_element_type=jnp.float32) + mask_bias       # (tq, S)

        m = jnp.max(scores, axis=-1, keepdims=True)
        e = jnp.exp(scores - m)
        denom = jnp.sum(e, axis=-1, keepdims=True)
        if approx_recip:
            attn_h = e * pl.reciprocal(denom, approx=True)  # EUP, frees VALU
        else:
            attn_h = e / denom

        # One cast, reused for both the lane-dense store and the AV matmul
        # (no jnp.stack of all heads, no second (H, tq, S) slab).
        attn_store = attn_h.astype(attn_ref.dtype)
        attn_ref[0, h, :, :] = attn_store
        attn_mm = attn_store if attn_ref.dtype == dt else attn_h.astype(dt)
        out_heads.append(jnp.dot(attn_mm, vh,
                                 preferred_element_type=jnp.float32))  # (tq,dv)

    # Concat heads once, then ONE fc matmul with contraction n_head * d_v.
    concat = jnp.concatenate(out_heads, axis=-1)                   # (tq, H*dv)
    fc_out = jnp.dot(concat.astype(dt), wfc_ref[...],
                     preferred_element_type=jnp.float32)

    # TODO(synk): dropout omitted (eval-mode / identity semantics).
    attn_out = _layer_norm(fc_out + residual, ln1_g_ref[0], ln1_b_ref[0])

    # Position-wise feed-forward: w2(relu(w1(x))) + residual, then LayerNorm.
    h1 = jnp.maximum(
        jnp.dot(attn_out.astype(dt), w1_ref[...],
                preferred_element_type=jnp.float32) + b1_ref[0], 0.0)
    h2 = jnp.dot(h1.astype(dt), w2_ref[...],
                 preferred_element_type=jnp.float32) + b2_ref[0]
    out_ref[0] = _layer_norm(h2 + attn_out, ln2_g_ref[0],
                             ln2_b_ref[0]).astype(out_ref.dtype)


# Cached probe: does the installed jax accept pipeline_mode=pl.Buffered(1)?
_SINGLE_BUFFER_WEIGHTS_OK = [True]


def encoder_layer(x, mask, params, n_head, d_k, d_v, *,
                  matmul_dtype=jnp.bfloat16, attn_dtype=jnp.bfloat16, tq=None):
    """x: (B, S, D) f32.  mask: (B, 1, S) key-padding mask or (B, S, S)
    attention mask (0 = masked), or None (no masking)."""
    B, S, D = x.shape
    d_inner = params["w1"].shape[1]
    dt = jnp.dtype(matmul_dtype)
    attn_dt = jnp.dtype(attn_dtype)
    approx_recip = dt == jnp.dtype(jnp.bfloat16)

    if mask is None:
        mask = jnp.ones((B, 1, S), jnp.int32)
    mask = mask.astype(jnp.int32)
    assert mask.ndim == 3 and mask.shape[0] == B and mask.shape[-1] == S
    broadcast_mask = mask.shape[1] == 1
    if not broadcast_mask:
        assert mask.shape[1] == S, "mask must be (B, 1, S) or (B, S, S)"

    # Default query tile: 256 on v6e/v7x, 128 on v5e, with a crude VMEM budget
    # back-off (double-buffered (1, H, tq, S) attention block must stay well
    # under v7x's 64 MiB physical VMEM at large H * S).
    if tq is None:
        kind = jax.devices()[0].device_kind.lower()
        tq = 256 if ("v6" in kind or "v7" in kind) else 128
        tq = min(tq, S)
        while tq > 8 and 2 * n_head * tq * S * attn_dt.itemsize > (32 << 20):
            tq //= 2
        while tq > 1 and S % tq:
            tq //= 2
    assert S % tq == 0, "sequence length must be a multiple of the query tile"
    n_q = S // tq
    mask_rows = 1 if broadcast_mask else tq

    # Scoped VMEM limit: 3/4 of physical (≈96 MiB on v5e/v6e, 48 MiB on v7x)
    # instead of the 16/32 MiB defaults.
    try:
        phys_vmem = int(pltpu.get_tpu_info().vmem_capacity_bytes)
    except Exception:
        phys_vmem = 64 << 20
    vmem_limit = min(phys_vmem * 3 // 4, 110 << 20)

    # Cast matmul weights once on the host (halves weight DMA bytes in bf16
    # mode).  Biases / LayerNorm params stay f32 (applied after accumulation).
    wq = params["wq"].astype(dt)
    wk = params["wk"].astype(dt)
    wv = params["wv"].astype(dt)
    wfc = params["wfc"].astype(dt)
    w1 = params["w1"].astype(dt)
    w2 = params["w2"].astype(dt)

    kernel = functools.partial(encoder_layer_kernel, n_head, d_k, d_v, tq, dt,
                               approx_recip)

    out_shapes = (
        jax.ShapeDtypeStruct((B, S, D), jnp.float32),
        jax.ShapeDtypeStruct((B, n_head, S, S), attn_dt),
    )

    args = (x, mask, wq, wk, wv, wfc,
            params["ln1_g"], params["ln1_b"],
            w1, params["b1"], w2, params["b2"],
            params["ln2_g"], params["ln2_b"])

    def build(single_buffer_weights):
        # Replicated weight / bias blocks have a constant block index, so there
        # is nothing to pipeline: request single buffering to halve their
        # resident VMEM footprint (mainly for v7x headroom).
        wmode = pl.Buffered(1) if single_buffer_weights else None

        def rep(shape):
            n = len(shape)
            idx = lambda b, qi, _n=n: (0,) * _n
            if wmode is None:
                return pl.BlockSpec(shape, idx)
            return pl.BlockSpec(shape, idx, pipeline_mode=wmode)

        mask_idx = ((lambda b, qi: (b, 0, 0)) if broadcast_mask
                    else (lambda b, qi: (b, qi, 0)))
        in_specs = [
            pl.BlockSpec((1, S, D), lambda b, qi: (b, 0, 0)),   # x (Q rows + K/V)
            pl.BlockSpec((1, mask_rows, S), mask_idx),          # mask
            rep((D, n_head * d_k)),                             # wq
            rep((D, n_head * d_k)),                             # wk
            rep((D, n_head * d_v)),                             # wv
            rep((n_head * d_v, D)),                             # fc
            rep((1, D)), rep((1, D)),                           # ln1 gamma/beta
            rep((D, d_inner)), rep((1, d_inner)),               # w1, b1
            rep((d_inner, D)), rep((1, D)),                     # w2, b2
            rep((1, D)), rep((1, D)),                           # ln2 gamma/beta
        ]
        out_specs = (
            pl.BlockSpec((1, tq, D), lambda b, qi: (b, qi, 0)),
            pl.BlockSpec((1, n_head, tq, S), lambda b, qi: (b, 0, qi, 0)),
        )
        return pl.pallas_call(
            kernel,
            out_shape=out_shapes,
            grid=(B, n_q),
            in_specs=in_specs,
            out_specs=out_specs,
            scratch_shapes=[pltpu.VMEM((S, n_head * d_k), dt),   # K (persistent)
                            pltpu.VMEM((S, n_head * d_v), dt)],  # V (persistent)
            compiler_params=pltpu.CompilerParams(
                # qi must be "arbitrary": the qi == 0 step fills the K/V
                # scratch that the remaining query tiles reuse.
                dimension_semantics=("parallel", "arbitrary"),
                vmem_limit_bytes=vmem_limit),
        )

    if _SINGLE_BUFFER_WEIGHTS_OK[0]:
        try:
            return build(True)(*args)
        except Exception:
            _SINGLE_BUFFER_WEIGHTS_OK[0] = False    # fall back to default buffering
    return build(False)(*args)


def reference(x, mask, params, n_head, d_k, d_v):
    """Pure-JAX (f32) mirror of the PyTorch forward (eval mode)."""
    B, S, D = x.shape
    q = (x @ params["wq"]).reshape(B, S, n_head, d_k).transpose(0, 2, 1, 3)
    k = (x @ params["wk"]).reshape(B, S, n_head, d_k).transpose(0, 2, 1, 3)
    v = (x @ params["wv"]).reshape(B, S, n_head, d_v).transpose(0, 2, 1, 3)
    scores = jnp.einsum("bhqd,bhkd->bhqk", q / math.sqrt(d_k), k)
    scores = jnp.where(mask[:, None, :, :] == 0, -1e9, scores)  # (B,1,S) or (B,S,S)
    attn = jax.nn.softmax(scores, axis=-1)
    o = jnp.einsum("bhqk,bhkd->bhqd", attn, v).transpose(0, 2, 1, 3)
    o = o.reshape(B, S, n_head * d_v) @ params["wfc"] + x
    o = _layer_norm(o, params["ln1_g"][0], params["ln1_b"][0])
    f = jax.nn.relu(o @ params["w1"] + params["b1"][0]) @ params["w2"] + params["b2"][0]
    f = _layer_norm(f + o, params["ln2_g"][0], params["ln2_b"][0])
    return f, attn


if __name__ == "__main__":
    B, S = 2, 16
    d_model, d_inner, n_head, d_k, d_v = 32, 64, 4, 8, 8

    key = jax.random.PRNGKey(0)
    keys = jax.random.split(key, 10)

    def init(k, shape, scale=0.1):
        return (scale * jax.random.normal(k, shape)).astype(jnp.float32)

    params = {
        "wq": init(keys[0], (d_model, n_head * d_k)),
        "wk": init(keys[1], (d_model, n_head * d_k)),
        "wv": init(keys[2], (d_model, n_head * d_v)),
        "wfc": init(keys[3], (n_head * d_v, d_model)),
        "ln1_g": jnp.ones((1, d_model), jnp.float32),
        "ln1_b": jnp.zeros((1, d_model), jnp.float32),
        "w1": init(keys[4], (d_model, d_inner)),
        "b1": init(keys[5], (1, d_inner)),
        "w2": init(keys[6], (d_inner, d_model)),
        "b2": init(keys[7], (1, d_model)),
        "ln2_g": jnp.ones((1, d_model), jnp.float32),
        "ln2_b": jnp.zeros((1, d_model), jnp.float32),
    }

    x = jax.random.normal(keys[8], (B, S, d_model), dtype=jnp.float32)
    # Key-padding mask (B, 1, S): last three keys of batch 1 are masked.
    pad_mask = jnp.ones((B, 1, S), jnp.int32).at[1, :, -3:].set(0)

    # NOTE: "exact" tolerances are 5e-3 because XLA's default f32 matmul on
    # TPU runs at reduced (bf16-pass) precision, so kernel and reference may
    # legitimately differ at the ~1e-3 level.
    TOL_EXACT = dict(atol=5e-3, rtol=5e-3)
    TOL_FAST = dict(atol=5e-2, rtol=5e-2)

    # 1) f32 path with tq=8 (two query tiles per batch element -> exercises
    #    the compute-once K/V scratch reuse), key-padding mask.
    ref_out, ref_attn = reference(x, pad_mask, params, n_head, d_k, d_v)
    out_f32, attn_f32 = encoder_layer(x, pad_mask, params, n_head, d_k, d_v,
                                      matmul_dtype=jnp.float32,
                                      attn_dtype=jnp.float32, tq=8)
    jax.block_until_ready((out_f32, attn_f32))
    assert out_f32.shape == (B, S, d_model)
    assert attn_f32.shape == (B, n_head, S, S)
    assert jnp.allclose(out_f32, ref_out, **TOL_EXACT), \
        "enc_output mismatch (f32, padding mask)"
    assert jnp.allclose(attn_f32, ref_attn, **TOL_EXACT), \
        "attn mismatch (f32, padding mask)"

    # 2) f32 path with a full (B, S, S) attention mask (causal * padding).
    full_mask = jnp.tril(jnp.ones((S, S), jnp.int32))[None] * pad_mask
    ref_out2, ref_attn2 = reference(x, full_mask, params, n_head, d_k, d_v)
    out_m, attn_m = encoder_layer(x, full_mask, params, n_head, d_k, d_v,
                                  matmul_dtype=jnp.float32,
                                  attn_dtype=jnp.float32, tq=8)
    jax.block_until_ready((out_m, attn_m))
    assert jnp.allclose(out_m, ref_out2, **TOL_EXACT), \
        "enc_output mismatch (f32, full mask)"
    assert jnp.allclose(attn_m, ref_attn2, **TOL_EXACT), \
        "attn mismatch (f32, full mask)"

    # 3) Fast path (defaults): bf16 matmul inputs, bf16 attention-prob output,
    #    approximate softmax reciprocal.
    out_fast, attn_fast = encoder_layer(x, pad_mask, params, n_head, d_k, d_v)
    jax.block_until_ready((out_fast, attn_fast))
    assert attn_fast.dtype == jnp.bfloat16
    assert jnp.allclose(out_fast, ref_out, **TOL_FAST), \
        "enc_output mismatch (bf16)"
    assert jnp.allclose(attn_fast.astype(jnp.float32), ref_attn, **TOL_FAST), \
        "attn mismatch (bf16)"

    print("KERNEL_OK")
</pallas_src>

<mosaic_0001>
module attributes {stable_mosaic.version = 11 : i64} {
  func.func @encoder_layer_kernel(%arg0: i32, %arg1: i32, %arg2: memref<1x16x32xf32, #tpu.memory_space<vmem>>, %arg3: memref<1x1x16xi32, #tpu.memory_space<vmem>>, %arg4: memref<32x32xf32, #tpu.memory_space<vmem>>, %arg5: memref<32x32xf32, #tpu.memory_space<vmem>>, %arg6: memref<32x32xf32, #tpu.memory_space<vmem>>, %arg7: memref<32x32xf32, #tpu.memory_space<vmem>>, %arg8: memref<1x32xf32, #tpu.memory_space<vmem>>, %arg9: memref<1x32xf32, #tpu.memory_space<vmem>>, %arg10: memref<32x64xf32, #tpu.memory_space<vmem>>, %arg11: memref<1x64xf32, #tpu.memory_space<vmem>>, %arg12: memref<64x32xf32, #tpu.memory_space<vmem>>, %arg13: memref<1x32xf32, #tpu.memory_space<vmem>>, %arg14: memref<1x32xf32, #tpu.memory_space<vmem>>, %arg15: memref<1x32xf32, #tpu.memory_space<vmem>>, %arg16: memref<1x8x32xf32, #tpu.memory_space<vmem>>, %arg17: memref<1x4x8x16xf32, #tpu.memory_space<vmem>>, %arg18: memref<16x32xf32, #tpu.memory_space<vmem>>, %arg19: memref<16x32xf32, #tpu.memory_space<vmem>>) attributes {dimension_semantics = [#tpu.dimension_semantics<parallel>, #tpu.dimension_semantics<arbitrary>], iteration_bounds = array<i64: 2, 2>, scalar_prefetch = 0 : i64, scratch_operands = 2 : i64, tpu.core_type = #tpu.core_type<tc>, window_params = [{transform_indices = @transform_0, window_bounds = array<i64: 1, 16, 32>}, {transform_indices = @transform_1, window_bounds = array<i64: 1, 1, 16>}, {pipeline_mode = #tpu.pipeline_mode<synchronous>, transform_indices = @transform_2, window_bounds = array<i64: 32, 32>}, {pipeline_mode = #tpu.pipeline_mode<synchronous>, transform_indices = @transform_3, window_bounds = array<i64: 32, 32>}, {pipeline_mode = #tpu.pipeline_mode<synchronous>, transform_indices = @transform_4, window_bounds = array<i64: 32, 32>}, {pipeline_mode = #tpu.pipeline_mode<synchronous>, transform_indices = @transform_5, window_bounds = array<i64: 32, 32>}, {pipeline_mode = #tpu.pipeline_mode<synchronous>, transform_indices = @transform_6, window_bounds = array<i64: 1, 32>}, {pipeline_mode = #tpu.pipeline_mode<synchronous>, transform_indices = @transform_7, window_bounds = array<i64: 1, 32>}, {pipeline_mode = #tpu.pipeline_mode<synchronous>, transform_indices = @transform_8, window_bounds = array<i64: 32, 64>}, {pipeline_mode = #tpu.pipeline_mode<synchronous>, transform_indices = @transform_9, window_bounds = array<i64: 1, 64>}, {pipeline_mode = #tpu.pipeline_mode<synchronous>, transform_indices = @transform_10, window_bounds = array<i64: 64, 32>}, {pipeline_mode = #tpu.pipeline_mode<synchronous>, transform_indices = @transform_11, window_bounds = array<i64: 1, 32>}, {pipeline_mode = #tpu.pipeline_mode<synchronous>, transform_indices = @transform_12, window_bounds = array<i64: 1, 32>}, {pipeline_mode = #tpu.pipeline_mode<synchronous>, transform_indices = @transform_13, window_bounds = array<i64: 1, 32>}, {transform_indices = @transform_14, window_bounds = array<i64: 1, 8, 32>}, {transform_indices = @transform_15, window_bounds = array<i64: 1, 4, 8, 16>}]} {
    %c0_i32 = arith.constant 0 : i32
    %0 = arith.cmpi eq, %arg1, %c0_i32 : i32
    %1 = arith.extui %0 : i1 to i32
    %c0_i32_0 = arith.constant 0 : i32
    %2 = arith.cmpi ne, %1, %c0_i32_0 : i32
    scf.if %2 {
      %c0_88 = arith.constant 0 : index
      %c0_89 = arith.constant 0 : index
      %c0_90 = arith.constant 0 : index
      %175 = vector.load %arg2[%c0_88, %c0_89, %c0_90] : memref<1x16x32xf32, #tpu.memory_space<vmem>>, vector<1x16x32xf32>
      %176 = vector.shape_cast %175 : vector<1x16x32xf32> to vector<16x32xf32>
      %c0_91 = arith.constant 0 : index
      %c0_92 = arith.constant 0 : index
      %177 = vector.load %arg5[%c0_91, %c0_92] : memref<32x32xf32, #tpu.memory_space<vmem>>, vector<32x32xf32>
      %cst_93 = arith.constant dense<0.000000e+00> : vector<16x32xf32>
      %178 = tpu.matmul %176, %177, %cst_93 {dimension_numbers = #tpu.dot_dimension_numbers<[1], [0], [0], [1], [0, 0, 1, 1], [], []>} : vector<16x32xf32>, vector<32x32xf32>, vector<16x32xf32> -> vector<16x32xf32>
      %c0_94 = arith.constant 0 : index
      %c0_95 = arith.constant 0 : index
      %179 = vector.load %arg18[%c0_94, %c0_95] : memref<16x32xf32, #tpu.memory_space<vmem>>, vector<16x32xf32>
      tpu.vector_store %arg18[%c0_94, %c0_95], %178 {strides = array<i32>} : memref<16x32xf32, #tpu.memory_space<vmem>>, vector<16x32xf32>,
      %c0_96 = arith.constant 0 : index
      %c0_97 = arith.constant 0 : index
      %180 = vector.load %arg6[%c0_96, %c0_97] : memref<32x32xf32, #tpu.memory_space<vmem>>, vector<32x32xf32>
      %cst_98 = arith.constant dense<0.000000e+00> : vector<16x32xf32>
      %181 = tpu.matmul %176, %180, %cst_98 {dimension_numbers = #tpu.dot_dimension_numbers<[1], [0], [0], [1], [0, 0, 1, 1], [], []>} : vector<16x32xf32>, vector<32x32xf32>, vector<16x32xf32> -> vector<16x32xf32>
      %c0_99 = arith.constant 0 : index
      %c0_100 = arith.constant 0 : index
      %182 = vector.load %arg19[%c0_99, %c0_100] : memref<16x32xf32, #tpu.memory_space<vmem>>, vector<16x32xf32>
      tpu.vector_store %arg19[%c0_99, %c0_100], %181 {strides = array<i32>} : memref<16x32xf32, #tpu.memory_space<vmem>>, vector<16x32xf32>,
    } else {
    }
    %c8_i32 = arith.constant 8 : i32
    %3 = arith.muli %arg1, %c8_i32 : i32
    %4 = tpu.assume_multiple %3, 8 : i32
    %c0 = arith.constant 0 : index
    %5 = arith.index_cast %4 : i32 to index
    %c0_1 = arith.constant 0 : index
    %6 = vector.load %arg2[%c0, %5, %c0_1] : memref<1x16x32xf32, #tpu.memory_space<vmem>>, vector<1x8x32xf32>
    %7 = vector.shape_cast %6 : vector<1x8x32xf32> to vector<8x32xf32>
    %c0_2 = arith.constant 0 : index
    %c0_3 = arith.constant 0 : index
    %8 = vector.load %arg4[%c0_2, %c0_3] : memref<32x32xf32, #tpu.memory_space<vmem>>, vector<32x32xf32>
    %cst = arith.constant dense<0.000000e+00> : vector<8x32xf32>
    %9 = tpu.matmul %7, %8, %cst {dimension_numbers = #tpu.dot_dimension_numbers<[1], [0], [0], [1], [0, 0, 1, 1], [], []>} : vector<8x32xf32>, vector<32x32xf32>, vector<8x32xf32> -> vector<8x32xf32>
    %cst_4 = arith.constant 0.353553385 : f32
    %10 = vector.broadcast %cst_4 : f32 to vector<8x32xf32>
    %11 = arith.mulf %9, %10 : vector<8x32xf32>
    %c0_5 = arith.constant 0 : index
    %c0_6 = arith.constant 0 : index
    %c0_7 = arith.constant 0 : index
    %12 = vector.load %arg3[%c0_5, %c0_6, %c0_7] : memref<1x1x16xi32, #tpu.memory_space<vmem>>, vector<1x1x16xi32>
    %13 = vector.shape_cast %12 : vector<1x1x16xi32> to vector<1x16xi32>
    %c0_i32_8 = arith.constant 0 : i32
    %14 = vector.broadcast %c0_i32_8 : i32 to vector<1x16xi32>
    %15 = arith.cmpi eq, %13, %14 : vector<1x16xi32>
    %cst_9 = arith.constant -1.000000e+09 : f32
    %cst_10 = arith.constant 0.000000e+00 : f32
    %16 = vector.broadcast %cst_9 : f32 to vector<1x16xf32>
    %17 = vector.broadcast %cst_10 : f32 to vector<1x16xf32>
    %18 = arith.select %15, %16, %17 : vector<1x16xi1>, vector<1x16xf32>
    %19 = vector.extract_strided_slice %11 {offsets = [0, 0], sizes = [8, 8], strides = [1, 1]} : vector<8x32xf32> to vector<8x8xf32>
    %c0_11 = arith.constant 0 : index
    %c0_12 = arith.constant 0 : index
    %20 = vector.load %arg18[%c0_11, %c0_12] : memref<16x32xf32, #tpu.memory_space<vmem>>, vector<16x8xf32>
    %c0_13 = arith.constant 0 : index
    %c0_14 = arith.constant 0 : index
    %21 = vector.load %arg19[%c0_13, %c0_14] : memref<16x32xf32, #tpu.memory_space<vmem>>, vector<16x8xf32>
    %cst_15 = arith.constant dense<0.000000e+00> : vector<8x16xf32>
    %22 = tpu.matmul %19, %20, %cst_15 {dimension_numbers = #tpu.dot_dimension_numbers<[1], [1], [0], [0], [0, 0, 1, 0], [], []>} : vector<8x8xf32>, vector<16x8xf32>, vector<8x16xf32> -> vector<8x16xf32>
    %23 = vector.broadcast %18 : vector<1x16xf32> to vector<8x16xf32>
    %24 = arith.addf %22, %23 : vector<8x16xf32>
    %cst_16 = arith.constant dense<0xFF800000> : vector<8xf32>
    %25 = vector.multi_reduction <maximumf>, %24, %cst_16 [1] : vector<8x16xf32> to vector<8xf32>
    %26 = vector.shape_cast %25 : vector<8xf32> to vector<8x1xf32>
    %27 = vector.broadcast %26 : vector<8x1xf32> to vector<8x16xf32>
    %28 = arith.subf %24, %27 : vector<8x16xf32>
    %29 = math.exp %28 : vector<8x16xf32>
    %cst_17 = arith.constant dense<0.000000e+00> : vector<8xf32>
    %30 = vector.multi_reduction <add>, %29, %cst_17 [1] : vector<8x16xf32> to vector<8xf32>
    %31 = vector.shape_cast %30 : vector<8xf32> to vector<8x1xf32>
    %32 = vector.broadcast %31 : vector<8x1xf32> to vector<8x16xf32>
    %33 = arith.divf %29, %32 : vector<8x16xf32>
    %c0_18 = arith.constant 0 : index
    %c0_19 = arith.constant 0 : index
    %c0_20 = arith.constant 0 : index
    %c0_21 = arith.constant 0 : index
    %34 = vector.load %arg17[%c0_18, %c0_19, %c0_20, %c0_21] : memref<1x4x8x16xf32, #tpu.memory_space<vmem>>, vector<1x1x8x16xf32>
    %35 = vector.shape_cast %34 : vector<1x1x8x16xf32> to vector<8x16xf32>
    %36 = vector.shape_cast %33 : vector<8x16xf32> to vector<1x1x8x16xf32>
    tpu.vector_store %arg17[%c0_18, %c0_19, %c0_20, %c0_21], %36 {strides = array<i32>} : memref<1x4x8x16xf32, #tpu.memory_space<vmem>>, vector<1x1x8x16xf32>,
    %cst_22 = arith.constant dense<0.000000e+00> : vector<8x8xf32>
    %37 = tpu.matmul %33, %21, %cst_22 {dimension_numbers = #tpu.dot_dimension_numbers<[1], [0], [0], [1], [0, 0, 1, 1], [], []>} : vector<8x16xf32>, vector<16x8xf32>, vector<8x8xf32> -> vector<8x8xf32>
    %38 = vector.extract_strided_slice %11 {offsets = [0, 8], sizes = [8, 8], strides = [1, 1]} : vector<8x32xf32> to vector<8x8xf32>
    %c0_23 = arith.constant 0 : index
    %c8 = arith.constant 8 : index
    %39 = vector.load %arg18[%c0_23, %c8] : memref<16x32xf32, #tpu.memory_space<vmem>>, vector<16x8xf32>
    %c0_24 = arith.constant 0 : index
    %c8_25 = arith.constant 8 : index
    %40 = vector.load %arg19[%c0_24, %c8_25] : memref<16x32xf32, #tpu.memory_space<vmem>>, vector<16x8xf32>
    %cst_26 = arith.constant dense<0.000000e+00> : vector<8x16xf32>
    %41 = tpu.matmul %38, %39, %cst_26 {dimension_numbers = #tpu.dot_dimension_numbers<[1], [1], [0], [0], [0, 0, 1, 0], [], []>} : vector<8x8xf32>, vector<16x8xf32>, vector<8x16xf32> -> vector<8x16xf32>
    %42 = vector.broadcast %18 : vector<1x16xf32> to vector<8x16xf32>
    %43 = arith.addf %41, %42 : vector<8x16xf32>
    %cst_27 = arith.constant dense<0xFF800000> : vector<8xf32>
    %44 = vector.multi_reduction <maximumf>, %43, %cst_27 [1] : vector<8x16xf32> to vector<8xf32>
    %45 = vector.shape_cast %44 : vector<8xf32> to vector<8x1xf32>
    %46 = vector.broadcast %45 : vector<8x1xf32> to vector<8x16xf32>
    %47 = arith.subf %43, %46 : vector<8x16xf32>
    %48 = math.exp %47 : vector<8x16xf32>
    %cst_28 = arith.constant dense<0.000000e+00> : vector<8xf32>
    %49 = vector.multi_reduction <add>, %48, %cst_28 [1] : vector<8x16xf32> to vector<8xf32>
    %50 = vector.shape_cast %49 : vector<8xf32> to vector<8x1xf32>
    %51 = vector.broadcast %50 : vector<8x1xf32> to vector<8x16xf32>
    %52 = arith.divf %48, %51 : vector<8x16xf32>
    %c0_29 = arith.constant 0 : index
    %c1 = arith.constant 1 : index
    %c0_30 = arith.constant 0 : index
    %c0_31 = arith.constant 0 : index
    %53 = vector.load %arg17[%c0_29, %c1, %c0_30, %c0_31] : memref<1x4x8x16xf32, #tpu.memory_space<vmem>>, vector<1x1x8x16xf32>
    %54 = vector.shape_cast %53 : vector<1x1x8x16xf32> to vector<8x16xf32>
    %55 = vector.shape_cast %52 : vector<8x16xf32> to vector<1x1x8x16xf32>
    tpu.vector_store %arg17[%c0_29, %c1, %c0_30, %c0_31], %55 {strides = array<i32>} : memref<1x4x8x16xf32, #tpu.memory_space<vmem>>, vector<1x1x8x16xf32>,
    %cst_32 = arith.constant dense<0.000000e+00> : vector<8x8xf32>
    %56 = tpu.matmul %52, %40, %cst_32 {dimension_numbers = #tpu.dot_dimension_numbers<[1], [0], [0], [1], [0, 0, 1, 1], [], []>} : vector<8x16xf32>, vector<16x8xf32>, vector<8x8xf32> -> vector<8x8xf32>
    %57 = vector.extract_strided_slice %11 {offsets = [0, 16], sizes = [8, 8], strides = [1, 1]} : vector<8x32xf32> to vector<8x8xf32>
    %c0_33 = arith.constant 0 : index
    %c16 = arith.constant 16 : index
    %58 = vector.load %arg18[%c0_33, %c16] : memref<16x32xf32, #tpu.memory_space<vmem>>, vector<16x8xf32>
    %c0_34 = arith.constant 0 : index
    %c16_35 = arith.constant 16 : index
    %59 = vector.load %arg19[%c0_34, %c16_35] : memref<16x32xf32, #tpu.memory_space<vmem>>, vector<16x8xf32>
    %cst_36 = arith.constant dense<0.000000e+00> : vector<8x16xf32>
    %60 = tpu.matmul %57, %58, %cst_36 {dimension_numbers = #tpu.dot_dimension_numbers<[1], [1], [0], [0], [0, 0, 1, 0], [], []>} : vector<8x8xf32>, vector<16x8xf32>, vector<8x16xf32> -> vector<8x16xf32>
    %61 = vector.broadcast %18 : vector<1x16xf32> to vector<8x16xf32>
    %62 = arith.addf %60, %61 : vector<8x16xf32>
    %cst_37 = arith.constant dense<0xFF800000> : vector<8xf32>
    %63 = vector.multi_reduction <maximumf>, %62, %cst_37 [1] : vector<8x16xf32> to vector<8xf32>
    %64 = vector.shape_cast %63 : vector<8xf32> to vector<8x1xf32>
    %65 = vector.broadcast %64 : vector<8x1xf32> to vector<8x16xf32>
    %66 = arith.subf %62, %65 : vector<8x16xf32>
    %67 = math.exp %66 : vector<8x16xf32>
    %cst_38 = arith.constant dense<0.000000e+00> : vector<8xf32>
    %68 = vector.multi_reduction <add>, %67, %cst_38 [1] : vector<8x16xf32> to vector<8xf32>
    %69 = vector.shape_cast %68 : vector<8xf32> to vector<8x1xf32>
    %70 = vector.broadcast %69 : vector<8x1xf32> to vector<8x16xf32>
    %71 = arith.divf %67, %70 : vector<8x16xf32>
    %c0_39 = arith.constant 0 : index
    %c2 = arith.constant 2 : index
    %c0_40 = arith.constant 0 : index
    %c0_41 = arith.constant 0 : index
    %72 = vector.load %arg17[%c0_39, %c2, %c0_40, %c0_41] : memref<1x4x8x16xf32, #tpu.memory_space<vmem>>, vector<1x1x8x16xf32>
    %73 = vector.shape_cast %72 : vector<1x1x8x16xf32> to vector<8x16xf32>
    %74 = vector.shape_cast %71 : vector<8x16xf32> to vector<1x1x8x16xf32>
    tpu.vector_store %arg17[%c0_39, %c2, %c0_40, %c0_41], %74 {strides = array<i32>} : memref<1x4x8x16xf32, #tpu.memory_space<vmem>>, vector<1x1x8x16xf32>,
    %cst_42 = arith.constant dense<0.000000e+00> : vector<8x8xf32>
    %75 = tpu.matmul %71, %59, %cst_42 {dimension_numbers = #tpu.dot_dimension_numbers<[1], [0], [0], [1], [0, 0, 1, 1], [], []>} : vector<8x16xf32>, vector<16x8xf32>, vector<8x8xf32> -> vector<8x8xf32>
    %76 = vector.extract_strided_slice %11 {offsets = [0, 24], sizes = [8, 8], strides = [1, 1]} : vector<8x32xf32> to vector<8x8xf32>
    %c0_43 = arith.constant 0 : index
    %c24 = arith.constant 24 : index
    %77 = vector.load %arg18[%c0_43, %c24] : memref<16x32xf32, #tpu.memory_space<vmem>>, vector<16x8xf32>
    %c0_44 = arith.constant 0 : index
    %c24_45 = arith.constant 24 : index
    %78 = vector.load %arg19[%c0_44, %c24_45] : memref<16x32xf32, #tpu.memory_space<vmem>>, vector<16x8xf32>
    %cst_46 = arith.constant dense<0.000000e+00> : vector<8x16xf32>
    %79 = tpu.matmul %76, %77, %cst_46 {dimension_numbers = #tpu.dot_dimension_numbers<[1], [1], [0], [0], [0, 0, 1, 0], [], []>} : vector<8x8xf32>, vector<16x8xf32>, vector<8x16xf32> -> vector<8x16xf32>
    %80 = vector.broadcast %18 : vector<1x16xf32> to vector<8x16xf32>
    %81 = arith.addf %79, %80 : vector<8x16xf32>
    %cst_47 = arith.constant dense<0xFF800000> : vector<8xf32>
    %82 = vector.multi_reduction <maximumf>, %81, %cst_47 [1] : vector<8x16xf32> to vector<8xf32>
    %83 = vector.shape_cast %82 : vector<8xf32> to vector<8x1xf32>
    %84 = vector.broadcast %83 : vector<8x1xf32> to vector<8x16xf32>
    %85 = arith.subf %81, %84 : vector<8x16xf32>
    %86 = math.exp %85 : vector<8x16xf32>
    %cst_48 = arith.constant dense<0.000000e+00> : vector<8xf32>
    %87 = vector.multi_reduction <add>, %86, %cst_48 [1] : vector<8x16xf32> to vector<8xf32>
    %88 = vector.shape_cast %87 : vector<8xf32> to vector<8x1xf32>
    %89 = vector.broadcast %88 : vector<8x1xf32> to vector<8x16xf32>
    %90 = arith.divf %86, %89 : vector<8x16xf32>
    %c0_49 = arith.constant 0 : index
    %c3 = arith.constant 3 : index
    %c0_50 = arith.constant 0 : index
    %c0_51 = arith.constant 0 : index
    %91 = vector.load %arg17[%c0_49, %c3, %c0_50, %c0_51] : memref<1x4x8x16xf32, #tpu.memory_space<vmem>>, vector<1x1x8x16xf32>
    %92 = vector.shape_cast %91 : vector<1x1x8x16xf32> to vector<8x16xf32>
    %93 = vector.shape_cast %90 : vector<8x16xf32> to vector<1x1x8x16xf32>
    tpu.vector_store %arg17[%c0_49, %c3, %c0_50, %c0_51], %93 {strides = array<i32>} : memref<1x4x8x16xf32, #tpu.memory_space<vmem>>, vector<1x1x8x16xf32>,
    %cst_52 = arith.constant dense<0.000000e+00> : vector<8x8xf32>
    %94 = tpu.matmul %90, %78, %cst_52 {dimension_numbers = #tpu.dot_dimension_numbers<[1], [0], [0], [1], [0, 0, 1, 1], [], []>} : vector<8x16xf32>, vector<16x8xf32>, vector<8x8xf32> -> vector<8x8xf32>
    %95 = tpu.concatenate %37, %56, %75, %94 in 1 : vector<8x8xf32>, vector<8x8xf32>, vector<8x8xf32>, vector<8x8xf32> -> vector<8x32xf32>
    %c0_53 = arith.constant 0 : index
    %c0_54 = arith.constant 0 : index
    %96 = vector.load %arg7[%c0_53, %c0_54] : memref<32x32xf32, #tpu.memory_space<vmem>>, vector<32x32xf32>
    %cst_55 = arith.constant dense<0.000000e+00> : vector<8x32xf32>
    %97 = tpu.matmul %95, %96, %cst_55 {dimension_numbers = #tpu.dot_dimension_numbers<[1], [0], [0], [1], [0, 0, 1, 1], [], []>} : vector<8x32xf32>, vector<32x32xf32>, vector<8x32xf32> -> vector<8x32xf32>
    %98 = arith.addf %97, %7 : vector<8x32xf32>
    %c0_56 = arith.constant 0 : index
    %c0_57 = arith.constant 0 : index
    %99 = vector.load %arg8[%c0_56, %c0_57] : memref<1x32xf32, #tpu.memory_space<vmem>>, vector<1x32xf32>
    %100 = vector.shape_cast %99 : vector<1x32xf32> to vector<32xf32>
    %c0_58 = arith.constant 0 : index
    %c0_59 = arith.constant 0 : index
    %101 = vector.load %arg9[%c0_58, %c0_59] : memref<1x32xf32, #tpu.memory_space<vmem>>, vector<1x32xf32>
    %102 = vector.shape_cast %101 : vector<1x32xf32> to vector<32xf32>
    %cst_60 = arith.constant dense<0.000000e+00> : vector<8xf32>
    %103 = vector.multi_reduction <add>, %98, %cst_60 [1] : vector<8x32xf32> to vector<8xf32>
    %104 = vector.shape_cast %103 : vector<8xf32> to vector<8x1xf32>
    %cst_61 = arith.constant 3.200000e+01 : f32
    %105 = vector.broadcast %cst_61 : f32 to vector<8x1xf32>
    %106 = arith.divf %104, %105 : vector<8x1xf32>
    %107 = vector.broadcast %106 : vector<8x1xf32> to vector<8x32xf32>
    %108 = arith.subf %98, %107 : vector<8x32xf32>
    %109 = arith.mulf %108, %108 : vector<8x32xf32>
    %cst_62 = arith.constant dense<0.000000e+00> : vector<8xf32>
    %110 = vector.multi_reduction <add>, %109, %cst_62 [1] : vector<8x32xf32> to vector<8xf32>
    %111 = vector.shape_cast %110 : vector<8xf32> to vector<8x1xf32>
    %cst_63 = arith.constant 3.200000e+01 : f32
    %112 = vector.broadcast %cst_63 : f32 to vector<8x1xf32>
    %113 = arith.divf %111, %112 : vector<8x1xf32>
    %114 = vector.broadcast %106 : vector<8x1xf32> to vector<8x32xf32>
    %115 = arith.subf %98, %114 : vector<8x32xf32>
    %cst_64 = arith.constant 9.99999997E-7 : f32
    %116 = vector.broadcast %cst_64 : f32 to vector<8x1xf32>
    %117 = arith.addf %113, %116 : vector<8x1xf32>
    %118 = math.rsqrt %117 : vector<8x1xf32>
    %119 = vector.broadcast %118 : vector<8x1xf32> to vector<8x32xf32>
    %120 = arith.mulf %115, %119 : vector<8x32xf32>
    %121 = vector.shape_cast %100 : vector<32xf32> to vector<1x32xf32>
    %122 = vector.broadcast %121 : vector<1x32xf32> to vector<8x32xf32>
    %123 = arith.mulf %120, %122 : vector<8x32xf32>
    %124 = vector.shape_cast %102 : vector<32xf32> to vector<1x32xf32>
    %125 = vector.broadcast %124 : vector<1x32xf32> to vector<8x32xf32>
    %126 = arith.addf %123, %125 : vector<8x32xf32>
    %c0_65 = arith.constant 0 : index
    %c0_66 = arith.constant 0 : index
    %127 = vector.load %arg10[%c0_65, %c0_66] : memref<32x64xf32, #tpu.memory_space<vmem>>, vector<32x64xf32>
    %cst_67 = arith.constant dense<0.000000e+00> : vector<8x64xf32>
    %128 = tpu.matmul %126, %127, %cst_67 {dimension_numbers = #tpu.dot_dimension_numbers<[1], [0], [0], [1], [0, 0, 1, 1], [], []>} : vector<8x32xf32>, vector<32x64xf32>, vector<8x64xf32> -> vector<8x64xf32>
    %c0_68 = arith.constant 0 : index
    %c0_69 = arith.constant 0 : index
    %129 = vector.load %arg11[%c0_68, %c0_69] : memref<1x64xf32, #tpu.memory_space<vmem>>, vector<1x64xf32>
    %130 = vector.shape_cast %129 : vector<1x64xf32> to vector<64xf32>
    %131 = vector.shape_cast %130 : vector<64xf32> to vector<1x64xf32>
    %132 = vector.broadcast %131 : vector<1x64xf32> to vector<8x64xf32>
    %133 = arith.addf %128, %132 : vector<8x64xf32>
    %cst_70 = arith.constant 0.000000e+00 : f32
    %134 = vector.broadcast %cst_70 : f32 to vector<8x64xf32>
    %135 = arith.maximumf %133, %134 : vector<8x64xf32>
    %c0_71 = arith.constant 0 : index
    %c0_72 = arith.constant 0 : index
    %136 = vector.load %arg12[%c0_71, %c0_72] : memref<64x32xf32, #tpu.memory_space<vmem>>, vector<64x32xf32>
    %cst_73 = arith.constant dense<0.000000e+00> : vector<8x32xf32>
    %137 = tpu.matmul %135, %136, %cst_73 {dimension_numbers = #tpu.dot_dimension_numbers<[1], [0], [0], [1], [0, 0, 1, 1], [], []>} : vector<8x64xf32>, vector<64x32xf32>, vector<8x32xf32> -> vector<8x32xf32>
    %c0_74 = arith.constant 0 : index
    %c0_75 = arith.constant 0 : index
    %138 = vector.load %arg13[%c0_74, %c0_75] : memref<1x32xf32, #tpu.memory_space<vmem>>, vector<1x32xf32>
    %139 = vector.shape_cast %138 : vector<1x32xf32> to vector<32xf32>
    %140 = vector.shape_cast %139 : vector<32xf32> to vector<1x32xf32>
    %141 = vector.broadcast %140 : vector<1x32xf32> to vector<8x32xf32>
    %142 = arith.addf %137, %141 : vector<8x32xf32>
    %143 = arith.addf %142, %126 : vector<8x32xf32>
    %c0_76 = arith.constant 0 : index
    %c0_77 = arith.constant 0 : index
    %144 = vector.load %arg14[%c0_76, %c0_77] : memref<1x32xf32, #tpu.memory_space<vmem>>, vector<1x32xf32>
    %145 = vector.shape_cast %144 : vector<1x32xf32> to vector<32xf32>
    %c0_78 = arith.constant 0 : index
    %c0_79 = arith.constant 0 : index
    %146 = vector.load %arg15[%c0_78, %c0_79] : memref<1x32xf32, #tpu.memory_space<vmem>>, vector<1x32xf32>
    %147 = vector.shape_cast %146 : vector<1x32xf32> to vector<32xf32>
    %cst_80 = arith.constant dense<0.000000e+00> : vector<8xf32>
    %148 = vector.multi_reduction <add>, %143, %cst_80 [1] : vector<8x32xf32> to vector<8xf32>
    %149 = vector.shape_cast %148 : vector<8xf32> to vector<8x1xf32>
    %cst_81 = arith.constant 3.200000e+01 : f32
    %150 = vector.broadcast %cst_81 : f32 to vector<8x1xf32>
    %151 = arith.divf %149, %150 : vector<8x1xf32>
    %152 = vector.broadcast %151 : vector<8x1xf32> to vector<8x32xf32>
    %153 = arith.subf %143, %152 : vector<8x32xf32>
    %154 = arith.mulf %153, %153 : vector<8x32xf32>
    %cst_82 = arith.constant dense<0.000000e+00> : vector<8xf32>
    %155 = vector.multi_reduction <add>, %154, %cst_82 [1] : vector<8x32xf32> to vector<8xf32>
    %156 = vector.shape_cast %155 : vector<8xf32> to vector<8x1xf32>
    %cst_83 = arith.constant 3.200000e+01 : f32
    %157 = vector.broadcast %cst_83 : f32 to vector<8x1xf32>
    %158 = arith.divf %156, %157 : vector<8x1xf32>
    %159 = vector.broadcast %151 : vector<8x1xf32> to vector<8x32xf32>
    %160 = arith.subf %143, %159 : vector<8x32xf32>
    %cst_84 = arith.constant 9.99999997E-7 : f32
    %161 = vector.broadcast %cst_84 : f32 to vector<8x1xf32>
    %162 = arith.addf %158, %161 : vector<8x1xf32>
    %163 = math.rsqrt %162 : vector<8x1xf32>
    %164 = vector.broadcast %163 : vector<8x1xf32> to vector<8x32xf32>
    %165 = arith.mulf %160, %164 : vector<8x32xf32>
    %166 = vector.shape_cast %145 : vector<32xf32> to vector<1x32xf32>
    %167 = vector.broadcast %166 : vector<1x32xf32> to vector<8x32xf32>
    %168 = arith.mulf %165, %167 : vector<8x32xf32>
    %169 = vector.shape_cast %147 : vector<32xf32> to vector<1x32xf32>
    %170 = vector.broadcast %169 : vector<1x32xf32> to vector<8x32xf32>
    %171 = arith.addf %168, %170 : vector<8x32xf32>
    %c0_85 = arith.constant 0 : index
    %c0_86 = arith.constant 0 : index
    %c0_87 = arith.constant 0 : index
    %172 = vector.load %arg16[%c0_85, %c0_86, %c0_87] : memref<1x8x32xf32, #tpu.memory_space<vmem>>, vector<1x8x32xf32>
    %173 = vector.shape_cast %172 : vector<1x8x32xf32> to vector<8x32xf32>
    %174 = vector.shape_cast %171 : vector<8x32xf32> to vector<1x8x32xf32>
    tpu.vector_store %arg16[%c0_85, %c0_86, %c0_87], %174 {strides = array<i32>} : memref<1x8x32xf32, #tpu.memory_space<vmem>>, vector<1x8x32xf32>,
    return
  }
  func.func @transform_0(%arg0: i32, %arg1: i32) -> (i32, i32, i32) {
    %c0_i32 = arith.constant 0 : i32
    %c0_i32_0 = arith.constant 0 : i32
    %c0_i32_1 = arith.constant 0 : i32
    return %arg0, %c0_i32, %c0_i32_0 : i32, i32, i32
  }
  func.func @transform_1(%arg0: i32, %arg1: i32) -> (i32, i32, i32) {
    %c0_i32 = arith.constant 0 : i32
    %c0_i32_0 = arith.constant 0 : i32
    %c0_i32_1 = arith.constant 0 : i32
    return %arg0, %c0_i32, %c0_i32_0 : i32, i32, i32
  }
  func.func @transform_2(%arg0: i32, %arg1: i32) -> (i32, i32) {
    %c0_i32 = arith.constant 0 : i32
    %c0_i32_0 = arith.constant 0 : i32
    %c0_i32_1 = arith.constant 0 : i32
    return %c0_i32, %c0_i32_0 : i32, i32
  }
  func.func @transform_3(%arg0: i32, %arg1: i32) -> (i32, i32) {
    %c0_i32 = arith.constant 0 : i32
    %c0_i32_0 = arith.constant 0 : i32
    %c0_i32_1 = arith.constant 0 : i32
    return %c0_i32, %c0_i32_0 : i32, i32
  }
  func.func @transform_4(%arg0: i32, %arg1: i32) -> (i32, i32) {
    %c0_i32 = arith.constant 0 : i32
    %c0_i32_0 = arith.constant 0 : i32
    %c0_i32_1 = arith.constant 0 : i32
    return %c0_i32, %c0_i32_0 : i32, i32
  }
  func.func @transform_5(%arg0: i32, %arg1: i32) -> (i32, i32) {
    %c0_i32 = arith.constant 0 : i32
    %c0_i32_0 = arith.constant 0 : i32
    %c0_i32_1 = arith.constant 0 : i32
    return %c0_i32, %c0_i32_0 : i32, i32
  }
  func.func @transform_6(%arg0: i32, %arg1: i32) -> (i32, i32) {
    %c0_i32 = arith.constant 0 : i32
    %c0_i32_0 = arith.constant 0 : i32
    %c0_i32_1 = arith.constant 0 : i32
    return %c0_i32, %c0_i32_0 : i32, i32
  }
  func.func @transform_7(%arg0: i32, %arg1: i32) -> (i32, i32) {
    %c0_i32 = arith.constant 0 : i32
    %c0_i32_0 = arith.constant 0 : i32
    %c0_i32_1 = arith.constant 0 : i32
    return %c0_i32, %c0_i32_0 : i32, i32
  }
  func.func @transform_8(%arg0: i32, %arg1: i32) -> (i32, i32) {
    %c0_i32 = arith.constant 0 : i32
    %c0_i32_0 = arith.constant 0 : i32
    %c0_i32_1 = arith.constant 0 : i32
    return %c0_i32, %c0_i32_0 : i32, i32
  }
  func.func @transform_9(%arg0: i32, %arg1: i32) -> (i32, i32) {
    %c0_i32 = arith.constant 0 : i32
    %c0_i32_0 = arith.constant 0 : i32
    %c0_i32_1 = arith.constant 0 : i32
    return %c0_i32, %c0_i32_0 : i32, i32
  }
  func.func @transform_10(%arg0: i32, %arg1: i32) -> (i32, i32) {
    %c0_i32 = arith.constant 0 : i32
    %c0_i32_0 = arith.constant 0 : i32
    %c0_i32_1 = arith.constant 0 : i32
    return %c0_i32, %c0_i32_0 : i32, i32
  }
  func.func @transform_11(%arg0: i32, %arg1: i32) -> (i32, i32) {
    %c0_i32 = arith.constant 0 : i32
    %c0_i32_0 = arith.constant 0 : i32
    %c0_i32_1 = arith.constant 0 : i32
    return %c0_i32, %c0_i32_0 : i32, i32
  }
  func.func @transform_12(%arg0: i32, %arg1: i32) -> (i32, i32) {
    %c0_i32 = arith.constant 0 : i32
    %c0_i32_0 = arith.constant 0 : i32
    %c0_i32_1 = arith.constant 0 : i32
    return %c0_i32, %c0_i32_0 : i32, i32
  }
  func.func @transform_13(%arg0: i32, %arg1: i32) -> (i32, i32) {
    %c0_i32 = arith.constant 0 : i32
    %c0_i32_0 = arith.constant 0 : i32
    %c0_i32_1 = arith.constant 0 : i32
    return %c0_i32, %c0_i32_0 : i32, i32
  }
  func.func @transform_14(%arg0: i32, %arg1: i32) -> (i32, i32, i32) {
    %c0_i32 = arith.constant 0 : i32
    %c0_i32_0 = arith.constant 0 : i32
    return %arg0, %arg1, %c0_i32 : i32, i32, i32
  }
  func.func @transform_15(%arg0: i32, %arg1: i32) -> (i32, i32, i32, i32) {
    %c0_i32 = arith.constant 0 : i32
    %c0_i32_0 = arith.constant 0 : i32
    %c0_i32_1 = arith.constant 0 : i32
    return %arg0, %c0_i32, %arg1, %c0_i32_0 : i32, i32, i32, i32
  }
}

module attributes {stable_mosaic.version = 11 : i64} {
  func.func @encoder_layer_kernel(%arg0: i32, %arg1: i32, %arg2: memref<1x16x32xf32, #tpu.memory_space<vmem>>, %arg3: memref<1x1x16xi32, #tpu.memory_space<vmem>>, %arg4: memref<32x32xf32, #tpu.memory_space<vmem>>, %arg5: memref<32x32xf32, #tpu.memory_space<vmem>>, %arg6: memref<32x32xf32, #tpu.memory_space<vmem>>, %arg7: memref<32x32xf32, #tpu.memory_space<vmem>>, %arg8: memref<1x32xf32, #tpu.memory_space<vmem>>, %arg9: memref<1x32xf32, #tpu.memory_space<vmem>>, %arg10: memref<32x64xf32, #tpu.memory_space<vmem>>, %arg11: memref<1x64xf32, #tpu.memory_space<vmem>>, %arg12: memref<64x32xf32, #tpu.memory_space<vmem>>, %arg13: memref<1x32xf32, #tpu.memory_space<vmem>>, %arg14: memref<1x32xf32, #tpu.memory_space<vmem>>, %arg15: memref<1x32xf32, #tpu.memory_space<vmem>>, %arg16: memref<1x8x32xf32, #tpu.memory_space<vmem>>, %arg17: memref<1x4x8x16xf32, #tpu.memory_space<vmem>>, %arg18: memref<16x32xf32, #tpu.memory_space<vmem>>, %arg19: memref<16x32xf32, #tpu.memory_space<vmem>>) attributes {dimension_semantics = [#tpu.dimension_semantics<parallel>, #tpu.dimension_semantics<arbitrary>], iteration_bounds = array<i64: 2, 2>, scalar_prefetch = 0 : i64, scratch_operands = 2 : i64, tpu.core_type = #tpu.core_type<tc>, window_params = [{transform_indices = @transform_0, window_bounds = array<i64: 1, 16, 32>}, {transform_indices = @transform_1, window_bounds = array<i64: 1, 1, 16>}, {pipeline_mode = #tpu.pipeline_mode<synchronous>, transform_indices = @transform_2, window_bounds = array<i64: 32, 32>}, {pipeline_mode = #tpu.pipeline_mode<synchronous>, transform_indices = @transform_3, window_bounds = array<i64: 32, 32>}, {pipeline_mode = #tpu.pipeline_mode<synchronous>, transform_indices = @transform_4, window_bounds = array<i64: 32, 32>}, {pipeline_mode = #tpu.pipeline_mode<synchronous>, transform_indices = @transform_5, window_bounds = array<i64: 32, 32>}, {pipeline_mode = #tpu.pipeline_mode<synchronous>, transform_indices = @transform_6, window_bounds = array<i64: 1, 32>}, {pipeline_mode = #tpu.pipeline_mode<synchronous>, transform_indices = @transform_7, window_bounds = array<i64: 1, 32>}, {pipeline_mode = #tpu.pipeline_mode<synchronous>, transform_indices = @transform_8, window_bounds = array<i64: 32, 64>}, {pipeline_mode = #tpu.pipeline_mode<synchronous>, transform_indices = @transform_9, window_bounds = array<i64: 1, 64>}, {pipeline_mode = #tpu.pipeline_mode<synchronous>, transform_indices = @transform_10, window_bounds = array<i64: 64, 32>}, {pipeline_mode = #tpu.pipeline_mode<synchronous>, transform_indices = @transform_11, window_bounds = array<i64: 1, 32>}, {pipeline_mode = #tpu.pipeline_mode<synchronous>, transform_indices = @transform_12, window_bounds = array<i64: 1, 32>}, {pipeline_mode = #tpu.pipeline_mode<synchronous>, transform_indices = @transform_13, window_bounds = array<i64: 1, 32>}, {transform_indices = @transform_14, window_bounds = array<i64: 1, 8, 32>}, {transform_indices = @transform_15, window_bounds = array<i64: 1, 4, 8, 16>}]} {
    %c0_i32 = arith.constant 0 : i32
    %0 = arith.cmpi eq, %arg1, %c0_i32 : i32
    %1 = arith.extui %0 : i1 to i32
    %c0_i32_0 = arith.constant 0 : i32
    %2 = arith.cmpi ne, %1, %c0_i32_0 : i32
    scf.if %2 {
      %c0_88 = arith.constant 0 : index
      %c0_89 = arith.constant 0 : index
      %c0_90 = arith.constant 0 : index
      %175 = vector.load %arg2[%c0_88, %c0_89, %c0_90] : memref<1x16x32xf32, #tpu.memory_space<vmem>>, vector<1x16x32xf32>
      %176 = vector.shape_cast %175 : vector<1x16x32xf32> to vector<16x32xf32>
      %c0_91 = arith.constant 0 : index
      %c0_92 = arith.constant 0 : index
      %177 = vector.load %arg5[%c0_91, %c0_92] : memref<32x32xf32, #tpu.memory_space<vmem>>, vector<32x32xf32>
      %cst_93 = arith.constant dense<0.000000e+00> : vector<16x32xf32>
      %178 = tpu.matmul %176, %177, %cst_93 {dimension_numbers = #tpu.dot_dimension_numbers<[1], [0], [0], [1], [0, 0, 1, 1], [], []>} : vector<16x32xf32>, vector<32x32xf32>, vector<16x32xf32> -> vector<16x32xf32>
      %c0_94 = arith.constant 0 : index
      %c0_95 = arith.constant 0 : index
      %179 = vector.load %arg18[%c0_94, %c0_95] : memref<16x32xf32, #tpu.memory_space<vmem>>, vector<16x32xf32>
      tpu.vector_store %arg18[%c0_94, %c0_95], %178 {strides = array<i32>} : memref<16x32xf32, #tpu.memory_space<vmem>>, vector<16x32xf32>,
      %c0_96 = arith.constant 0 : index
      %c0_97 = arith.constant 0 : index
      %180 = vector.load %arg6[%c0_96, %c0_97] : memref<32x32xf32, #tpu.memory_space<vmem>>, vector<32x32xf32>
      %cst_98 = arith.constant dense<0.000000e+00> : vector<16x32xf32>
      %181 = tpu.matmul %176, %180, %cst_98 {dimension_numbers = #tpu.dot_dimension_numbers<[1], [0], [0], [1], [0, 0, 1, 1], [], []>} : vector<16x32xf32>, vector<32x32xf32>, vector<16x32xf32> -> vector<16x32xf32>
      %c0_99 = arith.constant 0 : index
      %c0_100 = arith.constant 0 : index
      %182 = vector.load %arg19[%c0_99, %c0_100] : memref<16x32xf32, #tpu.memory_space<vmem>>, vector<16x32xf32>
      tpu.vector_store %arg19[%c0_99, %c0_100], %181 {strides = array<i32>} : memref<16x32xf32, #tpu.memory_space<vmem>>, vector<16x32xf32>,
    } else {
    }
    %c8_i32 = arith.constant 8 : i32
    %3 = arith.muli %arg1, %c8_i32 : i32
    %4 = tpu.assume_multiple %3, 8 : i32
    %c0 = arith.constant 0 : index
    %5 = arith.index_cast %4 : i32 to index
    %c0_1 = arith.constant 0 : index
    %6 = vector.load %arg2[%c0, %5, %c0_1] : memref<1x16x32xf32, #tpu.memory_space<vmem>>, vector<1x8x32xf32>
    %7 = vector.shape_cast %6 : vector<1x8x32xf32> to vector<8x32xf32>
    %c0_2 = arith.constant 0 : index
    %c0_3 = arith.constant 0 : index
    %8 = vector.load %arg4[%c0_2, %c0_3] : memref<32x32xf32, #tpu.memory_space<vmem>>, vector<32x32xf32>
    %cst = arith.constant dense<0.000000e+00> : vector<8x32xf32>
    %9 = tpu.matmul %7, %8, %cst {dimension_numbers = #tpu.dot_dimension_numbers<[1], [0], [0], [1], [0, 0, 1, 1], [], []>} : vector<8x32xf32>, vector<32x32xf32>, vector<8x32xf32> -> vector<8x32xf32>
    %cst_4 = arith.constant 0.353553385 : f32
    %10 = vector.broadcast %cst_4 : f32 to vector<8x32xf32>
    %11 = arith.mulf %9, %10 : vector<8x32xf32>
    %c0_5 = arith.constant 0 : index
    %c0_6 = arith.constant 0 : index
    %c0_7 = arith.constant 0 : index
    %12 = vector.load %arg3[%c0_5, %c0_6, %c0_7] : memref<1x1x16xi32, #tpu.memory_space<vmem>>, vector<1x1x16xi32>
    %13 = vector.shape_cast %12 : vector<1x1x16xi32> to vector<1x16xi32>
    %c0_i32_8 = arith.constant 0 : i32
    %14 = vector.broadcast %c0_i32_8 : i32 to vector<1x16xi32>
    %15 = arith.cmpi eq, %13, %14 : vector<1x16xi32>
    %cst_9 = arith.constant -1.000000e+09 : f32
    %cst_10 = arith.constant 0.000000e+00 : f32
    %16 = vector.broadcast %cst_9 : f32 to vector<1x16xf32>
    %17 = vector.broadcast %cst_10 : f32 to vector<1x16xf32>
    %18 = arith.select %15, %16, %17 : vector<1x16xi1>, vector<1x16xf32>
    %19 = vector.extract_strided_slice %11 {offsets = [0, 0], sizes = [8, 8], strides = [1, 1]} : vector<8x32xf32> to vector<8x8xf32>
    %c0_11 = arith.constant 0 : index
    %c0_12 = arith.constant 0 : index
    %20 = vector.load %arg18[%c0_11, %c0_12] : memref<16x32xf32, #tpu.memory_space<vmem>>, vector<16x8xf32>
    %c0_13 = arith.constant 0 : index
    %c0_14 = arith.constant 0 : index
    %21 = vector.load %arg19[%c0_13, %c0_14] : memref<16x32xf32, #tpu.memory_space<vmem>>, vector<16x8xf32>
    %cst_15 = arith.constant dense<0.000000e+00> : vector<8x16xf32>
    %22 = tpu.matmul %19, %20, %cst_15 {dimension_numbers = #tpu.dot_dimension_numbers<[1], [1], [0], [0], [0, 0, 1, 0], [], []>} : vector<8x8xf32>, vector<16x8xf32>, vector<8x16xf32> -> vector<8x16xf32>
    %23 = vector.broadcast %18 : vector<1x16xf32> to vector<8x16xf32>
    %24 = arith.addf %22, %23 : vector<8x16xf32>
    %cst_16 = arith.constant dense<0xFF800000> : vector<8xf32>
    %25 = vector.multi_reduction <maximumf>, %24, %cst_16 [1] : vector<8x16xf32> to vector<8xf32>
    %26 = vector.shape_cast %25 : vector<8xf32> to vector<8x1xf32>
    %27 = vector.broadcast %26 : vector<8x1xf32> to vector<8x16xf32>
    %28 = arith.subf %24, %27 : vector<8x16xf32>
    %29 = math.exp %28 : vector<8x16xf32>
    %cst_17 = arith.constant dense<0.000000e+00> : vector<8xf32>
    %30 = vector.multi_reduction <add>, %29, %cst_17 [1] : vector<8x16xf32> to vector<8xf32>
    %31 = vector.shape_cast %30 : vector<8xf32> to vector<8x1xf32>
    %32 = vector.broadcast %31 : vector<8x1xf32> to vector<8x16xf32>
    %33 = arith.divf %29, %32 : vector<8x16xf32>
    %c0_18 = arith.constant 0 : index
    %c0_19 = arith.constant 0 : index
    %c0_20 = arith.constant 0 : index
    %c0_21 = arith.constant 0 : index
    %34 = vector.load %arg17[%c0_18, %c0_19, %c0_20, %c0_21] : memref<1x4x8x16xf32, #tpu.memory_space<vmem>>, vector<1x1x8x16xf32>
    %35 = vector.shape_cast %34 : vector<1x1x8x16xf32> to vector<8x16xf32>
    %36 = vector.shape_cast %33 : vector<8x16xf32> to vector<1x1x8x16xf32>
    tpu.vector_store %arg17[%c0_18, %c0_19, %c0_20, %c0_21], %36 {strides = array<i32>} : memref<1x4x8x16xf32, #tpu.memory_space<vmem>>, vector<1x1x8x16xf32>,
    %cst_22 = arith.constant dense<0.000000e+00> : vector<8x8xf32>
    %37 = tpu.matmul %33, %21, %cst_22 {dimension_numbers = #tpu.dot_dimension_numbers<[1], [0], [0], [1], [0, 0, 1, 1], [], []>} : vector<8x16xf32>, vector<16x8xf32>, vector<8x8xf32> -> vector<8x8xf32>
    %38 = vector.extract_strided_slice %11 {offsets = [0, 8], sizes = [8, 8], strides = [1, 1]} : vector<8x32xf32> to vector<8x8xf32>
    %c0_23 = arith.constant 0 : index
    %c8 = arith.constant 8 : index
    %39 = vector.load %arg18[%c0_23, %c8] : memref<16x32xf32, #tpu.memory_space<vmem>>, vector<16x8xf32>
    %c0_24 = arith.constant 0 : index
    %c8_25 = arith.constant 8 : index
    %40 = vector.load %arg19[%c0_24, %c8_25] : memref<16x32xf32, #tpu.memory_space<vmem>>, vector<16x8xf32>
    %cst_26 = arith.constant dense<0.000000e+00> : vector<8x16xf32>
    %41 = tpu.matmul %38, %39, %cst_26 {dimension_numbers = #tpu.dot_dimension_numbers<[1], [1], [0], [0], [0, 0, 1, 0], [], []>} : vector<8x8xf32>, vector<16x8xf32>, vector<8x16xf32> -> vector<8x16xf32>
    %42 = vector.broadcast %18 : vector<1x16xf32> to vector<8x16xf32>
    %43 = arith.addf %41, %42 : vector<8x16xf32>
    %cst_27 = arith.constant dense<0xFF800000> : vector<8xf32>
    %44 = vector.multi_reduction <maximumf>, %43, %cst_27 [1] : vector<8x16xf32> to vector<8xf32>
    %45 = vector.shape_cast %44 : vector<8xf32> to vector<8x1xf32>
    %46 = vector.broadcast %45 : vector<8x1xf32> to vector<8x16xf32>
    %47 = arith.subf %43, %46 : vector<8x16xf32>
    %48 = math.exp %47 : vector<8x16xf32>
    %cst_28 = arith.constant dense<0.000000e+00> : vector<8xf32>
    %49 = vector.multi_reduction <add>, %48, %cst_28 [1] : vector<8x16xf32> to vector<8xf32>
    %50 = vector.shape_cast %49 : vector<8xf32> to vector<8x1xf32>
    %51 = vector.broadcast %50 : vector<8x1xf32> to vector<8x16xf32>
    %52 = arith.divf %48, %51 : vector<8x16xf32>
    %c0_29 = arith.constant 0 : index
    %c1 = arith.constant 1 : index
    %c0_30 = arith.constant 0 : index
    %c0_31 = arith.constant 0 : index
    %53 = vector.load %arg17[%c0_29, %c1, %c0_30, %c0_31] : memref<1x4x8x16xf32, #tpu.memory_space<vmem>>, vector<1x1x8x16xf32>
    %54 = vector.shape_cast %53 : vector<1x1x8x16xf32> to vector<8x16xf32>
    %55 = vector.shape_cast %52 : vector<8x16xf32> to vector<1x1x8x16xf32>
    tpu.vector_store %arg17[%c0_29, %c1, %c0_30, %c0_31], %55 {strides = array<i32>} : memref<1x4x8x16xf32, #tpu.memory_space<vmem>>, vector<1x1x8x16xf32>,
    %cst_32 = arith.constant dense<0.000000e+00> : vector<8x8xf32>
    %56 = tpu.matmul %52, %40, %cst_32 {dimension_numbers = #tpu.dot_dimension_numbers<[1], [0], [0], [1], [0, 0, 1, 1], [], []>} : vector<8x16xf32>, vector<16x8xf32>, vector<8x8xf32> -> vector<8x8xf32>
    %57 = vector.extract_strided_slice %11 {offsets = [0, 16], sizes = [8, 8], strides = [1, 1]} : vector<8x32xf32> to vector<8x8xf32>
    %c0_33 = arith.constant 0 : index
    %c16 = arith.constant 16 : index
    %58 = vector.load %arg18[%c0_33, %c16] : memref<16x32xf32, #tpu.memory_space<vmem>>, vector<16x8xf32>
    %c0_34 = arith.constant 0 : index
    %c16_35 = arith.constant 16 : index
    %59 = vector.load %arg19[%c0_34, %c16_35] : memref<16x32xf32, #tpu.memory_space<vmem>>, vector<16x8xf32>
    %cst_36 = arith.constant dense<0.000000e+00> : vector<8x16xf32>
    %60 = tpu.matmul %57, %58, %cst_36 {dimension_numbers = #tpu.dot_dimension_numbers<[1], [1], [0], [0], [0, 0, 1, 0], [], []>} : vector<8x8xf32>, vector<16x8xf32>, vector<8x16xf32> -> vector<8x16xf32>
    %61 = vector.broadcast %18 : vector<1x16xf32> to vector<8x16xf32>
    %62 = arith.addf %60, %61 : vector<8x16xf32>
    %cst_37 = arith.constant dense<0xFF800000> : vector<8xf32>
    %63 = vector.multi_reduction <maximumf>, %62, %cst_37 [1] : vector<8x16xf32> to vector<8xf32>
    %64 = vector.shape_cast %63 : vector<8xf32> to vector<8x1xf32>
    %65 = vector.broadcast %64 : vector<8x1xf32> to vector<8x16xf32>
    %66 = arith.subf %62, %65 : vector<8x16xf32>
    %67 = math.exp %66 : vector<8x16xf32>
    %cst_38 = arith.constant dense<0.000000e+00> : vector<8xf32>
    %68 = vector.multi_reduction <add>, %67, %cst_38 [1] : vector<8x16xf32> to vector<8xf32>
    %69 = vector.shape_cast %68 : vector<8xf32> to vector<8x1xf32>
    %70 = vector.broadcast %69 : vector<8x1xf32> to vector<8x16xf32>
    %71 = arith.divf %67, %70 : vector<8x16xf32>
    %c0_39 = arith.constant 0 : index
    %c2 = arith.constant 2 : index
    %c0_40 = arith.constant 0 : index
    %c0_41 = arith.constant 0 : index
    %72 = vector.load %arg17[%c0_39, %c2, %c0_40, %c0_41] : memref<1x4x8x16xf32, #tpu.memory_space<vmem>>, vector<1x1x8x16xf32>
    %73 = vector.shape_cast %72 : vector<1x1x8x16xf32> to vector<8x16xf32>
    %74 = vector.shape_cast %71 : vector<8x16xf32> to vector<1x1x8x16xf32>
    tpu.vector_store %arg17[%c0_39, %c2, %c0_40, %c0_41], %74 {strides = array<i32>} : memref<1x4x8x16xf32, #tpu.memory_space<vmem>>, vector<1x1x8x16xf32>,
    %cst_42 = arith.constant dense<0.000000e+00> : vector<8x8xf32>
    %75 = tpu.matmul %71, %59, %cst_42 {dimension_numbers = #tpu.dot_dimension_numbers<[1], [0], [0], [1], [0, 0, 1, 1], [], []>} : vector<8x16xf32>, vector<16x8xf32>, vector<8x8xf32> -> vector<8x8xf32>
    %76 = vector.extract_strided_slice %11 {offsets = [0, 24], sizes = [8, 8], strides = [1, 1]} : vector<8x32xf32> to vector<8x8xf32>
    %c0_43 = arith.constant 0 : index
    %c24 = arith.constant 24 : index
    %77 = vector.load %arg18[%c0_43, %c24] : memref<16x32xf32, #tpu.memory_space<vmem>>, vector<16x8xf32>
    %c0_44 = arith.constant 0 : index
    %c24_45 = arith.constant 24 : index
    %78 = vector.load %arg19[%c0_44, %c24_45] : memref<16x32xf32, #tpu.memory_space<vmem>>, vector<16x8xf32>
    %cst_46 = arith.constant dense<0.000000e+00> : vector<8x16xf32>
    %79 = tpu.matmul %76, %77, %cst_46 {dimension_numbers = #tpu.dot_dimension_numbers<[1], [1], [0], [0], [0, 0, 1, 0], [], []>} : vector<8x8xf32>, vector<16x8xf32>, vector<8x16xf32> -> vector<8x16xf32>
    %80 = vector.broadcast %18 : vector<1x16xf32> to vector<8x16xf32>
    %81 = arith.addf %79, %80 : vector<8x16xf32>
    %cst_47 = arith.constant dense<0xFF800000> : vector<8xf32>
    %82 = vector.multi_reduction <maximumf>, %81, %cst_47 [1] : vector<8x16xf32> to vector<8xf32>
    %83 = vector.shape_cast %82 : vector<8xf32> to vector<8x1xf32>
    %84 = vector.broadcast %83 : vector<8x1xf32> to vector<8x16xf32>
    %85 = arith.subf %81, %84 : vector<8x16xf32>
    %86 = math.exp %85 : vector<8x16xf32>
    %cst_48 = arith.constant dense<0.000000e+00> : vector<8xf32>
    %87 = vector.multi_reduction <add>, %86, %cst_48 [1] : vector<8x16xf32> to vector<8xf32>
    %88 = vector.shape_cast %87 : vector<8xf32> to vector<8x1xf32>
    %89 = vector.broadcast %88 : vector<8x1xf32> to vector<8x16xf32>
    %90 = arith.divf %86, %89 : vector<8x16xf32>
    %c0_49 = arith.constant 0 : index
    %c3 = arith.constant 3 : index
    %c0_50 = arith.constant 0 : index
    %c0_51 = arith.constant 0 : index
    %91 = vector.load %arg17[%c0_49, %c3, %c0_50, %c0_51] : memref<1x4x8x16xf32, #tpu.memory_space<vmem>>, vector<1x1x8x16xf32>
    %92 = vector.shape_cast %91 : vector<1x1x8x16xf32> to vector<8x16xf32>
    %93 = vector.shape_cast %90 : vector<8x16xf32> to vector<1x1x8x16xf32>
    tpu.vector_store %arg17[%c0_49, %c3, %c0_50, %c0_51], %93 {strides = array<i32>} : memref<1x4x8x16xf32, #tpu.memory_space<vmem>>, vector<1x1x8x16xf32>,
    %cst_52 = arith.constant dense<0.000000e+00> : vector<8x8xf32>
    %94 = tpu.matmul %90, %78, %cst_52 {dimension_numbers = #tpu.dot_dimension_numbers<[1], [0], [0], [1], [0, 0, 1, 1], [], []>} : vector<8x16xf32>, vector<16x8xf32>, vector<8x8xf32> -> vector<8x8xf32>
    %95 = tpu.concatenate %37, %56, %75, %94 in 1 : vector<8x8xf32>, vector<8x8xf32>, vector<8x8xf32>, vector<8x8xf32> -> vector<8x32xf32>
    %c0_53 = arith.constant 0 : index
    %c0_54 = arith.constant 0 : index
    %96 = vector.load %arg7[%c0_53, %c0_54] : memref<32x32xf32, #tpu.memory_space<vmem>>, vector<32x32xf32>
    %cst_55 = arith.constant dense<0.000000e+00> : vector<8x32xf32>
    %97 = tpu.matmul %95, %96, %cst_55 {dimension_numbers = #tpu.dot_dimension_numbers<[1], [0], [0], [1], [0, 0, 1, 1], [], []>} : vector<8x32xf32>, vector<32x32xf32>, vector<8x32xf32> -> vector<8x32xf32>
    %98 = arith.addf %97, %7 : vector<8x32xf32>
    %c0_56 = arith.constant 0 : index
    %c0_57 = arith.constant 0 : index
    %99 = vector.load %arg8[%c0_56, %c0_57] : memref<1x32xf32, #tpu.memory_space<vmem>>, vector<1x32xf32>
    %100 = vector.shape_cast %99 : vector<1x32xf32> to vector<32xf32>
    %c0_58 = arith.constant 0 : index
    %c0_59 = arith.constant 0 : index
    %101 = vector.load %arg9[%c0_58, %c0_59] : memref<1x32xf32, #tpu.memory_space<vmem>>, vector<1x32xf32>
    %102 = vector.shape_cast %101 : vector<1x32xf32> to vector<32xf32>
    %cst_60 = arith.constant dense<0.000000e+00> : vector<8xf32>
    %103 = vector.multi_reduction <add>, %98, %cst_60 [1] : vector<8x32xf32> to vector<8xf32>
    %104 = vector.shape_cast %103 : vector<8xf32> to vector<8x1xf32>
    %cst_61 = arith.constant 3.200000e+01 : f32
    %105 = vector.broadcast %cst_61 : f32 to vector<8x1xf32>
    %106 = arith.divf %104, %105 : vector<8x1xf32>
    %107 = vector.broadcast %106 : vector<8x1xf32> to vector<8x32xf32>
    %108 = arith.subf %98, %107 : vector<8x32xf32>
    %109 = arith.mulf %108, %108 : vector<8x32xf32>
    %cst_62 = arith.constant dense<0.000000e+00> : vector<8xf32>
    %110 = vector.multi_reduction <add>, %109, %cst_62 [1] : vector<8x32xf32> to vector<8xf32>
    %111 = vector.shape_cast %110 : vector<8xf32> to vector<8x1xf32>
    %cst_63 = arith.constant 3.200000e+01 : f32
    %112 = vector.broadcast %cst_63 : f32 to vector<8x1xf32>
    %113 = arith.divf %111, %112 : vector<8x1xf32>
    %114 = vector.broadcast %106 : vector<8x1xf32> to vector<8x32xf32>
    %115 = arith.subf %98, %114 : vector<8x32xf32>
    %cst_64 = arith.constant 9.99999997E-7 : f32
    %116 = vector.broadcast %cst_64 : f32 to vector<8x1xf32>
    %117 = arith.addf %113, %116 : vector<8x1xf32>
    %118 = math.rsqrt %117 : vector<8x1xf32>
    %119 = vector.broadcast %118 : vector<8x1xf32> to vector<8x32xf32>
    %120 = arith.mulf %115, %119 : vector<8x32xf32>
    %121 = vector.shape_cast %100 : vector<32xf32> to vector<1x32xf32>
    %122 = vector.broadcast %121 : vector<1x32xf32> to vector<8x32xf32>
    %123 = arith.mulf %120, %122 : vector<8x32xf32>
    %124 = vector.shape_cast %102 : vector<32xf32> to vector<1x32xf32>
    %125 = vector.broadcast %124 : vector<1x32xf32> to vector<8x32xf32>
    %126 = arith.addf %123, %125 : vector<8x32xf32>
    %c0_65 = arith.constant 0 : index
    %c0_66 = arith.constant 0 : index
    %127 = vector.load %arg10[%c0_65, %c0_66] : memref<32x64xf32, #tpu.memory_space<vmem>>, vector<32x64xf32>
    %cst_67 = arith.constant dense<0.000000e+00> : vector<8x64xf32>
    %128 = tpu.matmul %126, %127, %cst_67 {dimension_numbers = #tpu.dot_dimension_numbers<[1], [0], [0], [1], [0, 0, 1, 1], [], []>} : vector<8x32xf32>, vector<32x64xf32>, vector<8x64xf32> -> vector<8x64xf32>
    %c0_68 = arith.constant 0 : index
    %c0_69 = arith.constant 0 : index
    %129 = vector.load %arg11[%c0_68, %c0_69] : memref<1x64xf32, #tpu.memory_space<vmem>>, vector<1x64xf32>
    %130 = vector.shape_cast %129 : vector<1x64xf32> to vector<64xf32>
    %131 = vector.shape_cast %130 : vector<64xf32> to vector<1x64xf32>
    %132 = vector.broadcast %131 : vector<1x64xf32> to vector<8x64xf32>
    %133 = arith.addf %128, %132 : vector<8x64xf32>
    %cst_70 = arith.constant 0.000000e+00 : f32
    %134 = vector.broadcast %cst_70 : f32 to vector<8x64xf32>
    %135 = arith.maximumf %133, %134 : vector<8x64xf32>
    %c0_71 = arith.constant 0 : index
    %c0_72 = arith.constant 0 : index
    %136 = vector.load %arg12[%c0_71, %c0_72] : memref<64x32xf32, #tpu.memory_space<vmem>>, vector<64x32xf32>
    %cst_73 = arith.constant dense<0.000000e+00> : vector<8x32xf32>
    %137 = tpu.matmul %135, %136, %cst_73 {dimension_numbers = #tpu.dot_dimension_numbers<[1], [0], [0], [1], [0, 0, 1, 1], [], []>} : vector<8x64xf32>, vector<64x32xf32>, vector<8x32xf32> -> vector<8x32xf32>
    %c0_74 = arith.constant 0 : index
    %c0_75 = arith.constant 0 : index
    %138 = vector.load %arg13[%c0_74, %c0_75] : memref<1x32xf32, #tpu.memory_space<vmem>>, vector<1x32xf32>
    %139 = vector.shape_cast %138 : vector<1x32xf32> to vector<32xf32>
    %140 = vector.shape_cast %139 : vector<32xf32> to vector<1x32xf32>
    %141 = vector.broadcast %140 : vector<1x32xf32> to vector<8x32xf32>
    %142 = arith.addf %137, %141 : vector<8x32xf32>
    %143 = arith.addf %142, %126 : vector<8x32xf32>
    %c0_76 = arith.constant 0 : index
    %c0_77 = arith.constant 0 : index
    %144 = vector.load %arg14[%c0_76, %c0_77] : memref<1x32xf32, #tpu.memory_space<vmem>>, vector<1x32xf32>
    %145 = vector.shape_cast %144 : vector<1x32xf32> to vector<32xf32>
    %c0_78 = arith.constant 0 : index
    %c0_79 = arith.constant 0 : index
    %146 = vector.load %arg15[%c0_78, %c0_79] : memref<1x32xf32, #tpu.memory_space<vmem>>, vector<1x32xf32>
    %147 = vector.shape_cast %146 : vector<1x32xf32> to vector<32xf32>
    %cst_80 = arith.constant dense<0.000000e+00> : vector<8xf32>
    %148 = vector.multi_reduction <add>, %143, %cst_80 [1] : vector<8x32xf32> to vector<8xf32>
    %149 = vector.shape_cast %148 : vector<8xf32> to vector<8x1xf32>
    %cst_81 = arith.constant 3.200000e+01 : f32
    %150 = vector.broadcast %cst_81 : f32 to vector<8x1xf32>
    %151 = arith.divf %149, %150 : vector<8x1xf32>
    %152 = vector.broadcast %151 : vector<8x1xf32> to vector<8x32xf32>
    %153 = arith.subf %143, %152 : vector<8x32xf32>
    %154 = arith.mulf %153, %153 : vector<8x32xf32>
    %cst_82 = arith.constant dense<0.000000e+00> : vector<8xf32>
    %155 = vector.multi_reduction <add>, %154, %cst_82 [1] : vector<8x32xf32> to vector<8xf32>
    %156 = vector.shape_cast %155 : vector<8xf32> to vector<8x1xf32>
    %cst_83 = arith.constant 3.200000e+01 : f32
    %157 = vector.broadcast %cst_83 : f32 to vector<8x1xf32>
    %158 = arith.divf %156, %157 : vector<8x1xf32>
    %159 = vector.broadcast %151 : vector<8x1xf32> to vector<8x32xf32>
    %160 = arith.subf %143, %159 : vector<8x32xf32>
    %cst_84 = arith.constant 9.99999997E-7 : f32
    %161 = vector.broadcast %cst_84 : f32 to vector<8x1xf32>
    %162 = arith.addf %158, %161 : vector<8x1xf32>
    %163 = math.rsqrt %162 : vector<8x1xf32>
    %164 = vector.broadcast %163 : vector<8x1xf32> to vector<8x32xf32>
    %165 = arith.mulf %160, %164 : vector<8x32xf32>
    %166 = vector.shape_cast %145 : vector<32xf32> to vector<1x32xf32>
    %167 = vector.broadcast %166 : vector<1x32xf32> to vector<8x32xf32>
    %168 = arith.mulf %165, %167 : vector<8x32xf32>
    %169 = vector.shape_cast %147 : vector<32xf32> to vector<1x32xf32>
    %170 = vector.broadcast %169 : vector<1x32xf32> to vector<8x32xf32>
    %171 = arith.addf %168, %170 : vector<8x32xf32>
    %c0_85 = arith.constant 0 : index
    %c0_86 = arith.constant 0 : index
    %c0_87 = arith.constant 0 : index
    %172 = vector.load %arg16[%c0_85, %c0_86, %c0_87] : memref<1x8x32xf32, #tpu.memory_space<vmem>>, vector<1x8x32xf32>
    %173 = vector.shape_cast %172 : vector<1x8x32xf32> to vector<8x32xf32>
    %174 = vector.shape_cast %171 : vector<8x32xf32> to vector<1x8x32xf32>
    tpu.vector_store %arg16[%c0_85, %c0_86, %c0_87], %174 {strides = array<i32>} : memref<1x8x32xf32, #tpu.memory_space<vmem>>, vector<1x8x32xf32>,
    return
  }
  func.func @transform_0(%arg0: i32, %arg1: i32) -> (i32, i32, i32) {
    %c0_i32 = arith.constant 0 : i32
    %c0_i32_0 = arith.constant 0 : i32
    %c0_i32_1 = arith.constant 0 : i32
    return %arg0, %c0_i32, %c0_i32_0 : i32, i32, i32
  }
  func.func @transform_1(%arg0: i32, %arg1: i32) -> (i32, i32, i32) {
    %c0_i32 = arith.constant 0 : i32
    %c0_i32_0 = arith.constant 0 : i32
    %c0_i32_1 = arith.constant 0 : i32
    return %arg0, %c0_i32, %c0_i32_0 : i32, i32, i32
  }
  func.func @transform_2(%arg0: i32, %arg1: i32) -> (i32, i32) {
    %c0_i32 = arith.constant 0 : i32
    %c0_i32_0 = arith.constant 0 : i32
    %c0_i32_1 = arith.constant 0 : i32
    return %c0_i32, %c0_i32_0 : i32, i32
  }
  func.func @transform_3(%arg0: i32, %arg1: i32) -> (i32, i32) {
    %c0_i32 = arith.constant 0 : i32
    %c0_i32_0 = arith.constant 0 : i32
    %c0_i32_1 = arith.constant 0 : i32
    return %c0_i32, %c0_i32_0 : i32, i32
  }
  func.func @transform_4(%arg0: i32, %arg1: i32) -> (i32, i32) {
    %c0_i32 = arith.constant 0 : i32
    %c0_i32_0 = arith.constant 0 : i32
    %c0_i32_1 = arith.constant 0 : i32
    return %c0_i32, %c0_i32_0 : i32, i32
  }
  func.func @transform_5(%arg0: i32, %arg1: i32) -> (i32, i32) {
    %c0_i32 = arith.constant 0 : i32
    %c0_i32_0 = arith.constant 0 : i32
    %c0_i32_1 = arith.constant 0 : i32
    return %c0_i32, %c0_i32_0 : i32, i32
  }
  func.func @transform_6(%arg0: i32, %arg1: i32) -> (i32, i32) {
    %c0_i32 = arith.constant 0 : i32
    %c0_i32_0 = arith.constant 0 : i32
    %c0_i32_1 = arith.constant 0 : i32
    return %c0_i32, %c0_i32_0 : i32, i32
  }
  func.func @transform_7(%arg0: i32, %arg1: i32) -> (i32, i32) {
    %c0_i32 = arith.constant 0 : i32
    %c0_i32_0 = arith.constant 0 : i32
    %c0_i32_1 = arith.constant 0 : i32
    return %c0_i32, %c0_i32_0 : i32, i32
  }
  func.func @transform_8(%arg0: i32, %arg1: i32) -> (i32, i32) {
    %c0_i32 = arith.constant 0 : i32
    %c0_i32_0 = arith.constant 0 : i32
    %c0_i32_1 = arith.constant 0 : i32
    return %c0_i32, %c0_i32_0 : i32, i32
  }
  func.func @transform_9(%arg0: i32, %arg1: i32) -> (i32, i32) {
    %c0_i32 = arith.constant 0 : i32
    %c0_i32_0 = arith.constant 0 : i32
    %c0_i32_1 = arith.constant 0 : i32
    return %c0_i32, %c0_i32_0 : i32, i32
  }
  func.func @transform_10(%arg0: i32, %arg1: i32) -> (i32, i32) {
    %c0_i32 = arith.constant 0 : i32
    %c0_i32_0 = arith.constant 0 : i32
    %c0_i32_1 = arith.constant 0 : i32
    return %c0_i32, %c0_i32_0 : i32, i32
  }
  func.func @transform_11(%arg0: i32, %arg1: i32) -> (i32, i32) {
    %c0_i32 = arith.constant 0 : i32
    %c0_i32_0 = arith.constant 0 : i32
    %c0_i32_1 = arith.constant 0 : i32
    return %c0_i32, %c0_i32_0 : i32, i32
  }
  func.func @transform_12(%arg0: i32, %arg1: i32) -> (i32, i32) {
    %c0_i32 = arith.constant 0 : i32
    %c0_i32_0 = arith.constant 0 : i32
    %c0_i32_1 = arith.constant 0 : i32
    return %c0_i32, %c0_i32_0 : i32, i32
  }
  func.func @transform_13(%arg0: i32, %arg1: i32) -> (i32, i32) {
    %c0_i32 = arith.constant 0 : i32
    %c0_i32_0 = arith.constant 0 : i32
    %c0_i32_1 = arith.constant 0 : i32
    return %c0_i32, %c0_i32_0 : i32, i32
  }
  func.func @transform_14(%arg0: i32, %arg1: i32) -> (i32, i32, i32) {
    %c0_i32 = arith.constant 0 : i32
    %c0_i32_0 = arith.constant 0 : i32
    return %arg0, %arg1, %c0_i32 : i32, i32, i32
  }
  func.func @transform_15(%arg0: i32, %arg1: i32) -> (i32, i32, i32, i32) {
    %c0_i32 = arith.constant 0 : i32
    %c0_i32_0 = arith.constant 0 : i32
    %c0_i32_1 = arith.constant 0 : i32
    return %arg0, %c0_i32, %arg1, %c0_i32_0 : i32, i32, i32, i32
  }
}

</mosaic_0001>

<llo_original>
// kernel: tpu_custom_call.1
$region0: #{tpu_custom_call.1}
  #allocation0 [shape = 'u32[]', space=smem, size = 0x4, offset = 0x4, fixed_abs, tag = 'smem constant byte address 0x4 - core index']
  #allocation1 [shape = 'u32[144,128]{1,0:T(1,128)}', space=vmem, size = 0x12000, scoped, tag = 'internal scratch']
  #allocation2 [shape = 'f32[16,32]{1,0:T(8,128)}', space=vmem, size = 0x2000, scoped, tag = 'scratch operand']
  #allocation3 [shape = 'f32[16,32]{1,0:T(8,128)}', space=vmem, size = 0x2000, scoped, tag = 'scratch operand']
  %s0 = inlined_call_operand.vmem [shape: f32[2,16,32], index: 0, kind: input, shape index: {}]
  %s1 = inlined_call_operand.vmem [shape: s32[2,1,16], index: 1, kind: input, shape index: {}]
  %s2 = inlined_call_operand.vmem [shape: f32[32,32], index: 2, kind: input, shape index: {}]
  %s3 = inlined_call_operand.vmem [shape: f32[32,32], index: 3, kind: input, shape index: {}]
  %s4 = inlined_call_operand.hbm [shape: f32[32,32], index: 4, kind: input, shape index: {}]
  %s5 = inlined_call_operand.hbm [shape: f32[32,32], index: 5, kind: input, shape index: {}]
  %s6 = inlined_call_operand.vmem [shape: f32[1,32], index: 6, kind: input, shape index: {}]
  %s7 = inlined_call_operand.vmem [shape: f32[1,32], index: 7, kind: input, shape index: {}]
  %s8 = inlined_call_operand.hbm [shape: f32[32,64], index: 8, kind: input, shape index: {}]
  %s9 = inlined_call_operand.vmem [shape: f32[1,64], index: 9, kind: input, shape index: {}]
  %s10 = inlined_call_operand.vmem [shape: f32[64,32], index: 10, kind: input, shape index: {}]
  %s11 = inlined_call_operand.vmem [shape: f32[1,32], index: 11, kind: input, shape index: {}]
  %s12 = inlined_call_operand.vmem [shape: f32[1,32], index: 12, kind: input, shape index: {}]
  %s13 = inlined_call_operand.vmem [shape: f32[1,32], index: 13, kind: input, shape index: {}]
  %s14 = inlined_call_operand.hbm [shape: f32[2,16,32], index: 14, kind: output, shape index: {0}]
  %s15 = inlined_call_operand.hbm [shape: f32[2,4,16,16], index: 15, kind: output, shape index: {1}]
  %16 = xla_tuple %s14, %s15
  %s17 = sld [smem:[#allocation0]]
  $region113: #{tpu_custom_call.1} parent=0
    _
  %s19 = ssub.s32 1, %s17
  %s20 = scalar_select 0, %s19, %s17
  $region1: #{tpu_custom_call.1} parent=0
    #allocation4 [shape = 'u8[16384]{0}', space=vmem, size = 0x4000, scoped, tag = 'input window, operand 4, single buffered']
    #allocation5 [shape = 's32[2]{0}', space=sflag, size = 0x8, scoped, tag = 'scoped memory for tpu_custom_call.1']
    #allocation6 [shape = 's32[2]{0}', space=sflag, size = 0x8, scoped, tag = 'scoped memory for tpu_custom_call.1']
    #allocation7 [shape = 'u8[16384]{0}', space=vmem, size = 0x4000, scoped, tag = 'input window, operand 5, single buffered']
    #allocation8 [shape = 's32[1]{0}', space=sflag, size = 0x4, scoped, tag = 'scoped memory for tpu_custom_call.1']
    #allocation9 [shape = 'u8[16384]{0}', space=vmem, size = 0x4000, scoped, tag = 'input window, operand 8, single buffered']
    #allocation10 [shape = 'u8[8192]{0}', space=vmem, size = 0x2000, scoped, tag = 'output window, operand 0']
    #allocation11 [shape = 'u8[32768]{0}', space=vmem, size = 0x8000, scoped, tag = 'output window, operand 1']
    #allocation12 [shape = 's32[2]{0}', space=sflag, size = 0x8, scoped, tag = 'scoped memory for tpu_custom_call.1']
    %21 = vsyncpa [#allocation5], 0
    %22 = vsyncpa [#allocation8], 0
    %23 = vsyncpa [#allocation6], 0
    %s24 = scalar_lea.sflag [#allocation6], 1
    %25 = vsyncpa %s24, 0
    %26 = vsyncpa [#allocation12], 0
    %s27 = scalar_lea.sflag [#allocation12], 1
    %28 = vsyncpa %s27, 0
    loop: start=0, step=1, limit=6
    $region2: #{tpu_custom_call.1} parent=1 // loop_pre_header
      _
    $region3: #{tpu_custom_call.1} parent=1 // loop_header
      %s30 = sphi 0, %s34
      %p31 = scmp.ge.s32.totalorder %s30, 6
      %s37 = sphi 0, %s49
      %s38 = sphi 0, %s45
      %s39 = sphi 0, %s37
      %s40 = sphi 0, %s38
      %s41 = sphi 0, %s39
      %s42 = sphi 0, %s40
      %s52 = sphi 0, %s54
      %s55 = sphi 0, %s52
      %s56 = sphi 0, %s55
      %s72 = sphi 0, %s56
      %s78 = sphi 0, %s80
      %s81 = sphi 0, %s78
      %s82 = sphi 0, %s81
      %s98 = sphi 0, %s82
      %s102 = sphi 0, %s102
      %s104 = sphi 0, %s102
      %s105 = sphi 0, %s104
      %s119 = sphi 0, %s105
      %s123 = sphi 0, %s123
      %s125 = sphi 0, %s123
      %s126 = sphi 0, %s125
      %s140 = sphi 0, %s126
      %s144 = sphi 0, %s144
      %s146 = sphi 0, %s144
      %s147 = sphi 0, %s146
      %s161 = sphi 0, %s147
      %s165 = sphi 0, %s165
      %s167 = sphi 0, %s165
      %s168 = sphi 0, %s167
      %s182 = sphi 0, %s168
      %s186 = sphi 0, %s186
      %s188 = sphi 0, %s186
      %s189 = sphi 0, %s188
      %s203 = sphi 0, %s189
      %s207 = sphi 0, %s207
      %s209 = sphi 0, %s207
      %s210 = sphi 0, %s209
      %s224 = sphi 0, %s210
      %s228 = sphi 0, %s228
      %s230 = sphi 0, %s228
      %s231 = sphi 0, %s230
      %s245 = sphi 0, %s231
      %s249 = sphi 0, %s249
      %s251 = sphi 0, %s249
      %s252 = sphi 0, %s251
      %s266 = sphi 0, %s252
      %s270 = sphi 0, %s270
      %s272 = sphi 0, %s270
      %s273 = sphi 0, %s272
      %s287 = sphi 0, %s273
      %s291 = sphi 0, %s291
      %s293 = sphi 0, %s291
      %s294 = sphi 0, %s293
      %s308 = sphi 0, %s294
      %s312 = sphi 0, %s312
      %s314 = sphi 0, %s312
      %s315 = sphi 0, %s314
      %s329 = sphi 0, %s315
      %s333 = sphi 0, %s333
      %s335 = sphi 0, %s333
      %s336 = sphi 0, %s335
      %s350 = sphi 0, %s336
      %s358 = sphi 0, %s360
      %s361 = sphi 0, %s358
      %s362 = sphi 0, %s361
      %s378 = sphi 0, %s362
      %s386 = sphi 0, %s388
      %s389 = sphi 0, %s386
      %s390 = sphi 0, %s389
      %s406 = sphi 0, %s390
    $region4: #{tpu_custom_call.1} parent=1 // loop_header_branch
      %33 = sbr.rel (%p31) target = $region8
    $region5: #{tpu_custom_call.1} parent=1 // loop_body
      %s35 = ssub.s32 %s30, 1
      %s36 = ssub.s32 %s30, 2
      %s43 = sadd.s32 1, %s38
      %p44 = scmp.ge.s32.totalorder %s43, 2
      %s45 = scalar_select %p44, 0, %s43
      %s46 = sadd.s32 1, %s37
      %s47 = scalar_select %p44, %s46, %s37
      %p48 = scmp.ge.s32.totalorder %s47, 2
      %s49 = scalar_select %p48, 0, %s47
      %s50 = ssub.s32 %s37, %s49
      %p51 = scmp.eq.s32.totalorder %s50, 0
      %s53 = sadd.s32 %s52, 1
      %s54 = scalar_select %p51, %s52, %s53
      %p57 = pneg %p51
      %p58 = scmp.eq.s32.totalorder %s30, 3
      %p59 = por %p57, %p58
      %p60 = scmp.ne.s32.totalorder %s52, %s55
      %p61 = scmp.eq.s32.totalorder %s30, 0
      %p62 = por %p60, %p61
      %p63 = scmp.ne.s32.totalorder %s52, %s55
      %p64 = scmp.eq.s32.totalorder %s35, 3
      %p65 = por %p63, %p64
      %p66 = scmp.ne.s32.totalorder %s55, %s56
      %p67 = scmp.eq.s32.totalorder %s35, 0
      %p68 = por %p66, %p67
      %p69 = scmp.ne.s32.totalorder %s55, %s56
      %p70 = scmp.eq.s32.totalorder %s36, 3
      %p71 = por %p69, %p70
      %p73 = scmp.ne.s32.totalorder %s56, %s72
      %p74 = scmp.eq.s32.totalorder %s36, 0
      %p75 = por %p73, %p74
      %s76 = ssub.s32 %s37, %s49
      %p77 = scmp.eq.s32.totalorder %s76, 0
      %s79 = sadd.s32 %s78, 1
      %s80 = scalar_select %p77, %s78, %s79
      %p83 = pneg %p77
      %p84 = scmp.eq.s32.totalorder %s30, 3
      %p85 = por %p83, %p84
      %p86 = scmp.ne.s32.totalorder %s78, %s81
      %p87 = scmp.eq.s32.totalorder %s30, 0
      %p88 = por %p86, %p87
      %p89 = scmp.ne.s32.totalorder %s78, %s81
      %p90 = scmp.eq.s32.totalorder %s35, 3
      %p91 = por %p89, %p90
      %p92 = scmp.ne.s32.totalorder %s81, %s82
      %p93 = scmp.eq.s32.totalorder %s35, 0
      %p94 = por %p92, %p93
      %p95 = scmp.ne.s32.totalorder %s81, %s82
      %p96 = scmp.eq.s32.totalorder %s36, 3
      %p97 = por %p95, %p96
      %p99 = scmp.ne.s32.totalorder %s82, %s98
      %p100 = scmp.eq.s32.totalorder %s36, 0
      %p101 = por %p99, %p100
      %s103 = sadd.s32 %s102, 1
      %p106 = scmp.eq.s32.totalorder %s30, 3
      %p107 = scmp.ne.s32.totalorder %s102, %s104
      %p108 = scmp.eq.s32.totalorder %s30, 0
      %p109 = por %p107, %p108
      %p110 = scmp.ne.s32.totalorder %s102, %s104
      %p111 = scmp.eq.s32.totalorder %s35, 3
      %p112 = por %p110, %p111
      %p113 = scmp.ne.s32.totalorder %s104, %s105
      %p114 = scmp.eq.s32.totalorder %s35, 0
      %p115 = por %p113, %p114
      %p116 = scmp.ne.s32.totalorder %s104, %s105
      %p117 = scmp.eq.s32.totalorder %s36, 3
      %p118 = por %p116, %p117
      %p120 = scmp.ne.s32.totalorder %s105, %s119
      %p121 = scmp.eq.s32.totalorder %s36, 0
      %p122 = por %p120, %p121
      %s124 = sadd.s32 %s123, 1
      %p127 = scmp.eq.s32.totalorder %s30, 3
      %p128 = scmp.ne.s32.totalorder %s123, %s125
      %p129 = scmp.eq.s32.totalorder %s30, 0
      %p130 = por %p128, %p129
      %p131 = scmp.ne.s32.totalorder %s123, %s125
      %p132 = scmp.eq.s32.totalorder %s35, 3
      %p133 = por %p131, %p132
      %p134 = scmp.ne.s32.totalorder %s125, %s126
      %p135 = scmp.eq.s32.totalorder %s35, 0
      %p136 = por %p134, %p135
      %p137 = scmp.ne.s32.totalorder %s125, %s126
      %p138 = scmp.eq.s32.totalorder %s36, 3
      %p139 = por %p137, %p138
      %p141 = scmp.ne.s32.totalorder %s126, %s140
      %p142 = scmp.eq.s32.totalorder %s36, 0
      %p143 = por %p141, %p142
      %s145 = sadd.s32 %s144, 1
      %p148 = scmp.eq.s32.totalorder %s30, 3
      %p149 = scmp.ne.s32.totalorder %s144, %s146
      %p150 = scmp.eq.s32.totalorder %s30, 0
      %p151 = por %p149, %p150
      %p152 = scmp.ne.s32.totalorder %s144, %s146
      %p153 = scmp.eq.s32.totalorder %s35, 3
      %p154 = por %p152, %p153
      %p155 = scmp.ne.s32.totalorder %s146, %s147
      %p156 = scmp.eq.s32.totalorder %s35, 0
      %p157 = por %p155, %p156
      %p158 = scmp.ne.s32.totalorder %s146, %s147
      %p159 = scmp.eq.s32.totalorder %s36, 3
      %p160 = por %p158, %p159
      %p162 = scmp.ne.s32.totalorder %s147, %s161
      %p163 = scmp.eq.s32.totalorder %s36, 0
      %p164 = por %p162, %p163
      %s166 = sadd.s32 %s165, 1
      %p169 = scmp.eq.s32.totalorder %s30, 3
      %p170 = scmp.ne.s32.totalorder %s165, %s167
      %p171 = scmp.eq.s32.totalorder %s30, 0
      %p172 = por %p170, %p171
      %p173 = scmp.ne.s32.totalorder %s165, %s167
      %p174 = scmp.eq.s32.totalorder %s35, 3
      %p175 = por %p173, %p174
      %p176 = scmp.ne.s32.totalorder %s167, %s168
      %p177 = scmp.eq.s32.totalorder %s35, 0
      %p178 = por %p176, %p177
      %p179 = scmp.ne.s32.totalorder %s167, %s168
      %p180 = scmp.eq.s32.totalorder %s36, 3
      %p181 = por %p179, %p180
      %p183 = scmp.ne.s32.totalorder %s168, %s182
      %p184 = scmp.eq.s32.totalorder %s36, 0
      %p185 = por %p183, %p184
      %s187 = sadd.s32 %s186, 1
      %p190 = scmp.eq.s32.totalorder %s30, 3
      %p191 = scmp.ne.s32.totalorder %s186, %s188
      %p192 = scmp.eq.s32.totalorder %s30, 0
      %p193 = por %p191, %p192
      %p194 = scmp.ne.s32.totalorder %s186, %s188
      %p195 = scmp.eq.s32.totalorder %s35, 3
      %p196 = por %p194, %p195
      %p197 = scmp.ne.s32.totalorder %s188, %s189
      %p198 = scmp.eq.s32.totalorder %s35, 0
      %p199 = por %p197, %p198
      %p200 = scmp.ne.s32.totalorder %s188, %s189
      %p201 = scmp.eq.s32.totalorder %s36, 3
      %p202 = por %p200, %p201
      %p204 = scmp.ne.s32.totalorder %s189, %s203
      %p205 = scmp.eq.s32.totalorder %s36, 0
      %p206 = por %p204, %p205
      %s208 = sadd.s32 %s207, 1
      %p211 = scmp.eq.s32.totalorder %s30, 3
      %p212 = scmp.ne.s32.totalorder %s207, %s209
      %p213 = scmp.eq.s32.totalorder %s30, 0
      %p214 = por %p212, %p213
      %p215 = scmp.ne.s32.totalorder %s207, %s209
      %p216 = scmp.eq.s32.totalorder %s35, 3
      %p217 = por %p215, %p216
      %p218 = scmp.ne.s32.totalorder %s209, %s210
      %p219 = scmp.eq.s32.totalorder %s35, 0
      %p220 = por %p218, %p219
      %p221 = scmp.ne.s32.totalorder %s209, %s210
      %p222 = scmp.eq.s32.totalorder %s36, 3
      %p223 = por %p221, %p222
      %p225 = scmp.ne.s32.totalorder %s210, %s224
      %p226 = scmp.eq.s32.totalorder %s36, 0
      %p227 = por %p225, %p226
      %s229 = sadd.s32 %s228, 1
      %p232 = scmp.eq.s32.totalorder %s30, 3
      %p233 = scmp.ne.s32.totalorder %s228, %s230
      %p234 = scmp.eq.s32.totalorder %s30, 0
      %p235 = por %p233, %p234
      %p236 = scmp.ne.s32.totalorder %s228, %s230
      %p237 = scmp.eq.s32.totalorder %s35, 3
      %p238 = por %p236, %p237
      %p239 = scmp.ne.s32.totalorder %s230, %s231
      %p240 = scmp.eq.s32.totalorder %s35, 0
      %p241 = por %p239, %p240
      %p242 = scmp.ne.s32.totalorder %s230, %s231
      %p243 = scmp.eq.s32.totalorder %s36, 3
      %p244 = por %p242, %p243
      %p246 = scmp.ne.s32.totalorder %s231, %s245
      %p247 = scmp.eq.s32.totalorder %s36, 0
      %p248 = por %p246, %p247
      %s250 = sadd.s32 %s249, 1
      %p253 = scmp.eq.s32.totalorder %s30, 3
      %p254 = scmp.ne.s32.totalorder %s249, %s251
      %p255 = scmp.eq.s32.totalorder %s30, 0
      %p256 = por %p254, %p255
      %p257 = scmp.ne.s32.totalorder %s249, %s251
      %p258 = scmp.eq.s32.totalorder %s35, 3
      %p259 = por %p257, %p258
      %p260 = scmp.ne.s32.totalorder %s251, %s252
      %p261 = scmp.eq.s32.totalorder %s35, 0
      %p262 = por %p260, %p261
      %p263 = scmp.ne.s32.totalorder %s251, %s252
      %p264 = scmp.eq.s32.totalorder %s36, 3
      %p265 = por %p263, %p264
      %p267 = scmp.ne.s32.totalorder %s252, %s266
      %p268 = scmp.eq.s32.totalorder %s36, 0
      %p269 = por %p267, %p268
      %s271 = sadd.s32 %s270, 1
      %p274 = scmp.eq.s32.totalorder %s30, 3
      %p275 = scmp.ne.s32.totalorder %s270, %s272
      %p276 = scmp.eq.s32.totalorder %s30, 0
      %p277 = por %p275, %p276
      %p278 = scmp.ne.s32.totalorder %s270, %s272
      %p279 = scmp.eq.s32.totalorder %s35, 3
      %p280 = por %p278, %p279
      %p281 = scmp.ne.s32.totalorder %s272, %s273
      %p282 = scmp.eq.s32.totalorder %s35, 0
      %p283 = por %p281, %p282
      %p284 = scmp.ne.s32.totalorder %s272, %s273
      %p285 = scmp.eq.s32.totalorder %s36, 3
      %p286 = por %p284, %p285
      %p288 = scmp.ne.s32.totalorder %s273, %s287
      %p289 = scmp.eq.s32.totalorder %s36, 0
      %p290 = por %p288, %p289
      %s292 = sadd.s32 %s291, 1
      %p295 = scmp.eq.s32.totalorder %s30, 3
      %p296 = scmp.ne.s32.totalorder %s291, %s293
      %p297 = scmp.eq.s32.totalorder %s30, 0
      %p298 = por %p296, %p297
      %p299 = scmp.ne.s32.totalorder %s291, %s293
      %p300 = scmp.eq.s32.totalorder %s35, 3
      %p301 = por %p299, %p300
      %p302 = scmp.ne.s32.totalorder %s293, %s294
      %p303 = scmp.eq.s32.totalorder %s35, 0
      %p304 = por %p302, %p303
      %p305 = scmp.ne.s32.totalorder %s293, %s294
      %p306 = scmp.eq.s32.totalorder %s36, 3
      %p307 = por %p305, %p306
      %p309 = scmp.ne.s32.totalorder %s294, %s308
      %p310 = scmp.eq.s32.totalorder %s36, 0
      %p311 = por %p309, %p310
      %s313 = sadd.s32 %s312, 1
      %p316 = scmp.eq.s32.totalorder %s30, 3
      %p317 = scmp.ne.s32.totalorder %s312, %s314
      %p318 = scmp.eq.s32.totalorder %s30, 0
      %p319 = por %p317, %p318
      %p320 = scmp.ne.s32.totalorder %s312, %s314
      %p321 = scmp.eq.s32.totalorder %s35, 3
      %p322 = por %p320, %p321
      %p323 = scmp.ne.s32.totalorder %s314, %s315
      %p324 = scmp.eq.s32.totalorder %s35, 0
      %p325 = por %p323, %p324
      %p326 = scmp.ne.s32.totalorder %s314, %s315
      %p327 = scmp.eq.s32.totalorder %s36, 3
      %p328 = por %p326, %p327
      %p330 = scmp.ne.s32.totalorder %s315, %s329
      %p331 = scmp.eq.s32.totalorder %s36, 0
      %p332 = por %p330, %p331
      %s334 = sadd.s32 %s333, 1
      %p337 = scmp.eq.s32.totalorder %s30, 3
      %p338 = scmp.ne.s32.totalorder %s333, %s335
      %p339 = scmp.eq.s32.totalorder %s30, 0
      %p340 = por %p338, %p339
      %p341 = scmp.ne.s32.totalorder %s333, %s335
      %p342 = scmp.eq.s32.totalorder %s35, 3
      %p343 = por %p341, %p342
      %p344 = scmp.ne.s32.totalorder %s335, %s336
      %p345 = scmp.eq.s32.totalorder %s35, 0
      %p346 = por %p344, %p345
      %p347 = scmp.ne.s32.totalorder %s335, %s336
      %p348 = scmp.eq.s32.totalorder %s36, 3
      %p349 = por %p347, %p348
      %p351 = scmp.ne.s32.totalorder %s336, %s350
      %p352 = scmp.eq.s32.totalorder %s36, 0
      %p353 = por %p351, %p352
      %s354 = ssub.s32 %s37, %s49
      %s355 = ssub.s32 %s38, %s45
      %s356 = sor.u32 %s354, %s355
      %p357 = scmp.eq.s32.totalorder %s356, 0
      %s359 = sadd.s32 %s358, 1
      %s360 = scalar_select %p357, %s358, %s359
      %p363 = pneg %p357
      %p364 = scmp.eq.s32.totalorder %s30, 3
      %p365 = por %p363, %p364
      %p366 = scmp.ne.s32.totalorder %s358, %s361
      %p367 = scmp.eq.s32.totalorder %s30, 0
      %p368 = por %p366, %p367
      %p369 = scmp.ne.s32.totalorder %s358, %s361
      %p370 = scmp.eq.s32.totalorder %s35, 3
      %p371 = por %p369, %p370
      %p372 = scmp.ne.s32.totalorder %s361, %s362
      %p373 = scmp.eq.s32.totalorder %s35, 0
      %p374 = por %p372, %p373
      %p375 = scmp.ne.s32.totalorder %s361, %s362
      %p376 = scmp.eq.s32.totalorder %s36, 3
      %p377 = por %p375, %p376
      %p379 = scmp.ne.s32.totalorder %s362, %s378
      %p380 = scmp.eq.s32.totalorder %s36, 0
      %p381 = por %p379, %p380
      %s382 = ssub.s32 %s37, %s49
      %s383 = ssub.s32 %s38, %s45
      %s384 = sor.u32 %s382, %s383
      %p385 = scmp.eq.s32.totalorder %s384, 0
      %s387 = sadd.s32 %s386, 1
      %s388 = scalar_select %p385, %s386, %s387
      %p391 = pneg %p385
      %p392 = scmp.eq.s32.totalorder %s30, 3
      %p393 = por %p391, %p392
      %p394 = scmp.ne.s32.totalorder %s386, %s389
      %p395 = scmp.eq.s32.totalorder %s30, 0
      %p396 = por %p394, %p395
      %p397 = scmp.ne.s32.totalorder %s386, %s389
      %p398 = scmp.eq.s32.totalorder %s35, 3
      %p399 = por %p397, %p398
      %p400 = scmp.ne.s32.totalorder %s389, %s390
      %p401 = scmp.eq.s32.totalorder %s35, 0
      %p402 = por %p400, %p401
      %p403 = scmp.ne.s32.totalorder %s389, %s390
      %p404 = scmp.eq.s32.totalorder %s36, 3
      %p405 = por %p403, %p404
      %p407 = scmp.ne.s32.totalorder %s390, %s406
      %p408 = scmp.eq.s32.totalorder %s36, 0
      %p409 = por %p407, %p408
      %p410 = scmp.le.s32.totalorder 1, %s30
      %p411 = scmp.lt.s32.totalorder %s30, 5
      %p412 = pnand %p410, %p411
      %p413 = pneg %p412
      // Predicated region
      $region9: #{tpu_custom_call.1} parent=5 // pred_check
        _
      $region10: #{tpu_custom_call.1} parent=5 // pred_check_branch
        %415 = sbr.rel (%p412) target = $region12
      $region11: #{tpu_custom_call.1} parent=5 // pred_region
        %s416 = ssub.s32 %s30, 1
        // Predicated region
        $region13: #{tpu_custom_call.1} parent=11 // pred_check
          %p417 = pneg %p115
        $region14: #{tpu_custom_call.1} parent=11 // pred_check_branch
          %419 = sbr.rel (%p417) target = $region16
        $region15: #{tpu_custom_call.1} parent=11 // pred_region
          _
        $region16: #{tpu_custom_call.1} parent=11 // pred_fallthru
          _
        // Predicated region
        $region17: #{tpu_custom_call.1} parent=11 // pred_check
          %p420 = pneg %p136
        $region18: #{tpu_custom_call.1} parent=11 // pred_check_branch
          %422 = sbr.rel (%p420) target = $region20
        $region19: #{tpu_custom_call.1} parent=11 // pred_region
          _
        $region20: #{tpu_custom_call.1} parent=11 // pred_fallthru
          _
        // Predicated region
        $region21: #{tpu_custom_call.1} parent=11 // pred_check
          %p423 = pneg %p157
        $region22: #{tpu_custom_call.1} parent=11 // pred_check_branch
          %425 = sbr.rel (%p423) target = $region24
        $region23: #{tpu_custom_call.1} parent=11 // pred_region
          %s427 = ssub.s32 512, 512
          %428 = vsyncadd [#allocation5], %s427
          %s429 = sshll.u32 [#allocation4], 4
          %s430 = int_to_ptr.vmem [resolvable:$true] %s429
          %435 = dma.hbm_to_vmem [thread:$0]  %s4, 512, %s430, [#allocation5], 128, 128, 8
        $region24: #{tpu_custom_call.1} parent=11 // pred_fallthru
          _
        // Predicated region
        $region25: #{tpu_custom_call.1} parent=11 // pred_check
          %p436 = pneg %p178
        $region26: #{tpu_custom_call.1} parent=11 // pred_check_branch
          %438 = sbr.rel (%p436) target = $region28
        $region27: #{tpu_custom_call.1} parent=11 // pred_region
          %s440 = ssub.s32 512, 512
          %441 = vsyncadd [#allocation8], %s440
          %s442 = sshll.u32 [#allocation7], 4
          %s443 = int_to_ptr.vmem [resolvable:$true] %s442
          %448 = dma.hbm_to_vmem [thread:$0]  %s5, 512, %s443, [#allocation8], 128, 128, 8
        $region28: #{tpu_custom_call.1} parent=11 // pred_fallthru
          _
        // Predicated region
        $region29: #{tpu_custom_call.1} parent=11 // pred_check
          %p449 = pneg %p199
        $region30: #{tpu_custom_call.1} parent=11 // pred_check_branch
          %451 = sbr.rel (%p449) target = $region32
        $region31: #{tpu_custom_call.1} parent=11 // pred_region
          _
        $region32: #{tpu_custom_call.1} parent=11 // pred_fallthru
          _
        // Predicated region
        $region33: #{tpu_custom_call.1} parent=11 // pred_check
          %p452 = pneg %p220
        $region34: #{tpu_custom_call.1} parent=11 // pred_check_branch
          %454 = sbr.rel (%p452) target = $region36
        $region35: #{tpu_custom_call.1} parent=11 // pred_region
          _
        $region36: #{tpu_custom_call.1} parent=11 // pred_fallthru
          _
        // Predicated region
        $region37: #{tpu_custom_call.1} parent=11 // pred_check
          %p455 = pneg %p241
        $region38: #{tpu_custom_call.1} parent=11 // pred_check_branch
          %457 = sbr.rel (%p455) target = $region40
        $region39: #{tpu_custom_call.1} parent=11 // pred_region
          %s459 = ssub.s32 512, 512
          %460 = vsyncadd [#allocation8], %s459
          %s461 = sshll.u32 [#allocation9], 4
          %s462 = int_to_ptr.vmem [resolvable:$true] %s461
          %467 = dma.hbm_to_vmem [thread:$0]  %s8, 512, %s462, [#allocation8], 128, 128, 8
        $region40: #{tpu_custom_call.1} parent=11 // pred_fallthru
          _
        // Predicated region
        $region41: #{tpu_custom_call.1} parent=11 // pred_check
          %p468 = pneg %p262
        $region42: #{tpu_custom_call.1} parent=11 // pred_check_branch
          %470 = sbr.rel (%p468) target = $region44
        $region43: #{tpu_custom_call.1} parent=11 // pred_region
          _
        $region44: #{tpu_custom_call.1} parent=11 // pred_fallthru
          _
        // Predicated region
        $region45: #{tpu_custom_call.1} parent=11 // pred_check
          %p471 = pneg %p283
        $region46: #{tpu_custom_call.1} parent=11 // pred_check_branch
          %473 = sbr.rel (%p471) target = $region48
        $region47: #{tpu_custom_call.1} parent=11 // pred_region
          _
        $region48: #{tpu_custom_call.1} parent=11 // pred_fallthru
          _
        // Predicated region
        $region49: #{tpu_custom_call.1} parent=11 // pred_check
          %p474 = pneg %p304
        $region50: #{tpu_custom_call.1} parent=11 // pred_check_branch
          %476 = sbr.rel (%p474) target = $region52
        $region51: #{tpu_custom_call.1} parent=11 // pred_region
          _
        $region52: #{tpu_custom_call.1} parent=11 // pred_fallthru
          _
        // Predicated region
        $region53: #{tpu_custom_call.1} parent=11 // pred_check
          %p477 = pneg %p325
        $region54: #{tpu_custom_call.1} parent=11 // pred_check_branch
          %479 = sbr.rel (%p477) target = $region56
        $region55: #{tpu_custom_call.1} parent=11 // pred_region
          _
        $region56: #{tpu_custom_call.1} parent=11 // pred_fallthru
          _
        // Predicated region
        $region57: #{tpu_custom_call.1} parent=11 // pred_check
          %p480 = pneg %p346
        $region58: #{tpu_custom_call.1} parent=11 // pred_check_branch
          %482 = sbr.rel (%p480) target = $region60
        $region59: #{tpu_custom_call.1} parent=11 // pred_region
          _
        $region60: #{tpu_custom_call.1} parent=11 // pred_fallthru
          _
      $region12: #{tpu_custom_call.1} parent=5 // pred_fallthru
        _
      %p483 = scmp.lt.s32.totalorder %s30, 4
      // Predicated region
      $region61: #{tpu_custom_call.1} parent=5 // pred_check
        %p484 = pneg %p483
      $region62: #{tpu_custom_call.1} parent=5 // pred_check_branch
        %486 = sbr.rel (%p484) target = $region64
      $region63: #{tpu_custom_call.1} parent=5 // pred_region
        // Predicated region
        $region65: #{tpu_custom_call.1} parent=63 // pred_check
          %p487 = pneg %p62
        $region66: #{tpu_custom_call.1} parent=63 // pred_check_branch
          %489 = sbr.rel (%p487) target = $region68
        $region67: #{tpu_custom_call.1} parent=63 // pred_region
          %p490 = scmp.lt.s32.totalorder %s37, 1
          %s491 = scalar_select %p490, %s37, 1
          %s492 = smul.addr %s491, 2
          %s493 = smul.addr %s492, 8
          %s494 = scalar_lea.vmem %s0, %s493
        $region68: #{tpu_custom_call.1} parent=63 // pred_fallthru
          _
        // Predicated region
        $region69: #{tpu_custom_call.1} parent=63 // pred_check
          %p495 = pneg %p88
        $region70: #{tpu_custom_call.1} parent=63 // pred_check_branch
          %497 = sbr.rel (%p495) target = $region72
        $region71: #{tpu_custom_call.1} parent=63 // pred_region
          %p498 = scmp.lt.s32.totalorder %s37, 1
          %s499 = scalar_select %p498, %s37, 1
          %s500 = scalar_lea.vmem %s1, %s499
        $region72: #{tpu_custom_call.1} parent=63 // pred_fallthru
          _
      $region64: #{tpu_custom_call.1} parent=5 // pred_fallthru
        _
      %p501 = scmp.le.s32.totalorder 1, %s30
      %p502 = scmp.lt.s32.totalorder %s30, 5
      %p503 = pnand %p501, %p502
      %p504 = pneg %p503
      // Predicated region
      $region73: #{tpu_custom_call.1} parent=5 // pred_check
        _
      $region74: #{tpu_custom_call.1} parent=5 // pred_check_branch
        %506 = sbr.rel (%p503) target = $region76
      $region75: #{tpu_custom_call.1} parent=5 // pred_region
        %s507 = ssub.s32 %s30, 1
        // Predicated region
        $region77: #{tpu_custom_call.1} parent=75 // pred_check
          %p508 = pneg %p157
        $region78: #{tpu_custom_call.1} parent=75 // pred_check_branch
          %510 = sbr.rel (%p508) target = $region80
        $region79: #{tpu_custom_call.1} parent=75 // pred_region
          %511 = dma.done [#allocation5], 512
        $region80: #{tpu_custom_call.1} parent=75 // pred_fallthru
          _
        // Predicated region
        $region81: #{tpu_custom_call.1} parent=75 // pred_check
          %p512 = pneg %p178
        $region82: #{tpu_custom_call.1} parent=75 // pred_check_branch
          %514 = sbr.rel (%p512) target = $region84
        $region83: #{tpu_custom_call.1} parent=75 // pred_region
          %515 = dma.done [#allocation8], 512
        $region84: #{tpu_custom_call.1} parent=75 // pred_fallthru
          _
        // Predicated region
        $region85: #{tpu_custom_call.1} parent=75 // pred_check
          %p516 = pneg %p241
        $region86: #{tpu_custom_call.1} parent=75 // pred_check_branch
          %518 = sbr.rel (%p516) target = $region88
        $region87: #{tpu_custom_call.1} parent=75 // pred_region
          %519 = dma.done [#allocation8], 512
        $region88: #{tpu_custom_call.1} parent=75 // pred_fallthru
          _
        %p520 = scmp.lt.s32.totalorder %s39, 1
        %s521 = scalar_select %p520, %s39, 1
        %s522 = smul.addr %s521, 2
        %s523 = smul.addr %s522, 8
        %s524 = scalar_lea.vmem %s0, %s523
        %p525 = pneg %p68
        %p526 = pneg %p65
        %p527 = scmp.lt.s32.totalorder %s39, 1
        %s528 = scalar_select %p527, %s39, 1
        %s529 = scalar_lea.vmem %s1, %s528
        %p530 = pneg %p94
        %p531 = pneg %p91
        %p532 = pneg %p115
        %p533 = pneg %p112
        %p534 = pneg %p136
        %p535 = pneg %p133
        %p536 = pneg %p157
        %p537 = pneg %p154
        %p538 = pneg %p178
        %p539 = pneg %p175
        %p540 = pneg %p199
        %p541 = pneg %p196
        %p542 = pneg %p220
        %p543 = pneg %p217
        %p544 = pneg %p241
        %p545 = pneg %p238
        %p546 = pneg %p262
        %p547 = pneg %p259
        %p548 = pneg %p283
        %p549 = pneg %p280
        %p550 = pneg %p304
        %p551 = pneg %p301
        %p552 = pneg %p325
        %p553 = pneg %p322
        %p554 = pneg %p346
        %p555 = pneg %p343
        %p556 = pneg %p374
        %p557 = pneg %p371
        %s558 = sand.u32 %s361, 1
        %s559 = scalar_lea.sflag [#allocation6], %s558
        %s560 = sand.u32 %s361, 1
        %s561 = smul.addr %s560, 8
        %s562 = scalar_lea.vmem [#allocation10], %s561
        %p563 = pneg %p402
        %p564 = pneg %p399
        %s565 = sand.u32 %s389, 1
        %s566 = scalar_lea.sflag [#allocation12], %s565
        %s567 = sand.u32 %s389, 1
        %s568 = smul.addr %s567, 32
        %s569 = scalar_lea.vmem [#allocation11], %s568
        %p570 = scmp.lt.s32.totalorder %s39, 1
        %s571 = scalar_select %p570, %s39, 1
        %s572 = smul.addr %s571, 2
        %s573 = smul.addr %s572, 8
        %s574 = scalar_lea.vmem %s0, %s573
        %p575 = scmp.lt.s32.totalorder %s39, 1
        %s576 = scalar_select %p575, %s39, 1
        %s577 = scalar_lea.vmem %s1, %s576
        %p578 = scmp.eq.s32.totalorder %s40, 0
        // Predicated region
        $region89: #{tpu_custom_call.1} parent=75 // pred_check
          %p579 = pneg %p578
        $region90: #{tpu_custom_call.1} parent=75 // pred_check_branch
          %581 = sbr.rel (%p579) target = $region92
        $region91: #{tpu_custom_call.1} parent=75 // pred_region
          %v582 = vld [vmem:[%s574] sm:$0xff]
          %v583 = vld [vmem:[%s574 + $0x8] sm:$0xff]
          %v584 = vld [vmem:[%s3] sm:$0xff]
          %v585 = vld [vmem:[%s3 + $0x8] sm:$0xff]
          %v586 = vld [vmem:[%s3 + $0x10] sm:$0xff]
          %v587 = vld [vmem:[%s3 + $0x18] sm:$0xff]
          %vm588 = vcmask 261120
          %v590 = vsel %vm588, %v582, 0
          %v593 = vsel %vm588, %v583, 0
          %595 = vmatprep.subr.mxu0 0.0
          %596 = vmatpush1.msra.mxu0 %v584
          %597 = vmatprep.subr.mxu0 0.0
          %598 = vmatpush1.msra.mxu0 %v585
          %599 = vmatprep.subr.mxu0 0.0
          %600 = vmatpush1.msra.mxu0 %v586
          %601 = vmatprep.subr.mxu0 0.0
          %602 = vmatpush1.msra.mxu0 %v587
          %603 = vmatprep.subr.mxu0 0.0
          %604 = vmatpush1.msra.mxu0 0.0
          %605 = vmatprep.subr.mxu0 0.0
          %606 = vmatpush1.msra.mxu0 0.0
          %607 = vmatprep.subr.mxu0 0.0
          %608 = vmatpush1.msra.mxu0 0.0
          %609 = vmatprep.subr.mxu0 0.0
          %610 = vmatpush1.msra.mxu0 0.0
          %611 = vmatprep.subr.mxu0 0.0
          %612 = vmatpush1.msra.mxu0 0.0
          %613 = vmatprep.subr.mxu0 0.0
          %614 = vmatpush1.msra.mxu0 0.0
          %615 = vmatprep.subr.mxu0 0.0
          %616 = vmatpush1.msra.mxu0 0.0
          %617 = vmatprep.subr.mxu0 0.0
          %618 = vmatpush1.msra.mxu0 0.0
          %619 = vmatprep.subr.mxu0 0.0
          %620 = vmatpush1.msra.mxu0 0.0
          %621 = vmatprep.subr.mxu0 0.0
          %622 = vmatpush1.msra.mxu0 0.0
          %623 = vmatprep.subr.mxu0 0.0
          %624 = vmatpush1.msra.mxu0 0.0
          %625 = vmatprep.subr.mxu0 0.0
          %626 = vmatpush1.msra.mxu0 0.0
          %627 = vmatprep.subr.mxu0 0.0
          %628 = vmatpush1.msra.mxu0 0.0
          %629 = vmatprep.subr.mxu0 0.0
          %630 = vmatpush1.msra.mxu0 0.0
          %631 = vmatprep.subr.mxu0 0.0
          %632 = vmatpush1.msra.mxu0 0.0
          %633 = vmatprep.subr.mxu0 0.0
          %634 = vmatpush1.msra.mxu0 0.0
          %635 = vmatprep.subr.mxu0 0.0
          %636 = vmatpush1.msra.mxu0 0.0
          %637 = vmatprep.subr.mxu0 0.0
          %638 = vmatpush1.msra.mxu0 0.0
          %639 = vmatprep.subr.mxu0 0.0
          %640 = vmatpush1.msra.mxu0 0.0
          %641 = vmatprep.subr.mxu0 0.0
          %642 = vmatpush1.msra.mxu0 0.0
          %643 = vmatprep.subr.mxu0 0.0
          %644 = vmatpush1.msra.mxu0 0.0
          %645 = vmatprep.subr.mxu0 0.0
          %646 = vmatpush1.msra.mxu0 0.0
          %647 = vmatprep.subr.mxu0 0.0
          %648 = vmatpush1.msra.mxu0 0.0
          %649 = vmatprep.subr.mxu0 0.0
          %650 = vmatpush1.msra.mxu0 0.0
          %651 = vmatprep.subr.mxu0 0.0
          %652 = vmatpush1.msra.mxu0 0.0
          %653 = vmatprep.subr.mxu0 0.0
          %654 = vmatpush1.msra.mxu0 0.0
          %655 = vmatprep.subr.mxu0 0.0
          %656 = vmatpush1.msra.mxu0 0.0
          %657 = vmatprep.subr.mxu0 0.0
          %658 = vmatpush1.msra.mxu0 0.0
          %659 = vmatprep.mubr.f32.mxu0 0.0
          %660 = vmatmul.mubr.f32.gmra.mrb[0].mxu0 %v590
          %v661 = vpop.f32.mrb[0].mxu0
          %v662 = vadd.f32 0.0, %v661
          %v663 = vpop.f32.mrb[0].mxu0
          %664 = vmatprep.mubr.f32.mxu0 0.0
          %665 = vmatmul.mubr.f32.gmra.mrb[0].mxu0 %v593
          %v666 = vpop.f32.mrb[0].mxu0
          %v667 = vadd.f32 0.0, %v666
          %v668 = vpop.f32.mrb[0].mxu0
          %669 = vdwg.mxu0
          %670 = vst.msk [vmem:[#allocation2] sm:$0xff] %vm588, %v662
          %671 = vst.msk [vmem:[#allocation2 + $0x8] sm:$0xff] %vm588, %v667
          %v672 = vld [vmem:[#allocation4] sm:$0xff]
          %v673 = vld [vmem:[#allocation4 + $0x8] sm:$0xff]
          %v674 = vld [vmem:[#allocation4 + $0x10] sm:$0xff]
          %v675 = vld [vmem:[#allocation4 + $0x18] sm:$0xff]
          %676 = vmatprep.subr.mxu0 0.0
          %677 = vmatpush1.msra.mxu0 %v672
          %678 = vmatprep.subr.mxu0 0.0
          %679 = vmatpush1.msra.mxu0 %v673
          %680 = vmatprep.subr.mxu0 0.0
          %681 = vmatpush1.msra.mxu0 %v674
          %682 = vmatprep.subr.mxu0 0.0
          %683 = vmatpush1.msra.mxu0 %v675
          %684 = vmatprep.subr.mxu0 0.0
          %685 = vmatpush1.msra.mxu0 0.0
          %686 = vmatprep.subr.mxu0 0.0
          %687 = vmatpush1.msra.mxu0 0.0
          %688 = vmatprep.subr.mxu0 0.0
          %689 = vmatpush1.msra.mxu0 0.0
          %690 = vmatprep.subr.mxu0 0.0
          %691 = vmatpush1.msra.mxu0 0.0
          %692 = vmatprep.subr.mxu0 0.0
          %693 = vmatpush1.msra.mxu0 0.0
          %694 = vmatprep.subr.mxu0 0.0
          %695 = vmatpush1.msra.mxu0 0.0
          %696 = vmatprep.subr.mxu0 0.0
          %697 = vmatpush1.msra.mxu0 0.0
          %698 = vmatprep.subr.mxu0 0.0
          %699 = vmatpush1.msra.mxu0 0.0
          %700 = vmatprep.subr.mxu0 0.0
          %701 = vmatpush1.msra.mxu0 0.0
          %702 = vmatprep.subr.mxu0 0.0
          %703 = vmatpush1.msra.mxu0 0.0
          %704 = vmatprep.subr.mxu0 0.0
          %705 = vmatpush1.msra.mxu0 0.0
          %706 = vmatprep.subr.mxu0 0.0
          %707 = vmatpush1.msra.mxu0 0.0
          %708 = vmatprep.subr.mxu0 0.0
          %709 = vmatpush1.msra.mxu0 0.0
          %710 = vmatprep.subr.mxu0 0.0
          %711 = vmatpush1.msra.mxu0 0.0
          %712 = vmatprep.subr.mxu0 0.0
          %713 = vmatpush1.msra.mxu0 0.0
          %714 = vmatprep.subr.mxu0 0.0
          %715 = vmatpush1.msra.mxu0 0.0
          %716 = vmatprep.subr.mxu0 0.0
          %717 = vmatpush1.msra.mxu0 0.0
          %718 = vmatprep.subr.mxu0 0.0
          %719 = vmatpush1.msra.mxu0 0.0
          %720 = vmatprep.subr.mxu0 0.0
          %721 = vmatpush1.msra.mxu0 0.0
          %722 = vmatprep.subr.mxu0 0.0
          %723 = vmatpush1.msra.mxu0 0.0
          %724 = vmatprep.subr.mxu0 0.0
          %725 = vmatpush1.msra.mxu0 0.0
          %726 = vmatprep.subr.mxu0 0.0
          %727 = vmatpush1.msra.mxu0 0.0
          %728 = vmatprep.subr.mxu0 0.0
          %729 = vmatpush1.msra.mxu0 0.0
          %730 = vmatprep.subr.mxu0 0.0
          %731 = vmatpush1.msra.mxu0 0.0
          %732 = vmatprep.subr.mxu0 0.0
          %733 = vmatpush1.msra.mxu0 0.0
          %734 = vmatprep.subr.mxu0 0.0
          %735 = vmatpush1.msra.mxu0 0.0
          %736 = vmatprep.subr.mxu0 0.0
          %737 = vmatpush1.msra.mxu0 0.0
          %738 = vmatprep.subr.mxu0 0.0
          %739 = vmatpush1.msra.mxu0 0.0
          %740 = vmatprep.mubr.f32.mxu0 0.0
          %741 = vmatmul.mubr.f32.gmra.mrb[0].mxu0 %v590
          %v742 = vpop.f32.mrb[0].mxu0
          %v743 = vadd.f32 0.0, %v742
          %v744 = vpop.f32.mrb[0].mxu0
          %745 = vmatprep.mubr.f32.mxu0 0.0
          %746 = vmatmul.mubr.f32.gmra.mrb[0].mxu0 %v593
          %v747 = vpop.f32.mrb[0].mxu0
          %v748 = vadd.f32 0.0, %v747
          %v749 = vpop.f32.mrb[0].mxu0
          %750 = vdwg.mxu0
          %751 = vst.msk [vmem:[#allocation3] sm:$0xff] %vm588, %v743
          %752 = vst.msk [vmem:[#allocation3 + $0x8] sm:$0xff] %vm588, %v748
        $region92: #{tpu_custom_call.1} parent=75 // pred_fallthru
          _
        %s753 = smul.u32 %s40, 8
        %s754 = scalar_lea.vmem %s574, %s753
        %v755 = vld [vmem:[%s754] sm:$0xff]
        %v756 = vld [vmem:[%s2] sm:$0xff]
        %v757 = vld [vmem:[%s2 + $0x8] sm:$0xff]
        %v758 = vld [vmem:[%s2 + $0x10] sm:$0xff]
        %v759 = vld [vmem:[%s2 + $0x18] sm:$0xff]
        %vm760 = vcmask 261120
        %v762 = vsel %vm760, %v755, 0
        %764 = vmatprep.subr.mxu0 0.0
        %765 = vmatpush1.msra.mxu0 %v756
        %766 = vmatprep.subr.mxu0 0.0
        %767 = vmatpush1.msra.mxu0 %v757
        %768 = vmatprep.subr.mxu0 0.0
        %769 = vmatpush1.msra.mxu0 %v758
        %770 = vmatprep.subr.mxu0 0.0
        %771 = vmatpush1.msra.mxu0 %v759
        %772 = vmatprep.subr.mxu0 0.0
        %773 = vmatpush1.msra.mxu0 0.0
        %774 = vmatprep.subr.mxu0 0.0
        %775 = vmatpush1.msra.mxu0 0.0
        %776 = vmatprep.subr.mxu0 0.0
        %777 = vmatpush1.msra.mxu0 0.0
        %778 = vmatprep.subr.mxu0 0.0
        %779 = vmatpush1.msra.mxu0 0.0
        %780 = vmatprep.subr.mxu0 0.0
        %781 = vmatpush1.msra.mxu0 0.0
        %782 = vmatprep.subr.mxu0 0.0
        %783 = vmatpush1.msra.mxu0 0.0
        %784 = vmatprep.subr.mxu0 0.0
        %785 = vmatpush1.msra.mxu0 0.0
        %786 = vmatprep.subr.mxu0 0.0
        %787 = vmatpush1.msra.mxu0 0.0
        %788 = vmatprep.subr.mxu0 0.0
        %789 = vmatpush1.msra.mxu0 0.0
        %790 = vmatprep.subr.mxu0 0.0
        %791 = vmatpush1.msra.mxu0 0.0
        %792 = vmatprep.subr.mxu0 0.0
        %793 = vmatpush1.msra.mxu0 0.0
        %794 = vmatprep.subr.mxu0 0.0
        %795 = vmatpush1.msra.mxu0 0.0
        %796 = vmatprep.subr.mxu0 0.0
        %797 = vmatpush1.msra.mxu0 0.0
        %798 = vmatprep.subr.mxu0 0.0
        %799 = vmatpush1.msra.mxu0 0.0
        %800 = vmatprep.subr.mxu0 0.0
        %801 = vmatpush1.msra.mxu0 0.0
        %802 = vmatprep.subr.mxu0 0.0
        %803 = vmatpush1.msra.mxu0 0.0
        %804 = vmatprep.subr.mxu0 0.0
        %805 = vmatpush1.msra.mxu0 0.0
        %806 = vmatprep.subr.mxu0 0.0
        %807 = vmatpush1.msra.mxu0 0.0
        %808 = vmatprep.subr.mxu0 0.0
        %809 = vmatpush1.msra.mxu0 0.0
        %810 = vmatprep.subr.mxu0 0.0
        %811 = vmatpush1.msra.mxu0 0.0
        %812 = vmatprep.subr.mxu0 0.0
        %813 = vmatpush1.msra.mxu0 0.0
        %814 = vmatprep.subr.mxu0 0.0
        %815 = vmatpush1.msra.mxu0 0.0
        %816 = vmatprep.subr.mxu0 0.0
        %817 = vmatpush1.msra.mxu0 0.0
        %818 = vmatprep.subr.mxu0 0.0
        %819 = vmatpush1.msra.mxu0 0.0
        %820 = vmatprep.subr.mxu0 0.0
        %821 = vmatpush1.msra.mxu0 0.0
        %822 = vmatprep.subr.mxu0 0.0
        %823 = vmatpush1.msra.mxu0 0.0
        %824 = vmatprep.subr.mxu0 0.0
        %825 = vmatpush1.msra.mxu0 0.0
        %826 = vmatprep.subr.mxu0 0.0
        %827 = vmatpush1.msra.mxu0 0.0
        %828 = vmatprep.mubr.f32.mxu0 0.0
        %829 = vmatmul.mubr.f32.gmra.mrb[0].mxu0 %v762
        %v830 = vpop.f32.mrb[0].mxu0
        %v831 = vadd.f32 0.0, %v830
        %v832 = vpop.f32.mrb[0].mxu0
        %833 = vdwg.mxu0
        %v834 = vmul.f32 %v831, 0.35355338
        %v835 = vld [vmem:[%s577] sm:$0x1]
        %vm836 = vcmp.eq.s32.totalorder %v835, 0
        %v837 = vsel %vm836, -1e+09, 0.0
        %v838 = vld [vmem:[#allocation2] sm:$0xff]
        %v839 = vld [vmem:[#allocation2 + $0x8] sm:$0xff]
        %v840 = vld [vmem:[#allocation3] sm:$0xff]
        %v841 = vld [vmem:[#allocation3 + $0x8] sm:$0xff]
        %v843 = vlaneseq
        %v844 = vshrl.u32 %v843, 7
        %v845 = vsub.s32 0, %v844
        %v846 = vrot.slane %v837, %v845
        %vm848 = vcmask 64512
        %v850 = vsel %vm848, %v834, 0
        %v853 = vsel %vm848, %v838, 0
        %v856 = vsel %vm848, %v839, 0
        %858 = vmatprep.subr.mxu0 0.0
        %859 = vmatpush1.xpose.msra.mxu0 %v853
        %860 = vmatprep.subr.mxu0 0.0
        %861 = vmatpush1.xpose.msra.mxu0 %v856
        %862 = vmatprep.subr.mxu0 0.0
        %863 = vmatpush1.xpose.msra.mxu0 0.0
        %864 = vmatprep.subr.mxu0 0.0
        %865 = vmatpush1.xpose.msra.mxu0 0.0
        %866 = vmatprep.subr.mxu0 0.0
        %867 = vmatpush1.xpose.msra.mxu0 0.0
        %868 = vmatprep.subr.mxu0 0.0
        %869 = vmatpush1.xpose.msra.mxu0 0.0
        %870 = vmatprep.subr.mxu0 0.0
        %871 = vmatpush1.xpose.msra.mxu0 0.0
        %872 = vmatprep.subr.mxu0 0.0
        %873 = vmatpush1.xpose.msra.mxu0 0.0
        %874 = vmatprep.subr.mxu0 0.0
        %875 = vmatpush1.xpose.msra.mxu0 0.0
        %876 = vmatprep.subr.mxu0 0.0
        %877 = vmatpush1.xpose.msra.mxu0 0.0
        %878 = vmatprep.subr.mxu0 0.0
        %879 = vmatpush1.xpose.msra.mxu0 0.0
        %880 = vmatprep.subr.mxu0 0.0
        %881 = vmatpush1.xpose.msra.mxu0 0.0
        %882 = vmatprep.subr.mxu0 0.0
        %883 = vmatpush1.xpose.msra.mxu0 0.0
        %884 = vmatprep.subr.mxu0 0.0
        %885 = vmatpush1.xpose.msra.mxu0 0.0
        %886 = vmatprep.subr.mxu0 0.0
        %887 = vmatpush1.xpose.msra.mxu0 0.0
        %888 = vmatprep.subr.mxu0 0.0
        %889 = vmatpush1.xpose.msra.mxu0 0.0
        %890 = vmatprep.subr.mxu0 0.0
        %891 = vmatpush1.xpose.msra.mxu0 0.0
        %892 = vmatprep.subr.mxu0 0.0
        %893 = vmatpush1.xpose.msra.mxu0 0.0
        %894 = vmatprep.subr.mxu0 0.0
        %895 = vmatpush1.xpose.msra.mxu0 0.0
        %896 = vmatprep.subr.mxu0 0.0
        %897 = vmatpush1.xpose.msra.mxu0 0.0
        %898 = vmatprep.subr.mxu0 0.0
        %899 = vmatpush1.xpose.msra.mxu0 0.0
        %900 = vmatprep.subr.mxu0 0.0
        %901 = vmatpush1.xpose.msra.mxu0 0.0
        %902 = vmatprep.subr.mxu0 0.0
        %903 = vmatpush1.xpose.msra.mxu0 0.0
        %904 = vmatprep.subr.mxu0 0.0
        %905 = vmatpush1.xpose.msra.mxu0 0.0
        %906 = vmatprep.subr.mxu0 0.0
        %907 = vmatpush1.xpose.msra.mxu0 0.0
        %908 = vmatprep.subr.mxu0 0.0
        %909 = vmatpush1.xpose.msra.mxu0 0.0
        %910 = vmatprep.subr.mxu0 0.0
        %911 = vmatpush1.xpose.msra.mxu0 0.0
        %912 = vmatprep.subr.mxu0 0.0
        %913 = vmatpush1.xpose.msra.mxu0 0.0
        %914 = vmatprep.subr.mxu0 0.0
        %915 = vmatpush1.xpose.msra.mxu0 0.0
        %916 = vmatprep.subr.mxu0 0.0
        %917 = vmatpush1.xpose.msra.mxu0 0.0
        %918 = vmatprep.subr.mxu0 0.0
        %919 = vmatpush1.xpose.msra.mxu0 0.0
        %920 = vmatprep.subr.mxu0 0.0
        %921 = vmatpush1.xpose.msra.mxu0 0.0
        %922 = vmatprep.mubr.f32.mxu0 0.0
        %923 = vmatmul.mubr.f32.gmra.mrb[0].mxu0 %v850
        %v924 = vpop.f32.mrb[0].mxu0
        %v925 = vadd.f32 %v846, %v924
        %v926 = vpop.f32.mrb[0].mxu0
        %927 = vdwg.mxu0
        %vm928 = vcmask 130048
        %v929 = vsel %vm928, %v925, -inf
        %930 = vmax.xlane.f32.xlu0 %v929
        %v931 = vpop.xlane.xlu0 %930
        %v932 = vsub.f32 %v925, %v931
        %v933 = vmul.f32 %v932, 1.442695
        %v934 = vpow.pop %v933
        %v935 = vsel %vm928, %v934, 0.0
        %936 = vadd.xlane.f32.xlu0 %v935
        %v937 = vpop.xlane.xlu0 %936
        %v938 = vrcp.pop %v937
        %v939 = vmul.f32 %v934, %v938
        %940 = vst.msk [vmem:[%s569] sm:$0xff] %vm928, %v939
        %v942 = vsel %vm928, %v939, 0
        %944 = vmatprep.subr.mxu0 0.0
        %945 = vmatpush1.msra.mxu0 %v840
        %946 = vmatprep.subr.mxu0 0.0
        %947 = vmatpush1.msra.mxu0 %v841
        %948 = vmatprep.subr.mxu0 0.0
        %949 = vmatpush1.msra.mxu0 0.0
        %950 = vmatprep.subr.mxu0 0.0
        %951 = vmatpush1.msra.mxu0 0.0
        %952 = vmatprep.subr.mxu0 0.0
        %953 = vmatpush1.msra.mxu0 0.0
        %954 = vmatprep.subr.mxu0 0.0
        %955 = vmatpush1.msra.mxu0 0.0
        %956 = vmatprep.subr.mxu0 0.0
        %957 = vmatpush1.msra.mxu0 0.0
        %958 = vmatprep.subr.mxu0 0.0
        %959 = vmatpush1.msra.mxu0 0.0
        %960 = vmatprep.subr.mxu0 0.0
        %961 = vmatpush1.msra.mxu0 0.0
        %962 = vmatprep.subr.mxu0 0.0
        %963 = vmatpush1.msra.mxu0 0.0
        %964 = vmatprep.subr.mxu0 0.0
        %965 = vmatpush1.msra.mxu0 0.0
        %966 = vmatprep.subr.mxu0 0.0
        %967 = vmatpush1.msra.mxu0 0.0
        %968 = vmatprep.subr.mxu0 0.0
        %969 = vmatpush1.msra.mxu0 0.0
        %970 = vmatprep.subr.mxu0 0.0
        %971 = vmatpush1.msra.mxu0 0.0
        %972 = vmatprep.subr.mxu0 0.0
        %973 = vmatpush1.msra.mxu0 0.0
        %974 = vmatprep.subr.mxu0 0.0
        %975 = vmatpush1.msra.mxu0 0.0
        %976 = vmatprep.subr.mxu0 0.0
        %977 = vmatpush1.msra.mxu0 0.0
        %978 = vmatprep.subr.mxu0 0.0
        %979 = vmatpush1.msra.mxu0 0.0
        %980 = vmatprep.subr.mxu0 0.0
        %981 = vmatpush1.msra.mxu0 0.0
        %982 = vmatprep.subr.mxu0 0.0
        %983 = vmatpush1.msra.mxu0 0.0
        %984 = vmatprep.subr.mxu0 0.0
        %985 = vmatpush1.msra.mxu0 0.0
        %986 = vmatprep.subr.mxu0 0.0
        %987 = vmatpush1.msra.mxu0 0.0
        %988 = vmatprep.subr.mxu0 0.0
        %989 = vmatpush1.msra.mxu0 0.0
        %990 = vmatprep.subr.mxu0 0.0
        %991 = vmatpush1.msra.mxu0 0.0
        %992 = vmatprep.subr.mxu0 0.0
        %993 = vmatpush1.msra.mxu0 0.0
        %994 = vmatprep.subr.mxu0 0.0
        %995 = vmatpush1.msra.mxu0 0.0
        %996 = vmatprep.subr.mxu0 0.0
        %997 = vmatpush1.msra.mxu0 0.0
        %998 = vmatprep.subr.mxu0 0.0
        %999 = vmatpush1.msra.mxu0 0.0
        %1000 = vmatprep.subr.mxu0 0.0
        %1001 = vmatpush1.msra.mxu0 0.0
        %1002 = vmatprep.subr.mxu0 0.0
        %1003 = vmatpush1.msra.mxu0 0.0
        %1004 = vmatprep.subr.mxu0 0.0
        %1005 = vmatpush1.msra.mxu0 0.0
        %1006 = vmatprep.subr.mxu0 0.0
        %1007 = vmatpush1.msra.mxu0 0.0
        %1008 = vmatprep.mubr.f32.mxu0 0.0
        %1009 = vmatmul.mubr.f32.gmra.mrb[0].mxu0 %v942
        %v1010 = vpop.f32.mrb[0].mxu0
        %v1011 = vadd.f32 0.0, %v1010
        %v1012 = vpop.f32.mrb[0].mxu0
        %1013 = vdwg.mxu0
        %v1014 = vld [vmem:[#allocation2] sm:$0xff]
        %v1015 = vld [vmem:[#allocation2 + $0x8] sm:$0xff]
        %v1016 = vld [vmem:[#allocation3] sm:$0xff]
        %v1017 = vld [vmem:[#allocation3 + $0x8] sm:$0xff]
        %1018 = vrot.lane.b32.xlu0 %v834, 120
        %v1019 = vpop.permute.xlu0 %1018
        %1022 = vrot.lane.b32.xlu0 %v1014, 120
        %v1023 = vpop.permute.xlu0 %1022
        %1024 = vrot.lane.b32.xlu0 %v1015, 120
        %v1025 = vpop.permute.xlu0 %1024
        %v1026 = vsel %vm848, %v1019, 0
        %v1028 = vsel %vm848, %v1023, 0
        %v1030 = vsel %vm848, %v1025, 0
        %1032 = vmatprep.subr.mxu0 0.0
        %1033 = vmatpush1.xpose.msra.mxu0 %v1028
        %1034 = vmatprep.subr.mxu0 0.0
        %1035 = vmatpush1.xpose.msra.mxu0 %v1030
        %1036 = vmatprep.subr.mxu0 0.0
        %1037 = vmatpush1.xpose.msra.mxu0 0.0
        %1038 = vmatprep.subr.mxu0 0.0
        %1039 = vmatpush1.xpose.msra.mxu0 0.0
        %1040 = vmatprep.subr.mxu0 0.0
        %1041 = vmatpush1.xpose.msra.mxu0 0.0
        %1042 = vmatprep.subr.mxu0 0.0
        %1043 = vmatpush1.xpose.msra.mxu0 0.0
        %1044 = vmatprep.subr.mxu0 0.0
        %1045 = vmatpush1.xpose.msra.mxu0 0.0
        %1046 = vmatprep.subr.mxu0 0.0
        %1047 = vmatpush1.xpose.msra.mxu0 0.0
        %1048 = vmatprep.subr.mxu0 0.0
        %1049 = vmatpush1.xpose.msra.mxu0 0.0
        %1050 = vmatprep.subr.mxu0 0.0
        %1051 = vmatpush1.xpose.msra.mxu0 0.0
        %1052 = vmatprep.subr.mxu0 0.0
        %1053 = vmatpush1.xpose.msra.mxu0 0.0
        %1054 = vmatprep.subr.mxu0 0.0
        %1055 = vmatpush1.xpose.msra.mxu0 0.0
        %1056 = vmatprep.subr.mxu0 0.0
        %1057 = vmatpush1.xpose.msra.mxu0 0.0
        %1058 = vmatprep.subr.mxu0 0.0
        %1059 = vmatpush1.xpose.msra.mxu0 0.0
        %1060 = vmatprep.subr.mxu0 0.0
        %1061 = vmatpush1.xpose.msra.mxu0 0.0
        %1062 = vmatprep.subr.mxu0 0.0
        %1063 = vmatpush1.xpose.msra.mxu0 0.0
        %1064 = vmatprep.subr.mxu0 0.0
        %1065 = vmatpush1.xpose.msra.mxu0 0.0
        %1066 = vmatprep.subr.mxu0 0.0
        %1067 = vmatpush1.xpose.msra.mxu0 0.0
        %1068 = vmatprep.subr.mxu0 0.0
        %1069 = vmatpush1.xpose.msra.mxu0 0.0
        %1070 = vmatprep.subr.mxu0 0.0
        %1071 = vmatpush1.xpose.msra.mxu0 0.0
        %1072 = vmatprep.subr.mxu0 0.0
        %1073 = vmatpush1.xpose.msra.mxu0 0.0
        %1074 = vmatprep.subr.mxu0 0.0
        %1075 = vmatpush1.xpose.msra.mxu0 0.0
        %1076 = vmatprep.subr.mxu0 0.0
        %1077 = vmatpush1.xpose.msra.mxu0 0.0
        %1078 = vmatprep.subr.mxu0 0.0
        %1079 = vmatpush1.xpose.msra.mxu0 0.0
        %1080 = vmatprep.subr.mxu0 0.0
        %1081 = vmatpush1.xpose.msra.mxu0 0.0
        %1082 = vmatprep.subr.mxu0 0.0
        %1083 = vmatpush1.xpose.msra.mxu0 0.0
        %1084 = vmatprep.subr.mxu0 0.0
        %1085 = vmatpush1.xpose.msra.mxu0 0.0
        %1086 = vmatprep.subr.mxu0 0.0
        %1087 = vmatpush1.xpose.msra.mxu0 0.0
        %1088 = vmatprep.subr.mxu0 0.0
        %1089 = vmatpush1.xpose.msra.mxu0 0.0
        %1090 = vmatprep.subr.mxu0 0.0
        %1091 = vmatpush1.xpose.msra.mxu0 0.0
        %1092 = vmatprep.subr.mxu0 0.0
        %1093 = vmatpush1.xpose.msra.mxu0 0.0
        %1094 = vmatprep.subr.mxu0 0.0
        %1095 = vmatpush1.xpose.msra.mxu0 0.0
        %1096 = vmatprep.mubr.f32.mxu0 0.0
        %1097 = vmatmul.mubr.f32.gmra.mrb[0].mxu0 %v1026
        %v1098 = vpop.f32.mrb[0].mxu0
        %v1099 = vadd.f32 %v846, %v1098
        %v1100 = vpop.f32.mrb[0].mxu0
        %1101 = vdwg.mxu0
        %v1102 = vsel %vm928, %v1099, -inf
        %1103 = vmax.xlane.f32.xlu0 %v1102
        %v1104 = vpop.xlane.xlu0 %1103
        %v1105 = vsub.f32 %v1099, %v1104
        %v1106 = vmul.f32 %v1105, 1.442695
        %v1107 = vpow.pop %v1106
        %v1108 = vsel %vm928, %v1107, 0.0
        %1109 = vadd.xlane.f32.xlu0 %v1108
        %v1110 = vpop.xlane.xlu0 %1109
        %v1111 = vrcp.pop %v1110
        %v1112 = vmul.f32 %v1107, %v1111
        %s1113 = scalar_lea.vmem %s569, 8 [#allocation11]
        %1114 = vst.msk [vmem:[%s1113] sm:$0xff] %vm928, %v1112
        %1117 = vrot.lane.b32.xlu0 %v1016, 120
        %v1118 = vpop.permute.xlu0 %1117
        %1119 = vrot.lane.b32.xlu0 %v1017, 120
        %v1120 = vpop.permute.xlu0 %1119
        %v1124 = vsel %vm928, %v1112, 0
        %1126 = vmatprep.subr.mxu0 0.0
        %1127 = vmatpush1.msra.mxu0 %v1118
        %1128 = vmatprep.subr.mxu0 0.0
        %1129 = vmatpush1.msra.mxu0 %v1120
        %1130 = vmatprep.subr.mxu0 0.0
        %1131 = vmatpush1.msra.mxu0 0.0
        %1132 = vmatprep.subr.mxu0 0.0
        %1133 = vmatpush1.msra.mxu0 0.0
        %1134 = vmatprep.subr.mxu0 0.0
        %1135 = vmatpush1.msra.mxu0 0.0
        %1136 = vmatprep.subr.mxu0 0.0
        %1137 = vmatpush1.msra.mxu0 0.0
        %1138 = vmatprep.subr.mxu0 0.0
        %1139 = vmatpush1.msra.mxu0 0.0
        %1140 = vmatprep.subr.mxu0 0.0
        %1141 = vmatpush1.msra.mxu0 0.0
        %1142 = vmatprep.subr.mxu0 0.0
        %1143 = vmatpush1.msra.mxu0 0.0
        %1144 = vmatprep.subr.mxu0 0.0
        %1145 = vmatpush1.msra.mxu0 0.0
        %1146 = vmatprep.subr.mxu0 0.0
        %1147 = vmatpush1.msra.mxu0 0.0
        %1148 = vmatprep.subr.mxu0 0.0
        %1149 = vmatpush1.msra.mxu0 0.0
        %1150 = vmatprep.subr.mxu0 0.0
        %1151 = vmatpush1.msra.mxu0 0.0
        %1152 = vmatprep.subr.mxu0 0.0
        %1153 = vmatpush1.msra.mxu0 0.0
        %1154 = vmatprep.subr.mxu0 0.0
        %1155 = vmatpush1.msra.mxu0 0.0
        %1156 = vmatprep.subr.mxu0 0.0
        %1157 = vmatpush1.msra.mxu0 0.0
        %1158 = vmatprep.subr.mxu0 0.0
        %1159 = vmatpush1.msra.mxu0 0.0
        %1160 = vmatprep.subr.mxu0 0.0
        %1161 = vmatpush1.msra.mxu0 0.0
        %1162 = vmatprep.subr.mxu0 0.0
        %1163 = vmatpush1.msra.mxu0 0.0
        %1164 = vmatprep.subr.mxu0 0.0
        %1165 = vmatpush1.msra.mxu0 0.0
        %1166 = vmatprep.subr.mxu0 0.0
        %1167 = vmatpush1.msra.mxu0 0.0
        %1168 = vmatprep.subr.mxu0 0.0
        %1169 = vmatpush1.msra.mxu0 0.0
        %1170 = vmatprep.subr.mxu0 0.0
        %1171 = vmatpush1.msra.mxu0 0.0
        %1172 = vmatprep.subr.mxu0 0.0
        %1173 = vmatpush1.msra.mxu0 0.0
        %1174 = vmatprep.subr.mxu0 0.0
        %1175 = vmatpush1.msra.mxu0 0.0
        %1176 = vmatprep.subr.mxu0 0.0
        %1177 = vmatpush1.msra.mxu0 0.0
        %1178 = vmatprep.subr.mxu0 0.0
        %1179 = vmatpush1.msra.mxu0 0.0
        %1180 = vmatprep.subr.mxu0 0.0
        %1181 = vmatpush1.msra.mxu0 0.0
        %1182 = vmatprep.subr.mxu0 0.0
        %1183 = vmatpush1.msra.mxu0 0.0
        %1184 = vmatprep.subr.mxu0 0.0
        %1185 = vmatpush1.msra.mxu0 0.0
        %1186 = vmatprep.subr.mxu0 0.0
        %1187 = vmatpush1.msra.mxu0 0.0
        %1188 = vmatprep.subr.mxu0 0.0
        %1189 = vmatpush1.msra.mxu0 0.0
        %1190 = vmatprep.mubr.f32.mxu0 0.0
        %1191 = vmatmul.mubr.f32.gmra.mrb[0].mxu0 %v1124
        %v1192 = vpop.f32.mrb[0].mxu0
        %v1193 = vadd.f32 0.0, %v1192
        %v1194 = vpop.f32.mrb[0].mxu0
        %1195 = vdwg.mxu0
        %v1196 = vld [vmem:[#allocation2] sm:$0xff]
        %v1197 = vld [vmem:[#allocation2 + $0x8] sm:$0xff]
        %v1198 = vld [vmem:[#allocation3] sm:$0xff]
        %v1199 = vld [vmem:[#allocation3 + $0x8] sm:$0xff]
        %1200 = vrot.lane.b32.xlu0 %v834, 112
        %v1201 = vpop.permute.xlu0 %1200
        %1204 = vrot.lane.b32.xlu0 %v1196, 112
        %v1205 = vpop.permute.xlu0 %1204
        %1206 = vrot.lane.b32.xlu0 %v1197, 112
        %v1207 = vpop.permute.xlu0 %1206
        %v1208 = vsel %vm848, %v1201, 0
        %v1210 = vsel %vm848, %v1205, 0
        %v1212 = vsel %vm848, %v1207, 0
        %1214 = vmatprep.subr.mxu0 0.0
        %1215 = vmatpush1.xpose.msra.mxu0 %v1210
        %1216 = vmatprep.subr.mxu0 0.0
        %1217 = vmatpush1.xpose.msra.mxu0 %v1212
        %1218 = vmatprep.subr.mxu0 0.0
        %1219 = vmatpush1.xpose.msra.mxu0 0.0
        %1220 = vmatprep.subr.mxu0 0.0
        %1221 = vmatpush1.xpose.msra.mxu0 0.0
        %1222 = vmatprep.subr.mxu0 0.0
        %1223 = vmatpush1.xpose.msra.mxu0 0.0
        %1224 = vmatprep.subr.mxu0 0.0
        %1225 = vmatpush1.xpose.msra.mxu0 0.0
        %1226 = vmatprep.subr.mxu0 0.0
        %1227 = vmatpush1.xpose.msra.mxu0 0.0
        %1228 = vmatprep.subr.mxu0 0.0
        %1229 = vmatpush1.xpose.msra.mxu0 0.0
        %1230 = vmatprep.subr.mxu0 0.0
        %1231 = vmatpush1.xpose.msra.mxu0 0.0
        %1232 = vmatprep.subr.mxu0 0.0
        %1233 = vmatpush1.xpose.msra.mxu0 0.0
        %1234 = vmatprep.subr.mxu0 0.0
        %1235 = vmatpush1.xpose.msra.mxu0 0.0
        %1236 = vmatprep.subr.mxu0 0.0
        %1237 = vmatpush1.xpose.msra.mxu0 0.0
        %1238 = vmatprep.subr.mxu0 0.0
        %1239 = vmatpush1.xpose.msra.mxu0 0.0
        %1240 = vmatprep.subr.mxu0 0.0
        %1241 = vmatpush1.xpose.msra.mxu0 0.0
        %1242 = vmatprep.subr.mxu0 0.0
        %1243 = vmatpush1.xpose.msra.mxu0 0.0
        %1244 = vmatprep.subr.mxu0 0.0
        %1245 = vmatpush1.xpose.msra.mxu0 0.0
        %1246 = vmatprep.subr.mxu0 0.0
        %1247 = vmatpush1.xpose.msra.mxu0 0.0
        %1248 = vmatprep.subr.mxu0 0.0
        %1249 = vmatpush1.xpose.msra.mxu0 0.0
        %1250 = vmatprep.subr.mxu0 0.0
        %1251 = vmatpush1.xpose.msra.mxu0 0.0
        %1252 = vmatprep.subr.mxu0 0.0
        %1253 = vmatpush1.xpose.msra.mxu0 0.0
        %1254 = vmatprep.subr.mxu0 0.0
        %1255 = vmatpush1.xpose.msra.mxu0 0.0
        %1256 = vmatprep.subr.mxu0 0.0
        %1257 = vmatpush1.xpose.msra.mxu0 0.0
        %1258 = vmatprep.subr.mxu0 0.0
        %1259 = vmatpush1.xpose.msra.mxu0 0.0
        %1260 = vmatprep.subr.mxu0 0.0
        %1261 = vmatpush1.xpose.msra.mxu0 0.0
        %1262 = vmatprep.subr.mxu0 0.0
        %1263 = vmatpush1.xpose.msra.mxu0 0.0
        %1264 = vmatprep.subr.mxu0 0.0
        %1265 = vmatpush1.xpose.msra.mxu0 0.0
        %1266 = vmatprep.subr.mxu0 0.0
        %1267 = vmatpush1.xpose.msra.mxu0 0.0
        %1268 = vmatprep.subr.mxu0 0.0
        %1269 = vmatpush1.xpose.msra.mxu0 0.0
        %1270 = vmatprep.subr.mxu0 0.0
        %1271 = vmatpush1.xpose.msra.mxu0 0.0
        %1272 = vmatprep.subr.mxu0 0.0
        %1273 = vmatpush1.xpose.msra.mxu0 0.0
        %1274 = vmatprep.subr.mxu0 0.0
        %1275 = vmatpush1.xpose.msra.mxu0 0.0
        %1276 = vmatprep.subr.mxu0 0.0
        %1277 = vmatpush1.xpose.msra.mxu0 0.0
        %1278 = vmatprep.mubr.f32.mxu0 0.0
        %1279 = vmatmul.mubr.f32.gmra.mrb[0].mxu0 %v1208
        %v1280 = vpop.f32.mrb[0].mxu0
        %v1281 = vadd.f32 %v846, %v1280
        %v1282 = vpop.f32.mrb[0].mxu0
        %1283 = vdwg.mxu0
        %v1284 = vsel %vm928, %v1281, -inf
        %1285 = vmax.xlane.f32.xlu0 %v1284
        %v1286 = vpop.xlane.xlu0 %1285
        %v1287 = vsub.f32 %v1281, %v1286
        %v1288 = vmul.f32 %v1287, 1.442695
        %v1289 = vpow.pop %v1288
        %v1290 = vsel %vm928, %v1289, 0.0
        %1291 = vadd.xlane.f32.xlu0 %v1290
        %v1292 = vpop.xlane.xlu0 %1291
        %v1293 = vrcp.pop %v1292
        %v1294 = vmul.f32 %v1289, %v1293
        %s1295 = scalar_lea.vmem %s569, 16 [#allocation11]
        %1296 = vst.msk [vmem:[%s1295] sm:$0xff] %vm928, %v1294
        %1299 = vrot.lane.b32.xlu0 %v1198, 112
        %v1300 = vpop.permute.xlu0 %1299
        %1301 = vrot.lane.b32.xlu0 %v1199, 112
        %v1302 = vpop.permute.xlu0 %1301
        %v1306 = vsel %vm928, %v1294, 0
        %1308 = vmatprep.subr.mxu0 0.0
        %1309 = vmatpush1.msra.mxu0 %v1300
        %1310 = vmatprep.subr.mxu0 0.0
        %1311 = vmatpush1.msra.mxu0 %v1302
        %1312 = vmatprep.subr.mxu0 0.0
        %1313 = vmatpush1.msra.mxu0 0.0
        %1314 = vmatprep.subr.mxu0 0.0
        %1315 = vmatpush1.msra.mxu0 0.0
        %1316 = vmatprep.subr.mxu0 0.0
        %1317 = vmatpush1.msra.mxu0 0.0
        %1318 = vmatprep.subr.mxu0 0.0
        %1319 = vmatpush1.msra.mxu0 0.0
        %1320 = vmatprep.subr.mxu0 0.0
        %1321 = vmatpush1.msra.mxu0 0.0
        %1322 = vmatprep.subr.mxu0 0.0
        %1323 = vmatpush1.msra.mxu0 0.0
        %1324 = vmatprep.subr.mxu0 0.0
        %1325 = vmatpush1.msra.mxu0 0.0
        %1326 = vmatprep.subr.mxu0 0.0
        %1327 = vmatpush1.msra.mxu0 0.0
        %1328 = vmatprep.subr.mxu0 0.0
        %1329 = vmatpush1.msra.mxu0 0.0
        %1330 = vmatprep.subr.mxu0 0.0
        %1331 = vmatpush1.msra.mxu0 0.0
        %1332 = vmatprep.subr.mxu0 0.0
        %1333 = vmatpush1.msra.mxu0 0.0
        %1334 = vmatprep.subr.mxu0 0.0
        %1335 = vmatpush1.msra.mxu0 0.0
        %1336 = vmatprep.subr.mxu0 0.0
        %1337 = vmatpush1.msra.mxu0 0.0
        %1338 = vmatprep.subr.mxu0 0.0
        %1339 = vmatpush1.msra.mxu0 0.0
        %1340 = vmatprep.subr.mxu0 0.0
        %1341 = vmatpush1.msra.mxu0 0.0
        %1342 = vmatprep.subr.mxu0 0.0
        %1343 = vmatpush1.msra.mxu0 0.0
        %1344 = vmatprep.subr.mxu0 0.0
        %1345 = vmatpush1.msra.mxu0 0.0
        %1346 = vmatprep.subr.mxu0 0.0
        %1347 = vmatpush1.msra.mxu0 0.0
        %1348 = vmatprep.subr.mxu0 0.0
        %1349 = vmatpush1.msra.mxu0 0.0
        %1350 = vmatprep.subr.mxu0 0.0
        %1351 = vmatpush1.msra.mxu0 0.0
        %1352 = vmatprep.subr.mxu0 0.0
        %1353 = vmatpush1.msra.mxu0 0.0
        %1354 = vmatprep.subr.mxu0 0.0
        %1355 = vmatpush1.msra.mxu0 0.0
        %1356 = vmatprep.subr.mxu0 0.0
        %1357 = vmatpush1.msra.mxu0 0.0
        %1358 = vmatprep.subr.mxu0 0.0
        %1359 = vmatpush1.msra.mxu0 0.0
        %1360 = vmatprep.subr.mxu0 0.0
        %1361 = vmatpush1.msra.mxu0 0.0
        %1362 = vmatprep.subr.mxu0 0.0
        %1363 = vmatpush1.msra.mxu0 0.0
        %1364 = vmatprep.subr.mxu0 0.0
        %1365 = vmatpush1.msra.mxu0 0.0
        %1366 = vmatprep.subr.mxu0 0.0
        %1367 = vmatpush1.msra.mxu0 0.0
        %1368 = vmatprep.subr.mxu0 0.0
        %1369 = vmatpush1.msra.mxu0 0.0
        %1370 = vmatprep.subr.mxu0 0.0
        %1371 = vmatpush1.msra.mxu0 0.0
        %1372 = vmatprep.mubr.f32.mxu0 0.0
        %1373 = vmatmul.mubr.f32.gmra.mrb[0].mxu0 %v1306
        %v1374 = vpop.f32.mrb[0].mxu0
        %v1375 = vadd.f32 0.0, %v1374
        %v1376 = vpop.f32.mrb[0].mxu0
        %1377 = vdwg.mxu0
        %v1378 = vld [vmem:[#allocation2] sm:$0xff]
        %v1379 = vld [vmem:[#allocation2 + $0x8] sm:$0xff]
        %v1380 = vld [vmem:[#allocation3] sm:$0xff]
        %v1381 = vld [vmem:[#allocation3 + $0x8] sm:$0xff]
        %1382 = vrot.lane.b32.xlu0 %v834, 104
        %v1383 = vpop.permute.xlu0 %1382
        %1386 = vrot.lane.b32.xlu0 %v1378, 104
        %v1387 = vpop.permute.xlu0 %1386
        %1388 = vrot.lane.b32.xlu0 %v1379, 104
        %v1389 = vpop.permute.xlu0 %1388
        %v1390 = vsel %vm848, %v1383, 0
        %v1392 = vsel %vm848, %v1387, 0
        %v1394 = vsel %vm848, %v1389, 0
        %1396 = vmatprep.subr.mxu0 0.0
        %1397 = vmatpush1.xpose.msra.mxu0 %v1392
        %1398 = vmatprep.subr.mxu0 0.0
        %1399 = vmatpush1.xpose.msra.mxu0 %v1394
        %1400 = vmatprep.subr.mxu0 0.0
        %1401 = vmatpush1.xpose.msra.mxu0 0.0
        %1402 = vmatprep.subr.mxu0 0.0
        %1403 = vmatpush1.xpose.msra.mxu0 0.0
        %1404 = vmatprep.subr.mxu0 0.0
        %1405 = vmatpush1.xpose.msra.mxu0 0.0
        %1406 = vmatprep.subr.mxu0 0.0
        %1407 = vmatpush1.xpose.msra.mxu0 0.0
        %1408 = vmatprep.subr.mxu0 0.0
        %1409 = vmatpush1.xpose.msra.mxu0 0.0
        %1410 = vmatprep.subr.mxu0 0.0
        %1411 = vmatpush1.xpose.msra.mxu0 0.0
        %1412 = vmatprep.subr.mxu0 0.0
        %1413 = vmatpush1.xpose.msra.mxu0 0.0
        %1414 = vmatprep.subr.mxu0 0.0
        %1415 = vmatpush1.xpose.msra.mxu0 0.0
        %1416 = vmatprep.subr.mxu0 0.0
        %1417 = vmatpush1.xpose.msra.mxu0 0.0
        %1418 = vmatprep.subr.mxu0 0.0
        %1419 = vmatpush1.xpose.msra.mxu0 0.0
        %1420 = vmatprep.subr.mxu0 0.0
        %1421 = vmatpush1.xpose.msra.mxu0 0.0
        %1422 = vmatprep.subr.mxu0 0.0
        %1423 = vmatpush1.xpose.msra.mxu0 0.0
        %1424 = vmatprep.subr.mxu0 0.0
        %1425 = vmatpush1.xpose.msra.mxu0 0.0
        %1426 = vmatprep.subr.mxu0 0.0
        %1427 = vmatpush1.xpose.msra.mxu0 0.0
        %1428 = vmatprep.subr.mxu0 0.0
        %1429 = vmatpush1.xpose.msra.mxu0 0.0
        %1430 = vmatprep.subr.mxu0 0.0
        %1431 = vmatpush1.xpose.msra.mxu0 0.0
        %1432 = vmatprep.subr.mxu0 0.0
        %1433 = vmatpush1.xpose.msra.mxu0 0.0
        %1434 = vmatprep.subr.mxu0 0.0
        %1435 = vmatpush1.xpose.msra.mxu0 0.0
        %1436 = vmatprep.subr.mxu0 0.0
        %1437 = vmatpush1.xpose.msra.mxu0 0.0
        %1438 = vmatprep.subr.mxu0 0.0
        %1439 = vmatpush1.xpose.msra.mxu0 0.0
        %1440 = vmatprep.subr.mxu0 0.0
        %1441 = vmatpush1.xpose.msra.mxu0 0.0
        %1442 = vmatprep.subr.mxu0 0.0
        %1443 = vmatpush1.xpose.msra.mxu0 0.0
        %1444 = vmatprep.subr.mxu0 0.0
        %1445 = vmatpush1.xpose.msra.mxu0 0.0
        %1446 = vmatprep.subr.mxu0 0.0
        %1447 = vmatpush1.xpose.msra.mxu0 0.0
        %1448 = vmatprep.subr.mxu0 0.0
        %1449 = vmatpush1.xpose.msra.mxu0 0.0
        %1450 = vmatprep.subr.mxu0 0.0
        %1451 = vmatpush1.xpose.msra.mxu0 0.0
        %1452 = vmatprep.subr.mxu0 0.0
        %1453 = vmatpush1.xpose.msra.mxu0 0.0
        %1454 = vmatprep.subr.mxu0 0.0
        %1455 = vmatpush1.xpose.msra.mxu0 0.0
        %1456 = vmatprep.subr.mxu0 0.0
        %1457 = vmatpush1.xpose.msra.mxu0 0.0
        %1458 = vmatprep.subr.mxu0 0.0
        %1459 = vmatpush1.xpose.msra.mxu0 0.0
        %1460 = vmatprep.mubr.f32.mxu0 0.0
        %1461 = vmatmul.mubr.f32.gmra.mrb[0].mxu0 %v1390
        %v1462 = vpop.f32.mrb[0].mxu0
        %v1463 = vadd.f32 %v846, %v1462
        %v1464 = vpop.f32.mrb[0].mxu0
        %1465 = vdwg.mxu0
        %v1466 = vsel %vm928, %v1463, -inf
        %1467 = vmax.xlane.f32.xlu0 %v1466
        %v1468 = vpop.xlane.xlu0 %1467
        %v1469 = vsub.f32 %v1463, %v1468
        %v1470 = vmul.f32 %v1469, 1.442695
        %v1471 = vpow.pop %v1470
        %v1472 = vsel %vm928, %v1471, 0.0
        %1473 = vadd.xlane.f32.xlu0 %v1472
        %v1474 = vpop.xlane.xlu0 %1473
        %v1475 = vrcp.pop %v1474
        %v1476 = vmul.f32 %v1471, %v1475
        %s1477 = scalar_lea.vmem %s569, 24 [#allocation11]
        %1478 = vst.msk [vmem:[%s1477] sm:$0xff] %vm928, %v1476
        %1481 = vrot.lane.b32.xlu0 %v1380, 104
        %v1482 = vpop.permute.xlu0 %1481
        %1483 = vrot.lane.b32.xlu0 %v1381, 104
        %v1484 = vpop.permute.xlu0 %1483
        %v1488 = vsel %vm928, %v1476, 0
        %1490 = vmatprep.subr.mxu0 0.0
        %1491 = vmatpush1.msra.mxu0 %v1482
        %1492 = vmatprep.subr.mxu0 0.0
        %1493 = vmatpush1.msra.mxu0 %v1484
        %1494 = vmatprep.subr.mxu0 0.0
        %1495 = vmatpush1.msra.mxu0 0.0
        %1496 = vmatprep.subr.mxu0 0.0
        %1497 = vmatpush1.msra.mxu0 0.0
        %1498 = vmatprep.subr.mxu0 0.0
        %1499 = vmatpush1.msra.mxu0 0.0
        %1500 = vmatprep.subr.mxu0 0.0
        %1501 = vmatpush1.msra.mxu0 0.0
        %1502 = vmatprep.subr.mxu0 0.0
        %1503 = vmatpush1.msra.mxu0 0.0
        %1504 = vmatprep.subr.mxu0 0.0
        %1505 = vmatpush1.msra.mxu0 0.0
        %1506 = vmatprep.subr.mxu0 0.0
        %1507 = vmatpush1.msra.mxu0 0.0
        %1508 = vmatprep.subr.mxu0 0.0
        %1509 = vmatpush1.msra.mxu0 0.0
        %1510 = vmatprep.subr.mxu0 0.0
        %1511 = vmatpush1.msra.mxu0 0.0
        %1512 = vmatprep.subr.mxu0 0.0
        %1513 = vmatpush1.msra.mxu0 0.0
        %1514 = vmatprep.subr.mxu0 0.0
        %1515 = vmatpush1.msra.mxu0 0.0
        %1516 = vmatprep.subr.mxu0 0.0
        %1517 = vmatpush1.msra.mxu0 0.0
        %1518 = vmatprep.subr.mxu0 0.0
        %1519 = vmatpush1.msra.mxu0 0.0
        %1520 = vmatprep.subr.mxu0 0.0
        %1521 = vmatpush1.msra.mxu0 0.0
        %1522 = vmatprep.subr.mxu0 0.0
        %1523 = vmatpush1.msra.mxu0 0.0
        %1524 = vmatprep.subr.mxu0 0.0
        %1525 = vmatpush1.msra.mxu0 0.0
        %1526 = vmatprep.subr.mxu0 0.0
        %1527 = vmatpush1.msra.mxu0 0.0
        %1528 = vmatprep.subr.mxu0 0.0
        %1529 = vmatpush1.msra.mxu0 0.0
        %1530 = vmatprep.subr.mxu0 0.0
        %1531 = vmatpush1.msra.mxu0 0.0
        %1532 = vmatprep.subr.mxu0 0.0
        %1533 = vmatpush1.msra.mxu0 0.0
        %1534 = vmatprep.subr.mxu0 0.0
        %1535 = vmatpush1.msra.mxu0 0.0
        %1536 = vmatprep.subr.mxu0 0.0
        %1537 = vmatpush1.msra.mxu0 0.0
        %1538 = vmatprep.subr.mxu0 0.0
        %1539 = vmatpush1.msra.mxu0 0.0
        %1540 = vmatprep.subr.mxu0 0.0
        %1541 = vmatpush1.msra.mxu0 0.0
        %1542 = vmatprep.subr.mxu0 0.0
        %1543 = vmatpush1.msra.mxu0 0.0
        %1544 = vmatprep.subr.mxu0 0.0
        %1545 = vmatpush1.msra.mxu0 0.0
        %1546 = vmatprep.subr.mxu0 0.0
        %1547 = vmatpush1.msra.mxu0 0.0
        %1548 = vmatprep.subr.mxu0 0.0
        %1549 = vmatpush1.msra.mxu0 0.0
        %1550 = vmatprep.subr.mxu0 0.0
        %1551 = vmatpush1.msra.mxu0 0.0
        %1552 = vmatprep.subr.mxu0 0.0
        %1553 = vmatpush1.msra.mxu0 0.0
        %1554 = vmatprep.mubr.f32.mxu0 0.0
        %1555 = vmatmul.mubr.f32.gmra.mrb[0].mxu0 %v1488
        %v1556 = vpop.f32.mrb[0].mxu0
        %v1557 = vadd.f32 0.0, %v1556
        %v1558 = vpop.f32.mrb[0].mxu0
        %1559 = vdwg.mxu0
        %1561 = vrot.lane.b32.xlu0 %v1193, 8
        %v1562 = vpop.permute.xlu0 %1561
        %1565 = vrot.lane.b32.xlu0 %v1375, 16
        %v1566 = vpop.permute.xlu0 %1565
        %1569 = vrot.lane.b32.xlu0 %v1557, 24
        %v1570 = vpop.permute.xlu0 %1569
        %v1572 = vsel %vm848, %v1011, %v1562
        %v1573 = vsel %vm928, %v1572, %v1566
        %vm1574 = vcmask 195584
        %v1575 = vsel %vm1574, %v1573, %v1570
        %v1576 = vld [vmem:[#allocation7] sm:$0xff]
        %v1577 = vld [vmem:[#allocation7 + $0x8] sm:$0xff]
        %v1578 = vld [vmem:[#allocation7 + $0x10] sm:$0xff]
        %v1579 = vld [vmem:[#allocation7 + $0x18] sm:$0xff]
        %v1581 = vsel %vm760, %v1575, 0
        %1583 = vmatprep.subr.mxu0 0.0
        %1584 = vmatpush1.msra.mxu0 %v1576
        %1585 = vmatprep.subr.mxu0 0.0
        %1586 = vmatpush1.msra.mxu0 %v1577
        %1587 = vmatprep.subr.mxu0 0.0
        %1588 = vmatpush1.msra.mxu0 %v1578
        %1589 = vmatprep.subr.mxu0 0.0
        %1590 = vmatpush1.msra.mxu0 %v1579
        %1591 = vmatprep.subr.mxu0 0.0
        %1592 = vmatpush1.msra.mxu0 0.0
        %1593 = vmatprep.subr.mxu0 0.0
        %1594 = vmatpush1.msra.mxu0 0.0
        %1595 = vmatprep.subr.mxu0 0.0
        %1596 = vmatpush1.msra.mxu0 0.0
        %1597 = vmatprep.subr.mxu0 0.0
        %1598 = vmatpush1.msra.mxu0 0.0
        %1599 = vmatprep.subr.mxu0 0.0
        %1600 = vmatpush1.msra.mxu0 0.0
        %1601 = vmatprep.subr.mxu0 0.0
        %1602 = vmatpush1.msra.mxu0 0.0
        %1603 = vmatprep.subr.mxu0 0.0
        %1604 = vmatpush1.msra.mxu0 0.0
        %1605 = vmatprep.subr.mxu0 0.0
        %1606 = vmatpush1.msra.mxu0 0.0
        %1607 = vmatprep.subr.mxu0 0.0
        %1608 = vmatpush1.msra.mxu0 0.0
        %1609 = vmatprep.subr.mxu0 0.0
        %1610 = vmatpush1.msra.mxu0 0.0
        %1611 = vmatprep.subr.mxu0 0.0
        %1612 = vmatpush1.msra.mxu0 0.0
        %1613 = vmatprep.subr.mxu0 0.0
        %1614 = vmatpush1.msra.mxu0 0.0
        %1615 = vmatprep.subr.mxu0 0.0
        %1616 = vmatpush1.msra.mxu0 0.0
        %1617 = vmatprep.subr.mxu0 0.0
        %1618 = vmatpush1.msra.mxu0 0.0
        %1619 = vmatprep.subr.mxu0 0.0
        %1620 = vmatpush1.msra.mxu0 0.0
        %1621 = vmatprep.subr.mxu0 0.0
        %1622 = vmatpush1.msra.mxu0 0.0
        %1623 = vmatprep.subr.mxu0 0.0
        %1624 = vmatpush1.msra.mxu0 0.0
        %1625 = vmatprep.subr.mxu0 0.0
        %1626 = vmatpush1.msra.mxu0 0.0
        %1627 = vmatprep.subr.mxu0 0.0
        %1628 = vmatpush1.msra.mxu0 0.0
        %1629 = vmatprep.subr.mxu0 0.0
        %1630 = vmatpush1.msra.mxu0 0.0
        %1631 = vmatprep.subr.mxu0 0.0
        %1632 = vmatpush1.msra.mxu0 0.0
        %1633 = vmatprep.subr.mxu0 0.0
        %1634 = vmatpush1.msra.mxu0 0.0
        %1635 = vmatprep.subr.mxu0 0.0
        %1636 = vmatpush1.msra.mxu0 0.0
        %1637 = vmatprep.subr.mxu0 0.0
        %1638 = vmatpush1.msra.mxu0 0.0
        %1639 = vmatprep.subr.mxu0 0.0
        %1640 = vmatpush1.msra.mxu0 0.0
        %1641 = vmatprep.subr.mxu0 0.0
        %1642 = vmatpush1.msra.mxu0 0.0
        %1643 = vmatprep.subr.mxu0 0.0
        %1644 = vmatpush1.msra.mxu0 0.0
        %1645 = vmatprep.subr.mxu0 0.0
        %1646 = vmatpush1.msra.mxu0 0.0
        %1647 = vmatprep.mubr.f32.mxu0 0.0
        %1648 = vmatmul.mubr.f32.gmra.mrb[0].mxu0 %v1581
        %v1649 = vpop.f32.mrb[0].mxu0
        %v1650 = vadd.f32 %v755, %v1649
        %v1651 = vpop.f32.mrb[0].mxu0
        %1652 = vdwg.mxu0
        %v1653 = vld [vmem:[%s6] sm:$0x1]
        %v1654 = vld [vmem:[%s7] sm:$0x1]
        %v1655 = vsel %vm760, %v1650, 0.0
        %1656 = vadd.xlane.f32.xlu0 %v1655
        %v1657 = vpop.xlane.xlu0 %1656
        %v1658 = vrcp.pop 32.0
        %v1659 = vmul.f32 %v1657, %v1658
        %v1660 = vsub.f32 %v1650, %v1659
        %v1661 = vmul.f32 %v1660, %v1660
        %v1662 = vsel %vm760, %v1661, 0.0
        %1663 = vadd.xlane.f32.xlu0 %v1662
        %v1664 = vpop.xlane.xlu0 %1663
        %v1665 = vmul.f32 %v1664, %v1658
        %v1666 = vadd.f32 %v1665, 1e-06
        %v1667 = vrsqrt.pop %v1666
        %v1668 = vmul.f32 %v1660, %v1667
        %v1670 = vlaneseq
        %v1671 = vshrl.u32 %v1670, 7
        %v1672 = vsub.s32 0, %v1671
        %v1673 = vrot.slane %v1653, %v1672
        %v1675 = vmul.f32 %v1668, %v1673
        %v1677 = vlaneseq
        %v1678 = vshrl.u32 %v1677, 7
        %v1679 = vsub.s32 0, %v1678
        %v1680 = vrot.slane %v1654, %v1679
        %v1682 = vadd.f32 %v1675, %v1680
        %v1683 = vld [vmem:[#allocation9] sm:$0xff]
        %v1684 = vld [vmem:[#allocation9 + $0x8] sm:$0xff]
        %v1685 = vld [vmem:[#allocation9 + $0x10] sm:$0xff]
        %v1686 = vld [vmem:[#allocation9 + $0x18] sm:$0xff]
        %v1687 = vld [vmem:[%s9] sm:$0x1]
        %v1689 = vlaneseq
        %v1690 = vshrl.u32 %v1689, 7
        %v1691 = vsub.s32 0, %v1690
        %v1692 = vrot.slane %v1687, %v1691
        %v1695 = vsel %vm760, %v1682, 0
        %1697 = vmatprep.subr.mxu0 0.0
        %1698 = vmatpush1.msra.mxu0 %v1683
        %1699 = vmatprep.subr.mxu0 0.0
        %1700 = vmatpush1.msra.mxu0 %v1684
        %1701 = vmatprep.subr.mxu0 0.0
        %1702 = vmatpush1.msra.mxu0 %v1685
        %1703 = vmatprep.subr.mxu0 0.0
        %1704 = vmatpush1.msra.mxu0 %v1686
        %1705 = vmatprep.subr.mxu0 0.0
        %1706 = vmatpush1.msra.mxu0 0.0
        %1707 = vmatprep.subr.mxu0 0.0
        %1708 = vmatpush1.msra.mxu0 0.0
        %1709 = vmatprep.subr.mxu0 0.0
        %1710 = vmatpush1.msra.mxu0 0.0
        %1711 = vmatprep.subr.mxu0 0.0
        %1712 = vmatpush1.msra.mxu0 0.0
        %1713 = vmatprep.subr.mxu0 0.0
        %1714 = vmatpush1.msra.mxu0 0.0
        %1715 = vmatprep.subr.mxu0 0.0
        %1716 = vmatpush1.msra.mxu0 0.0
        %1717 = vmatprep.subr.mxu0 0.0
        %1718 = vmatpush1.msra.mxu0 0.0
        %1719 = vmatprep.subr.mxu0 0.0
        %1720 = vmatpush1.msra.mxu0 0.0
        %1721 = vmatprep.subr.mxu0 0.0
        %1722 = vmatpush1.msra.mxu0 0.0
        %1723 = vmatprep.subr.mxu0 0.0
        %1724 = vmatpush1.msra.mxu0 0.0
        %1725 = vmatprep.subr.mxu0 0.0
        %1726 = vmatpush1.msra.mxu0 0.0
        %1727 = vmatprep.subr.mxu0 0.0
        %1728 = vmatpush1.msra.mxu0 0.0
        %1729 = vmatprep.subr.mxu0 0.0
        %1730 = vmatpush1.msra.mxu0 0.0
        %1731 = vmatprep.subr.mxu0 0.0
        %1732 = vmatpush1.msra.mxu0 0.0
        %1733 = vmatprep.subr.mxu0 0.0
        %1734 = vmatpush1.msra.mxu0 0.0
        %1735 = vmatprep.subr.mxu0 0.0
        %1736 = vmatpush1.msra.mxu0 0.0
        %1737 = vmatprep.subr.mxu0 0.0
        %1738 = vmatpush1.msra.mxu0 0.0
        %1739 = vmatprep.subr.mxu0 0.0
        %1740 = vmatpush1.msra.mxu0 0.0
        %1741 = vmatprep.subr.mxu0 0.0
        %1742 = vmatpush1.msra.mxu0 0.0
        %1743 = vmatprep.subr.mxu0 0.0
        %1744 = vmatpush1.msra.mxu0 0.0
        %1745 = vmatprep.subr.mxu0 0.0
        %1746 = vmatpush1.msra.mxu0 0.0
        %1747 = vmatprep.subr.mxu0 0.0
        %1748 = vmatpush1.msra.mxu0 0.0
        %1749 = vmatprep.subr.mxu0 0.0
        %1750 = vmatpush1.msra.mxu0 0.0
        %1751 = vmatprep.subr.mxu0 0.0
        %1752 = vmatpush1.msra.mxu0 0.0
        %1753 = vmatprep.subr.mxu0 0.0
        %1754 = vmatpush1.msra.mxu0 0.0
        %1755 = vmatprep.subr.mxu0 0.0
        %1756 = vmatpush1.msra.mxu0 0.0
        %1757 = vmatprep.subr.mxu0 0.0
        %1758 = vmatpush1.msra.mxu0 0.0
        %1759 = vmatprep.subr.mxu0 0.0
        %1760 = vmatpush1.msra.mxu0 0.0
        %1761 = vmatprep.mubr.f32.mxu0 0.0
        %1762 = vmatmul.mubr.f32.gmra.mrb[0].mxu0 %v1695
        %v1763 = vpop.f32.mrb[0].mxu0
        %v1764 = vadd.f32 %v1692, %v1763
        %v1765 = vpop.f32.mrb[0].mxu0
        %1766 = vdwg.mxu0
        %v1767 = vmax.f32 %v1764, 0.0
        %v1768 = vld [vmem:[%s10] sm:$0xff]
        %v1769 = vld [vmem:[%s10 + $0x8] sm:$0xff]
        %v1770 = vld [vmem:[%s10 + $0x10] sm:$0xff]
        %v1771 = vld [vmem:[%s10 + $0x18] sm:$0xff]
        %v1772 = vld [vmem:[%s10 + $0x20] sm:$0xff]
        %v1773 = vld [vmem:[%s10 + $0x28] sm:$0xff]
        %v1774 = vld [vmem:[%s10 + $0x30] sm:$0xff]
        %v1775 = vld [vmem:[%s10 + $0x38] sm:$0xff]
        %v1776 = vld [vmem:[%s11] sm:$0x1]
        %v1778 = vlaneseq
        %v1779 = vshrl.u32 %v1778, 7
        %v1780 = vsub.s32 0, %v1779
        %v1781 = vrot.slane %v1776, %v1780
        %vm1783 = vcmask 523264
        %v1785 = vsel %vm1783, %v1767, 0
        %1787 = vmatprep.subr.mxu0 0.0
        %1788 = vmatpush1.msra.mxu0 %v1768
        %1789 = vmatprep.subr.mxu0 0.0
        %1790 = vmatpush1.msra.mxu0 %v1769
        %1791 = vmatprep.subr.mxu0 0.0
        %1792 = vmatpush1.msra.mxu0 %v1770
        %1793 = vmatprep.subr.mxu0 0.0
        %1794 = vmatpush1.msra.mxu0 %v1771
        %1795 = vmatprep.subr.mxu0 0.0
        %1796 = vmatpush1.msra.mxu0 %v1772
        %1797 = vmatprep.subr.mxu0 0.0
        %1798 = vmatpush1.msra.mxu0 %v1773
        %1799 = vmatprep.subr.mxu0 0.0
        %1800 = vmatpush1.msra.mxu0 %v1774
        %1801 = vmatprep.subr.mxu0 0.0
        %1802 = vmatpush1.msra.mxu0 %v1775
        %1803 = vmatprep.subr.mxu0 0.0
        %1804 = vmatpush1.msra.mxu0 0.0
        %1805 = vmatprep.subr.mxu0 0.0
        %1806 = vmatpush1.msra.mxu0 0.0
        %1807 = vmatprep.subr.mxu0 0.0
        %1808 = vmatpush1.msra.mxu0 0.0
        %1809 = vmatprep.subr.mxu0 0.0
        %1810 = vmatpush1.msra.mxu0 0.0
        %1811 = vmatprep.subr.mxu0 0.0
        %1812 = vmatpush1.msra.mxu0 0.0
        %1813 = vmatprep.subr.mxu0 0.0
        %1814 = vmatpush1.msra.mxu0 0.0
        %1815 = vmatprep.subr.mxu0 0.0
        %1816 = vmatpush1.msra.mxu0 0.0
        %1817 = vmatprep.subr.mxu0 0.0
        %1818 = vmatpush1.msra.mxu0 0.0
        %1819 = vmatprep.subr.mxu0 0.0
        %1820 = vmatpush1.msra.mxu0 0.0
        %1821 = vmatprep.subr.mxu0 0.0
        %1822 = vmatpush1.msra.mxu0 0.0
        %1823 = vmatprep.subr.mxu0 0.0
        %1824 = vmatpush1.msra.mxu0 0.0
        %1825 = vmatprep.subr.mxu0 0.0
        %1826 = vmatpush1.msra.mxu0 0.0
        %1827 = vmatprep.subr.mxu0 0.0
        %1828 = vmatpush1.msra.mxu0 0.0
        %1829 = vmatprep.subr.mxu0 0.0
        %1830 = vmatpush1.msra.mxu0 0.0
        %1831 = vmatprep.subr.mxu0 0.0
        %1832 = vmatpush1.msra.mxu0 0.0
        %1833 = vmatprep.subr.mxu0 0.0
        %1834 = vmatpush1.msra.mxu0 0.0
        %1835 = vmatprep.subr.mxu0 0.0
        %1836 = vmatpush1.msra.mxu0 0.0
        %1837 = vmatprep.subr.mxu0 0.0
        %1838 = vmatpush1.msra.mxu0 0.0
        %1839 = vmatprep.subr.mxu0 0.0
        %1840 = vmatpush1.msra.mxu0 0.0
        %1841 = vmatprep.subr.mxu0 0.0
        %1842 = vmatpush1.msra.mxu0 0.0
        %1843 = vmatprep.subr.mxu0 0.0
        %1844 = vmatpush1.msra.mxu0 0.0
        %1845 = vmatprep.subr.mxu0 0.0
        %1846 = vmatpush1.msra.mxu0 0.0
        %1847 = vmatprep.subr.mxu0 0.0
        %1848 = vmatpush1.msra.mxu0 0.0
        %1849 = vmatprep.subr.mxu0 0.0
        %1850 = vmatpush1.msra.mxu0 0.0
        %1851 = vmatprep.mubr.f32.mxu0 0.0
        %1852 = vmatmul.mubr.f32.gmra.mrb[0].mxu0 %v1785
        %v1853 = vpop.f32.mrb[0].mxu0
        %v1854 = vadd.f32 %v1781, %v1853
        %v1855 = vpop.f32.mrb[0].mxu0
        %1856 = vdwg.mxu0
        %v1857 = vadd.f32 %v1854, %v1682
        %v1858 = vld [vmem:[%s12] sm:$0x1]
        %v1859 = vld [vmem:[%s13] sm:$0x1]
        %v1860 = vsel %vm760, %v1857, 0.0
        %1861 = vadd.xlane.f32.xlu0 %v1860
        %v1862 = vpop.xlane.xlu0 %1861
        %v1863 = vmul.f32 %v1862, %v1658
        %v1864 = vsub.f32 %v1857, %v1863
        %v1865 = vmul.f32 %v1864, %v1864
        %v1866 = vsel %vm760, %v1865, 0.0
        %1867 = vadd.xlane.f32.xlu0 %v1866
        %v1868 = vpop.xlane.xlu0 %1867
        %v1869 = vmul.f32 %v1868, %v1658
        %v1870 = vadd.f32 %v1869, 1e-06
        %v1871 = vrsqrt.pop %v1870
        %v1872 = vmul.f32 %v1864, %v1871
        %v1874 = vlaneseq
        %v1875 = vshrl.u32 %v1874, 7
        %v1876 = vsub.s32 0, %v1875
        %v1877 = vrot.slane %v1858, %v1876
        %v1879 = vmul.f32 %v1872, %v1877
        %v1881 = vlaneseq
        %v1882 = vshrl.u32 %v1881, 7
        %v1883 = vsub.s32 0, %v1882
        %v1884 = vrot.slane %v1859, %v1883
        %v1886 = vadd.f32 %v1879, %v1884
        %1887 = vst.msk [vmem:[%s562] sm:$0xff] %vm760, %v1886
        %s1888 = sand.u32 %s361, 1
        %s1889 = scalar_lea.sflag [#allocation6], %s1888
        %s1890 = sand.u32 %s361, 1
        %s1891 = smul.addr %s1890, 8
        %s1892 = scalar_lea.vmem [#allocation10], %s1891
        %s1893 = sand.u32 %s389, 1
        %s1894 = scalar_lea.sflag [#allocation12], %s1893
        %s1895 = sand.u32 %s389, 1
        %s1896 = smul.addr %s1895, 32
        %s1897 = scalar_lea.vmem [#allocation11], %s1896
        // Predicated region
        $region93: #{tpu_custom_call.1} parent=75 // pred_check
          %p1898 = pneg %p371
        $region94: #{tpu_custom_call.1} parent=75 // pred_check_branch
          %1900 = sbr.rel (%p1898) target = $region96
        $region95: #{tpu_custom_call.1} parent=75 // pred_region
          %s1902 = ssub.s32 128, 128
          %1903 = vsyncadd %s1889, %s1902
          %s1904 = smul.addr %s39, 2
          %s1905 = sadd.s32 %s40, %s1904
          %s1906 = smul.addr %s1905, 128
          %s1907 = scalar_lea.hbm %s14, %s1906
          %s1909 = sshll.u32 %s1892, 4
          %s1910 = int_to_ptr.vmem [resolvable:$true] %s1909
          %1912 = dma.vmem_to_hbm [thread:$0]  %s1910, 128, %s1907, %s1889
        $region96: #{tpu_custom_call.1} parent=75 // pred_fallthru
          _
        // Predicated region
        $region97: #{tpu_custom_call.1} parent=75 // pred_check
          %p1913 = pneg %p399
        $region98: #{tpu_custom_call.1} parent=75 // pred_check_branch
          %1915 = sbr.rel (%p1913) target = $region100
        $region99: #{tpu_custom_call.1} parent=75 // pred_region
          %s1917 = ssub.s32 512, 512
          %1918 = vsyncadd %s1894, %s1917
          %s1919 = smul.addr %s39, 8
          %s1920 = sadd.s32 %s40, %s1919
          %s1921 = smul.addr %s1920, 128
          %s1922 = scalar_lea.hbm %s15, %s1921
          %s1923 = sshll.u32 %s1897, 4
          %s1924 = int_to_ptr.vmem [resolvable:$true] %s1923
          %1929 = dma.vmem_to_hbm [thread:$0]  %s1924, 512, %s1922, %s1894, 128, 256, 8
        $region100: #{tpu_custom_call.1} parent=75 // pred_fallthru
          _
      $region76: #{tpu_custom_call.1} parent=5 // pred_fallthru
        _
      %p1930 = scmp.le.s32.totalorder 2, %s30
      // Predicated region
      $region101: #{tpu_custom_call.1} parent=5 // pred_check
        %p1931 = pneg %p1930
      $region102: #{tpu_custom_call.1} parent=5 // pred_check_branch
        %1933 = sbr.rel (%p1931) target = $region104
      $region103: #{tpu_custom_call.1} parent=5 // pred_region
        %s1934 = ssub.s32 %s30, 2
        // Predicated region
        $region105: #{tpu_custom_call.1} parent=103 // pred_check
          %p1935 = pneg %p377
        $region106: #{tpu_custom_call.1} parent=103 // pred_check_branch
          %1937 = sbr.rel (%p1935) target = $region108
        $region107: #{tpu_custom_call.1} parent=103 // pred_region
          %s1938 = sand.u32 %s362, 1
          %s1939 = scalar_lea.sflag [#allocation6], %s1938
          %s1940 = sand.u32 %s362, 1
          %s1941 = smul.addr %s1940, 8
          %s1942 = scalar_lea.vmem [#allocation10], %s1941
          %1943 = dma.done %s1939, 128
        $region108: #{tpu_custom_call.1} parent=103 // pred_fallthru
          _
        // Predicated region
        $region109: #{tpu_custom_call.1} parent=103 // pred_check
          %p1944 = pneg %p405
        $region110: #{tpu_custom_call.1} parent=103 // pred_check_branch
          %1946 = sbr.rel (%p1944) target = $region112
        $region111: #{tpu_custom_call.1} parent=103 // pred_region
          %s1947 = sand.u32 %s390, 1
          %s1948 = scalar_lea.sflag [#allocation12], %s1947
          %s1949 = sand.u32 %s390, 1
          %s1950 = smul.addr %s1949, 32
          %s1951 = scalar_lea.vmem [#allocation11], %s1950
          %1952 = dma.done %s1948, 512
        $region112: #{tpu_custom_call.1} parent=103 // pred_fallthru
          _
      $region104: #{tpu_custom_call.1} parent=5 // pred_fallthru
        _
    $region6: #{tpu_custom_call.1} parent=1 // loop_footer
      %s34 = sadd.s32 1, %s30
    $region7: #{tpu_custom_call.1} parent=1 // loop_footer_branch
      %29 = sbr.rel target = $region3
    $region8: #{tpu_custom_call.1} parent=1 // loop_exit
      _
    %1953 = vsyncpa [#allocation5], 1
    %s1954 = scalar_lea.sflag [#allocation5], 1
    %1955 = vsyncpa %s1954, 1
    %1956 = vsyncpa [#allocation8], 1
    %1957 = vsyncpa [#allocation6], 1
    %s1958 = scalar_lea.sflag [#allocation6], 1
    %1959 = vsyncpa %s1958, 1
    %1960 = vsyncpa [#allocation12], 1
    %s1961 = scalar_lea.sflag [#allocation12], 1
    %1962 = vsyncpa %s1961, 1

// kernel: tpu_custom_call.1
$region0: #{tpu_custom_call.1}
  #allocation0 [shape = 'u32[]', space=smem, size = 0x4, offset = 0x4, fixed_abs, tag = 'smem constant byte address 0x4 - core index']
  #allocation1 [shape = 'u32[144,128]{1,0:T(1,128)}', space=vmem, size = 0x12000, scoped, tag = 'internal scratch']
  #allocation2 [shape = 'f32[16,32]{1,0:T(8,128)}', space=vmem, size = 0x2000, scoped, tag = 'scratch operand']
  #allocation3 [shape = 'f32[16,32]{1,0:T(8,128)}', space=vmem, size = 0x2000, scoped, tag = 'scratch operand']
  %s0 = inlined_call_operand.vmem [shape: f32[2,16,32], index: 0, kind: input, shape index: {}]
  %s1 = inlined_call_operand.vmem [shape: s32[2,1,16], index: 1, kind: input, shape index: {}]
  %s2 = inlined_call_operand.vmem [shape: f32[32,32], index: 2, kind: input, shape index: {}]
  %s3 = inlined_call_operand.vmem [shape: f32[32,32], index: 3, kind: input, shape index: {}]
  %s4 = inlined_call_operand.hbm [shape: f32[32,32], index: 4, kind: input, shape index: {}]
  %s5 = inlined_call_operand.hbm [shape: f32[32,32], index: 5, kind: input, shape index: {}]
  %s6 = inlined_call_operand.vmem [shape: f32[1,32], index: 6, kind: input, shape index: {}]
  %s7 = inlined_call_operand.vmem [shape: f32[1,32], index: 7, kind: input, shape index: {}]
  %s8 = inlined_call_operand.hbm [shape: f32[32,64], index: 8, kind: input, shape index: {}]
  %s9 = inlined_call_operand.vmem [shape: f32[1,64], index: 9, kind: input, shape index: {}]
  %s10 = inlined_call_operand.vmem [shape: f32[64,32], index: 10, kind: input, shape index: {}]
  %s11 = inlined_call_operand.vmem [shape: f32[1,32], index: 11, kind: input, shape index: {}]
  %s12 = inlined_call_operand.vmem [shape: f32[1,32], index: 12, kind: input, shape index: {}]
  %s13 = inlined_call_operand.vmem [shape: f32[1,32], index: 13, kind: input, shape index: {}]
  %s14 = inlined_call_operand.hbm [shape: f32[2,16,32], index: 14, kind: output, shape index: {0}]
  %s15 = inlined_call_operand.hbm [shape: f32[2,4,16,16], index: 15, kind: output, shape index: {1}]
  %16 = xla_tuple %s14, %s15
  %s17 = sld [smem:[#allocation0]]
  $region113: #{tpu_custom_call.1} parent=0
    _
  %s19 = ssub.s32 1, %s17
  %s20 = scalar_select 0, %s19, %s17
  $region1: #{tpu_custom_call.1} parent=0
    #allocation4 [shape = 'u8[16384]{0}', space=vmem, size = 0x4000, scoped, tag = 'input window, operand 4, single buffered']
    #allocation5 [shape = 's32[2]{0}', space=sflag, size = 0x8, scoped, tag = 'scoped memory for tpu_custom_call.1']
    #allocation6 [shape = 's32[2]{0}', space=sflag, size = 0x8, scoped, tag = 'scoped memory for tpu_custom_call.1']
    #allocation7 [shape = 'u8[16384]{0}', space=vmem, size = 0x4000, scoped, tag = 'input window, operand 5, single buffered']
    #allocation8 [shape = 's32[1]{0}', space=sflag, size = 0x4, scoped, tag = 'scoped memory for tpu_custom_call.1']
    #allocation9 [shape = 'u8[16384]{0}', space=vmem, size = 0x4000, scoped, tag = 'input window, operand 8, single buffered']
    #allocation10 [shape = 'u8[8192]{0}', space=vmem, size = 0x2000, scoped, tag = 'output window, operand 0']
    #allocation11 [shape = 'u8[32768]{0}', space=vmem, size = 0x8000, scoped, tag = 'output window, operand 1']
    #allocation12 [shape = 's32[2]{0}', space=sflag, size = 0x8, scoped, tag = 'scoped memory for tpu_custom_call.1']
    %21 = vsyncpa [#allocation5], 0
    %22 = vsyncpa [#allocation8], 0
    %23 = vsyncpa [#allocation6], 0
    %s24 = scalar_lea.sflag [#allocation6], 1
    %25 = vsyncpa %s24, 0
    %26 = vsyncpa [#allocation12], 0
    %s27 = scalar_lea.sflag [#allocation12], 1
    %28 = vsyncpa %s27, 0
    loop: start=0, step=1, limit=6
    $region2: #{tpu_custom_call.1} parent=1 // loop_pre_header
      _
    $region3: #{tpu_custom_call.1} parent=1 // loop_header
      %s30 = sphi 0, %s34
      %p31 = scmp.ge.s32.totalorder %s30, 6
      %s37 = sphi 0, %s49
      %s38 = sphi 0, %s45
      %s39 = sphi 0, %s37
      %s40 = sphi 0, %s38
      %s41 = sphi 0, %s39
      %s42 = sphi 0, %s40
      %s52 = sphi 0, %s54
      %s55 = sphi 0, %s52
      %s56 = sphi 0, %s55
      %s72 = sphi 0, %s56
      %s78 = sphi 0, %s80
      %s81 = sphi 0, %s78
      %s82 = sphi 0, %s81
      %s98 = sphi 0, %s82
      %s102 = sphi 0, %s102
      %s104 = sphi 0, %s102
      %s105 = sphi 0, %s104
      %s119 = sphi 0, %s105
      %s123 = sphi 0, %s123
      %s125 = sphi 0, %s123
      %s126 = sphi 0, %s125
      %s140 = sphi 0, %s126
      %s144 = sphi 0, %s144
      %s146 = sphi 0, %s144
      %s147 = sphi 0, %s146
      %s161 = sphi 0, %s147
      %s165 = sphi 0, %s165
      %s167 = sphi 0, %s165
      %s168 = sphi 0, %s167
      %s182 = sphi 0, %s168
      %s186 = sphi 0, %s186
      %s188 = sphi 0, %s186
      %s189 = sphi 0, %s188
      %s203 = sphi 0, %s189
      %s207 = sphi 0, %s207
      %s209 = sphi 0, %s207
      %s210 = sphi 0, %s209
      %s224 = sphi 0, %s210
      %s228 = sphi 0, %s228
      %s230 = sphi 0, %s228
      %s231 = sphi 0, %s230
      %s245 = sphi 0, %s231
      %s249 = sphi 0, %s249
      %s251 = sphi 0, %s249
      %s252 = sphi 0, %s251
      %s266 = sphi 0, %s252
      %s270 = sphi 0, %s270
      %s272 = sphi 0, %s270
      %s273 = sphi 0, %s272
      %s287 = sphi 0, %s273
      %s291 = sphi 0, %s291
      %s293 = sphi 0, %s291
      %s294 = sphi 0, %s293
      %s308 = sphi 0, %s294
      %s312 = sphi 0, %s312
      %s314 = sphi 0, %s312
      %s315 = sphi 0, %s314
      %s329 = sphi 0, %s315
      %s333 = sphi 0, %s333
      %s335 = sphi 0, %s333
      %s336 = sphi 0, %s335
      %s350 = sphi 0, %s336
      %s358 = sphi 0, %s360
      %s361 = sphi 0, %s358
      %s362 = sphi 0, %s361
      %s378 = sphi 0, %s362
      %s386 = sphi 0, %s388
      %s389 = sphi 0, %s386
      %s390 = sphi 0, %s389
      %s406 = sphi 0, %s390
    $region4: #{tpu_custom_call.1} parent=1 // loop_header_branch
      %33 = sbr.rel (%p31) target = $region8
    $region5: #{tpu_custom_call.1} parent=1 // loop_body
      %s35 = ssub.s32 %s30, 1
      %s36 = ssub.s32 %s30, 2
      %s43 = sadd.s32 1, %s38
      %p44 = scmp.ge.s32.totalorder %s43, 2
      %s45 = scalar_select %p44, 0, %s43
      %s46 = sadd.s32 1, %s37
      %s47 = scalar_select %p44, %s46, %s37
      %p48 = scmp.ge.s32.totalorder %s47, 2
      %s49 = scalar_select %p48, 0, %s47
      %s50 = ssub.s32 %s37, %s49
      %p51 = scmp.eq.s32.totalorder %s50, 0
      %s53 = sadd.s32 %s52, 1
      %s54 = scalar_select %p51, %s52, %s53
      %p57 = pneg %p51
      %p58 = scmp.eq.s32.totalorder %s30, 3
      %p59 = por %p57, %p58
      %p60 = scmp.ne.s32.totalorder %s52, %s55
      %p61 = scmp.eq.s32.totalorder %s30, 0
      %p62 = por %p60, %p61
      %p63 = scmp.ne.s32.totalorder %s52, %s55
      %p64 = scmp.eq.s32.totalorder %s35, 3
      %p65 = por %p63, %p64
      %p66 = scmp.ne.s32.totalorder %s55, %s56
      %p67 = scmp.eq.s32.totalorder %s35, 0
      %p68 = por %p66, %p67
      %p69 = scmp.ne.s32.totalorder %s55, %s56
      %p70 = scmp.eq.s32.totalorder %s36, 3
      %p71 = por %p69, %p70
      %p73 = scmp.ne.s32.totalorder %s56, %s72
      %p74 = scmp.eq.s32.totalorder %s36, 0
      %p75 = por %p73, %p74
      %s76 = ssub.s32 %s37, %s49
      %p77 = scmp.eq.s32.totalorder %s76, 0
      %s79 = sadd.s32 %s78, 1
      %s80 = scalar_select %p77, %s78, %s79
      %p83 = pneg %p77
      %p84 = scmp.eq.s32.totalorder %s30, 3
      %p85 = por %p83, %p84
      %p86 = scmp.ne.s32.totalorder %s78, %s81
      %p87 = scmp.eq.s32.totalorder %s30, 0
      %p88 = por %p86, %p87
      %p89 = scmp.ne.s32.totalorder %s78, %s81
      %p90 = scmp.eq.s32.totalorder %s35, 3
      %p91 = por %p89, %p90
      %p92 = scmp.ne.s32.totalorder %s81, %s82
      %p93 = scmp.eq.s32.totalorder %s35, 0
      %p94 = por %p92, %p93
      %p95 = scmp.ne.s32.totalorder %s81, %s82
      %p96 = scmp.eq.s32.totalorder %s36, 3
      %p97 = por %p95, %p96
      %p99 = scmp.ne.s32.totalorder %s82, %s98
      %p100 = scmp.eq.s32.totalorder %s36, 0
      %p101 = por %p99, %p100
      %s103 = sadd.s32 %s102, 1
      %p106 = scmp.eq.s32.totalorder %s30, 3
      %p107 = scmp.ne.s32.totalorder %s102, %s104
      %p108 = scmp.eq.s32.totalorder %s30, 0
      %p109 = por %p107, %p108
      %p110 = scmp.ne.s32.totalorder %s102, %s104
      %p111 = scmp.eq.s32.totalorder %s35, 3
      %p112 = por %p110, %p111
      %p113 = scmp.ne.s32.totalorder %s104, %s105
      %p114 = scmp.eq.s32.totalorder %s35, 0
      %p115 = por %p113, %p114
      %p116 = scmp.ne.s32.totalorder %s104, %s105
      %p117 = scmp.eq.s32.totalorder %s36, 3
      %p118 = por %p116, %p117
      %p120 = scmp.ne.s32.totalorder %s105, %s119
      %p121 = scmp.eq.s32.totalorder %s36, 0
      %p122 = por %p120, %p121
      %s124 = sadd.s32 %s123, 1
      %p127 = scmp.eq.s32.totalorder %s30, 3
      %p128 = scmp.ne.s32.totalorder %s123, %s125
      %p129 = scmp.eq.s32.totalorder %s30, 0
      %p130 = por %p128, %p129
      %p131 = scmp.ne.s32.totalorder %s123, %s125
      %p132 = scmp.eq.s32.totalorder %s35, 3
      %p133 = por %p131, %p132
      %p134 = scmp.ne.s32.totalorder %s125, %s126
      %p135 = scmp.eq.s32.totalorder %s35, 0
      %p136 = por %p134, %p135
      %p137 = scmp.ne.s32.totalorder %s125, %s126
      %p138 = scmp.eq.s32.totalorder %s36, 3
      %p139 = por %p137, %p138
      %p141 = scmp.ne.s32.totalorder %s126, %s140
      %p142 = scmp.eq.s32.totalorder %s36, 0
      %p143 = por %p141, %p142
      %s145 = sadd.s32 %s144, 1
      %p148 = scmp.eq.s32.totalorder %s30, 3
      %p149 = scmp.ne.s32.totalorder %s144, %s146
      %p150 = scmp.eq.s32.totalorder %s30, 0
      %p151 = por %p149, %p150
      %p152 = scmp.ne.s32.totalorder %s144, %s146
      %p153 = scmp.eq.s32.totalorder %s35, 3
      %p154 = por %p152, %p153
      %p155 = scmp.ne.s32.totalorder %s146, %s147
      %p156 = scmp.eq.s32.totalorder %s35, 0
      %p157 = por %p155, %p156
      %p158 = scmp.ne.s32.totalorder %s146, %s147
      %p159 = scmp.eq.s32.totalorder %s36, 3
      %p160 = por %p158, %p159
      %p162 = scmp.ne.s32.totalorder %s147, %s161
      %p163 = scmp.eq.s32.totalorder %s36, 0
      %p164 = por %p162, %p163
      %s166 = sadd.s32 %s165, 1
      %p169 = scmp.eq.s32.totalorder %s30, 3
      %p170 = scmp.ne.s32.totalorder %s165, %s167
      %p171 = scmp.eq.s32.totalorder %s30, 0
      %p172 = por %p170, %p171
      %p173 = scmp.ne.s32.totalorder %s165, %s167
      %p174 = scmp.eq.s32.totalorder %s35, 3
      %p175 = por %p173, %p174
      %p176 = scmp.ne.s32.totalorder %s167, %s168
      %p177 = scmp.eq.s32.totalorder %s35, 0
      %p178 = por %p176, %p177
      %p179 = scmp.ne.s32.totalorder %s167, %s168
      %p180 = scmp.eq.s32.totalorder %s36, 3
      %p181 = por %p179, %p180
      %p183 = scmp.ne.s32.totalorder %s168, %s182
      %p184 = scmp.eq.s32.totalorder %s36, 0
      %p185 = por %p183, %p184
      %s187 = sadd.s32 %s186, 1
      %p190 = scmp.eq.s32.totalorder %s30, 3
      %p191 = scmp.ne.s32.totalorder %s186, %s188
      %p192 = scmp.eq.s32.totalorder %s30, 0
      %p193 = por %p191, %p192
      %p194 = scmp.ne.s32.totalorder %s186, %s188
      %p195 = scmp.eq.s32.totalorder %s35, 3
      %p196 = por %p194, %p195
      %p197 = scmp.ne.s32.totalorder %s188, %s189
      %p198 = scmp.eq.s32.totalorder %s35, 0
      %p199 = por %p197, %p198
      %p200 = scmp.ne.s32.totalorder %s188, %s189
      %p201 = scmp.eq.s32.totalorder %s36, 3
      %p202 = por %p200, %p201
      %p204 = scmp.ne.s32.totalorder %s189, %s203
      %p205 = scmp.eq.s32.totalorder %s36, 0
      %p206 = por %p204, %p205
      %s208 = sadd.s32 %s207, 1
      %p211 = scmp.eq.s32.totalorder %s30, 3
      %p212 = scmp.ne.s32.totalorder %s207, %s209
      %p213 = scmp.eq.s32.totalorder %s30, 0
      %p214 = por %p212, %p213
      %p215 = scmp.ne.s32.totalorder %s207, %s209
      %p216 = scmp.eq.s32.totalorder %s35, 3
      %p217 = por %p215, %p216
      %p218 = scmp.ne.s32.totalorder %s209, %s210
      %p219 = scmp.eq.s32.totalorder %s35, 0
      %p220 = por %p218, %p219
      %p221 = scmp.ne.s32.totalorder %s209, %s210
      %p222 = scmp.eq.s32.totalorder %s36, 3
      %p223 = por %p221, %p222
      %p225 = scmp.ne.s32.totalorder %s210, %s224
      %p226 = scmp.eq.s32.totalorder %s36, 0
      %p227 = por %p225, %p226
      %s229 = sadd.s32 %s228, 1
      %p232 = scmp.eq.s32.totalorder %s30, 3
      %p233 = scmp.ne.s32.totalorder %s228, %s230
      %p234 = scmp.eq.s32.totalorder %s30, 0
      %p235 = por %p233, %p234
      %p236 = scmp.ne.s32.totalorder %s228, %s230
      %p237 = scmp.eq.s32.totalorder %s35, 3
      %p238 = por %p236, %p237
      %p239 = scmp.ne.s32.totalorder %s230, %s231
      %p240 = scmp.eq.s32.totalorder %s35, 0
      %p241 = por %p239, %p240
      %p242 = scmp.ne.s32.totalorder %s230, %s231
      %p243 = scmp.eq.s32.totalorder %s36, 3
      %p244 = por %p242, %p243
      %p246 = scmp.ne.s32.totalorder %s231, %s245
      %p247 = scmp.eq.s32.totalorder %s36, 0
      %p248 = por %p246, %p247
      %s250 = sadd.s32 %s249, 1
      %p253 = scmp.eq.s32.totalorder %s30, 3
      %p254 = scmp.ne.s32.totalorder %s249, %s251
      %p255 = scmp.eq.s32.totalorder %s30, 0
      %p256 = por %p254, %p255
      %p257 = scmp.ne.s32.totalorder %s249, %s251
      %p258 = scmp.eq.s32.totalorder %s35, 3
      %p259 = por %p257, %p258
      %p260 = scmp.ne.s32.totalorder %s251, %s252
      %p261 = scmp.eq.s32.totalorder %s35, 0
      %p262 = por %p260, %p261
      %p263 = scmp.ne.s32.totalorder %s251, %s252
      %p264 = scmp.eq.s32.totalorder %s36, 3
      %p265 = por %p263, %p264
      %p267 = scmp.ne.s32.totalorder %s252, %s266
      %p268 = scmp.eq.s32.totalorder %s36, 0
      %p269 = por %p267, %p268
      %s271 = sadd.s32 %s270, 1
      %p274 = scmp.eq.s32.totalorder %s30, 3
      %p275 = scmp.ne.s32.totalorder %s270, %s272
      %p276 = scmp.eq.s32.totalorder %s30, 0
      %p277 = por %p275, %p276
      %p278 = scmp.ne.s32.totalorder %s270, %s272
      %p279 = scmp.eq.s32.totalorder %s35, 3
      %p280 = por %p278, %p279
      %p281 = scmp.ne.s32.totalorder %s272, %s273
      %p282 = scmp.eq.s32.totalorder %s35, 0
      %p283 = por %p281, %p282
      %p284 = scmp.ne.s32.totalorder %s272, %s273
      %p285 = scmp.eq.s32.totalorder %s36, 3
      %p286 = por %p284, %p285
      %p288 = scmp.ne.s32.totalorder %s273, %s287
      %p289 = scmp.eq.s32.totalorder %s36, 0
      %p290 = por %p288, %p289
      %s292 = sadd.s32 %s291, 1
      %p295 = scmp.eq.s32.totalorder %s30, 3
      %p296 = scmp.ne.s32.totalorder %s291, %s293
      %p297 = scmp.eq.s32.totalorder %s30, 0
      %p298 = por %p296, %p297
      %p299 = scmp.ne.s32.totalorder %s291, %s293
      %p300 = scmp.eq.s32.totalorder %s35, 3
      %p301 = por %p299, %p300
      %p302 = scmp.ne.s32.totalorder %s293, %s294
      %p303 = scmp.eq.s32.totalorder %s35, 0
      %p304 = por %p302, %p303
      %p305 = scmp.ne.s32.totalorder %s293, %s294
      %p306 = scmp.eq.s32.totalorder %s36, 3
      %p307 = por %p305, %p306
      %p309 = scmp.ne.s32.totalorder %s294, %s308
      %p310 = scmp.eq.s32.totalorder %s36, 0
      %p311 = por %p309, %p310
      %s313 = sadd.s32 %s312, 1
      %p316 = scmp.eq.s32.totalorder %s30, 3
      %p317 = scmp.ne.s32.totalorder %s312, %s314
      %p318 = scmp.eq.s32.totalorder %s30, 0
      %p319 = por %p317, %p318
      %p320 = scmp.ne.s32.totalorder %s312, %s314
      %p321 = scmp.eq.s32.totalorder %s35, 3
      %p322 = por %p320, %p321
      %p323 = scmp.ne.s32.totalorder %s314, %s315
      %p324 = scmp.eq.s32.totalorder %s35, 0
      %p325 = por %p323, %p324
      %p326 = scmp.ne.s32.totalorder %s314, %s315
      %p327 = scmp.eq.s32.totalorder %s36, 3
      %p328 = por %p326, %p327
      %p330 = scmp.ne.s32.totalorder %s315, %s329
      %p331 = scmp.eq.s32.totalorder %s36, 0
      %p332 = por %p330, %p331
      %s334 = sadd.s32 %s333, 1
      %p337 = scmp.eq.s32.totalorder %s30, 3
      %p338 = scmp.ne.s32.totalorder %s333, %s335
      %p339 = scmp.eq.s32.totalorder %s30, 0
      %p340 = por %p338, %p339
      %p341 = scmp.ne.s32.totalorder %s333, %s335
      %p342 = scmp.eq.s32.totalorder %s35, 3
      %p343 = por %p341, %p342
      %p344 = scmp.ne.s32.totalorder %s335, %s336
      %p345 = scmp.eq.s32.totalorder %s35, 0
      %p346 = por %p344, %p345
      %p347 = scmp.ne.s32.totalorder %s335, %s336
      %p348 = scmp.eq.s32.totalorder %s36, 3
      %p349 = por %p347, %p348
      %p351 = scmp.ne.s32.totalorder %s336, %s350
      %p352 = scmp.eq.s32.totalorder %s36, 0
      %p353 = por %p351, %p352
      %s354 = ssub.s32 %s37, %s49
      %s355 = ssub.s32 %s38, %s45
      %s356 = sor.u32 %s354, %s355
      %p357 = scmp.eq.s32.totalorder %s356, 0
      %s359 = sadd.s32 %s358, 1
      %s360 = scalar_select %p357, %s358, %s359
      %p363 = pneg %p357
      %p364 = scmp.eq.s32.totalorder %s30, 3
      %p365 = por %p363, %p364
      %p366 = scmp.ne.s32.totalorder %s358, %s361
      %p367 = scmp.eq.s32.totalorder %s30, 0
      %p368 = por %p366, %p367
      %p369 = scmp.ne.s32.totalorder %s358, %s361
      %p370 = scmp.eq.s32.totalorder %s35, 3
      %p371 = por %p369, %p370
      %p372 = scmp.ne.s32.totalorder %s361, %s362
      %p373 = scmp.eq.s32.totalorder %s35, 0
      %p374 = por %p372, %p373
      %p375 = scmp.ne.s32.totalorder %s361, %s362
      %p376 = scmp.eq.s32.totalorder %s36, 3
      %p377 = por %p375, %p376
      %p379 = scmp.ne.s32.totalorder %s362, %s378
      %p380 = scmp.eq.s32.totalorder %s36, 0
      %p381 = por %p379, %p380
      %s382 = ssub.s32 %s37, %s49
      %s383 = ssub.s32 %s38, %s45
      %s384 = sor.u32 %s382, %s383
      %p385 = scmp.eq.s32.totalorder %s384, 0
      %s387 = sadd.s32 %s386, 1
      %s388 = scalar_select %p385, %s386, %s387
      %p391 = pneg %p385
      %p392 = scmp.eq.s32.totalorder %s30, 3
      %p393 = por %p391, %p392
      %p394 = scmp.ne.s32.totalorder %s386, %s389
      %p395 = scmp.eq.s32.totalorder %s30, 0
      %p396 = por %p394, %p395
      %p397 = scmp.ne.s32.totalorder %s386, %s389
      %p398 = scmp.eq.s32.totalorder %s35, 3
      %p399 = por %p397, %p398
      %p400 = scmp.ne.s32.totalorder %s389, %s390
      %p401 = scmp.eq.s32.totalorder %s35, 0
      %p402 = por %p400, %p401
      %p403 = scmp.ne.s32.totalorder %s389, %s390
      %p404 = scmp.eq.s32.totalorder %s36, 3
      %p405 = por %p403, %p404
      %p407 = scmp.ne.s32.totalorder %s390, %s406
      %p408 = scmp.eq.s32.totalorder %s36, 0
      %p409 = por %p407, %p408
      %p410 = scmp.le.s32.totalorder 1, %s30
      %p411 = scmp.lt.s32.totalorder %s30, 5
      %p412 = pnand %p410, %p411
      %p413 = pneg %p412
      // Predicated region
      $region9: #{tpu_custom_call.1} parent=5 // pred_check
        _
      $region10: #{tpu_custom_call.1} parent=5 // pred_check_branch
        %415 = sbr.rel (%p412) target = $region12
      $region11: #{tpu_custom_call.1} parent=5 // pred_region
        %s416 = ssub.s32 %s30, 1
        // Predicated region
        $region13: #{tpu_custom_call.1} parent=11 // pred_check
          %p417 = pneg %p115
        $region14: #{tpu_custom_call.1} parent=11 // pred_check_branch
          %419 = sbr.rel (%p417) target = $region16
        $region15: #{tpu_custom_call.1} parent=11 // pred_region
          _
        $region16: #{tpu_custom_call.1} parent=11 // pred_fallthru
          _
        // Predicated region
        $region17: #{tpu_custom_call.1} parent=11 // pred_check
          %p420 = pneg %p136
        $region18: #{tpu_custom_call.1} parent=11 // pred_check_branch
          %422 = sbr.rel (%p420) target = $region20
        $region19: #{tpu_custom_call.1} parent=11 // pred_region
          _
        $region20: #{tpu_custom_call.1} parent=11 // pred_fallthru
          _
        // Predicated region
        $region21: #{tpu_custom_call.1} parent=11 // pred_check
          %p423 = pneg %p157
        $region22: #{tpu_custom_call.1} parent=11 // pred_check_branch
          %425 = sbr.rel (%p423) target = $region24
        $region23: #{tpu_custom_call.1} parent=11 // pred_region
          %s427 = ssub.s32 512, 512
          %428 = vsyncadd [#allocation5], %s427
          %s429 = sshll.u32 [#allocation4], 4
          %s430 = int_to_ptr.vmem [resolvable:$true] %s429
          %435 = dma.hbm_to_vmem [thread:$0]  %s4, 512, %s430, [#allocation5], 128, 128, 8
        $region24: #{tpu_custom_call.1} parent=11 // pred_fallthru
          _
        // Predicated region
        $region25: #{tpu_custom_call.1} parent=11 // pred_check
          %p436 = pneg %p178
        $region26: #{tpu_custom_call.1} parent=11 // pred_check_branch
          %438 = sbr.rel (%p436) target = $region28
        $region27: #{tpu_custom_call.1} parent=11 // pred_region
          %s440 = ssub.s32 512, 512
          %441 = vsyncadd [#allocation8], %s440
          %s442 = sshll.u32 [#allocation7], 4
          %s443 = int_to_ptr.vmem [resolvable:$true] %s442
          %448 = dma.hbm_to_vmem [thread:$0]  %s5, 512, %s443, [#allocation8], 128, 128, 8
        $region28: #{tpu_custom_call.1} parent=11 // pred_fallthru
          _
        // Predicated region
        $region29: #{tpu_custom_call.1} parent=11 // pred_check
          %p449 = pneg %p199
        $region30: #{tpu_custom_call.1} parent=11 // pred_check_branch
          %451 = sbr.rel (%p449) target = $region32
        $region31: #{tpu_custom_call.1} parent=11 // pred_region
          _
        $region32: #{tpu_custom_call.1} parent=11 // pred_fallthru
          _
        // Predicated region
        $region33: #{tpu_custom_call.1} parent=11 // pred_check
          %p452 = pneg %p220
        $region34: #{tpu_custom_call.1} parent=11 // pred_check_branch
          %454 = sbr.rel (%p452) target = $region36
        $region35: #{tpu_custom_call.1} parent=11 // pred_region
          _
        $region36: #{tpu_custom_call.1} parent=11 // pred_fallthru
          _
        // Predicated region
        $region37: #{tpu_custom_call.1} parent=11 // pred_check
          %p455 = pneg %p241
        $region38: #{tpu_custom_call.1} parent=11 // pred_check_branch
          %457 = sbr.rel (%p455) target = $region40
        $region39: #{tpu_custom_call.1} parent=11 // pred_region
          %s459 = ssub.s32 512, 512
          %460 = vsyncadd [#allocation8], %s459
          %s461 = sshll.u32 [#allocation9], 4
          %s462 = int_to_ptr.vmem [resolvable:$true] %s461
          %467 = dma.hbm_to_vmem [thread:$0]  %s8, 512, %s462, [#allocation8], 128, 128, 8
        $region40: #{tpu_custom_call.1} parent=11 // pred_fallthru
          _
        // Predicated region
        $region41: #{tpu_custom_call.1} parent=11 // pred_check
          %p468 = pneg %p262
        $region42: #{tpu_custom_call.1} parent=11 // pred_check_branch
          %470 = sbr.rel (%p468) target = $region44
        $region43: #{tpu_custom_call.1} parent=11 // pred_region
          _
        $region44: #{tpu_custom_call.1} parent=11 // pred_fallthru
          _
        // Predicated region
        $region45: #{tpu_custom_call.1} parent=11 // pred_check
          %p471 = pneg %p283
        $region46: #{tpu_custom_call.1} parent=11 // pred_check_branch
          %473 = sbr.rel (%p471) target = $region48
        $region47: #{tpu_custom_call.1} parent=11 // pred_region
          _
        $region48: #{tpu_custom_call.1} parent=11 // pred_fallthru
          _
        // Predicated region
        $region49: #{tpu_custom_call.1} parent=11 // pred_check
          %p474 = pneg %p304
        $region50: #{tpu_custom_call.1} parent=11 // pred_check_branch
          %476 = sbr.rel (%p474) target = $region52
        $region51: #{tpu_custom_call.1} parent=11 // pred_region
          _
        $region52: #{tpu_custom_call.1} parent=11 // pred_fallthru
          _
        // Predicated region
        $region53: #{tpu_custom_call.1} parent=11 // pred_check
          %p477 = pneg %p325
        $region54: #{tpu_custom_call.1} parent=11 // pred_check_branch
          %479 = sbr.rel (%p477) target = $region56
        $region55: #{tpu_custom_call.1} parent=11 // pred_region
          _
        $region56: #{tpu_custom_call.1} parent=11 // pred_fallthru
          _
        // Predicated region
        $region57: #{tpu_custom_call.1} parent=11 // pred_check
          %p480 = pneg %p346
        $region58: #{tpu_custom_call.1} parent=11 // pred_check_branch
          %482 = sbr.rel (%p480) target = $region60
        $region59: #{tpu_custom_call.1} parent=11 // pred_region
          _
        $region60: #{tpu_custom_call.1} parent=11 // pred_fallthru
          _
      $region12: #{tpu_custom_call.1} parent=5 // pred_fallthru
        _
      %p483 = scmp.lt.s32.totalorder %s30, 4
      // Predicated region
      $region61: #{tpu_custom_call.1} parent=5 // pred_check
        %p484 = pneg %p483
      $region62: #{tpu_custom_call.1} parent=5 // pred_check_branch
        %486 = sbr.rel (%p484) target = $region64
      $region63: #{tpu_custom_call.1} parent=5 // pred_region
        // Predicated region
        $region65: #{tpu_custom_call.1} parent=63 // pred_check
          %p487 = pneg %p62
        $region66: #{tpu_custom_call.1} parent=63 // pred_check_branch
          %489 = sbr.rel (%p487) target = $region68
        $region67: #{tpu_custom_call.1} parent=63 // pred_region
          %p490 = scmp.lt.s32.totalorder %s37, 1
          %s491 = scalar_select %p490, %s37, 1
          %s492 = smul.addr %s491, 2
          %s493 = smul.addr %s492, 8
          %s494 = scalar_lea.vmem %s0, %s493
        $region68: #{tpu_custom_call.1} parent=63 // pred_fallthru
          _
        // Predicated region
        $region69: #{tpu_custom_call.1} parent=63 // pred_check
          %p495 = pneg %p88
        $region70: #{tpu_custom_call.1} parent=63 // pred_check_branch
          %497 = sbr.rel (%p495) target = $region72
        $region71: #{tpu_custom_call.1} parent=63 // pred_region
          %p498 = scmp.lt.s32.totalorder %s37, 1
          %s499 = scalar_select %p498, %s37, 1
          %s500 = scalar_lea.vmem %s1, %s499
        $region72: #{tpu_custom_call.1} parent=63 // pred_fallthru
          _
      $region64: #{tpu_custom_call.1} parent=5 // pred_fallthru
        _
      %p501 = scmp.le.s32.totalorder 1, %s30
      %p502 = scmp.lt.s32.totalorder %s30, 5
      %p503 = pnand %p501, %p502
      %p504 = pneg %p503
      // Predicated region
      $region73: #{tpu_custom_call.1} parent=5 // pred_check
        _
      $region74: #{tpu_custom_call.1} parent=5 // pred_check_branch
        %506 = sbr.rel (%p503) target = $region76
      $region75: #{tpu_custom_call.1} parent=5 // pred_region
        %s507 = ssub.s32 %s30, 1
        // Predicated region
        $region77: #{tpu_custom_call.1} parent=75 // pred_check
          %p508 = pneg %p157
        $region78: #{tpu_custom_call.1} parent=75 // pred_check_branch
          %510 = sbr.rel (%p508) target = $region80
        $region79: #{tpu_custom_call.1} parent=75 // pred_region
          %511 = dma.done [#allocation5], 512
        $region80: #{tpu_custom_call.1} parent=75 // pred_fallthru
          _
        // Predicated region
        $region81: #{tpu_custom_call.1} parent=75 // pred_check
          %p512 = pneg %p178
        $region82: #{tpu_custom_call.1} parent=75 // pred_check_branch
          %514 = sbr.rel (%p512) target = $region84
        $region83: #{tpu_custom_call.1} parent=75 // pred_region
          %515 = dma.done [#allocation8], 512
        $region84: #{tpu_custom_call.1} parent=75 // pred_fallthru
          _
        // Predicated region
        $region85: #{tpu_custom_call.1} parent=75 // pred_check
          %p516 = pneg %p241
        $region86: #{tpu_custom_call.1} parent=75 // pred_check_branch
          %518 = sbr.rel (%p516) target = $region88
        $region87: #{tpu_custom_call.1} parent=75 // pred_region
          %519 = dma.done [#allocation8], 512
        $region88: #{tpu_custom_call.1} parent=75 // pred_fallthru
          _
        %p520 = scmp.lt.s32.totalorder %s39, 1
        %s521 = scalar_select %p520, %s39, 1
        %s522 = smul.addr %s521, 2
        %s523 = smul.addr %s522, 8
        %s524 = scalar_lea.vmem %s0, %s523
        %p525 = pneg %p68
        %p526 = pneg %p65
        %p527 = scmp.lt.s32.totalorder %s39, 1
        %s528 = scalar_select %p527, %s39, 1
        %s529 = scalar_lea.vmem %s1, %s528
        %p530 = pneg %p94
        %p531 = pneg %p91
        %p532 = pneg %p115
        %p533 = pneg %p112
        %p534 = pneg %p136
        %p535 = pneg %p133
        %p536 = pneg %p157
        %p537 = pneg %p154
        %p538 = pneg %p178
        %p539 = pneg %p175
        %p540 = pneg %p199
        %p541 = pneg %p196
        %p542 = pneg %p220
        %p543 = pneg %p217
        %p544 = pneg %p241
        %p545 = pneg %p238
        %p546 = pneg %p262
        %p547 = pneg %p259
        %p548 = pneg %p283
        %p549 = pneg %p280
        %p550 = pneg %p304
        %p551 = pneg %p301
        %p552 = pneg %p325
        %p553 = pneg %p322
        %p554 = pneg %p346
        %p555 = pneg %p343
        %p556 = pneg %p374
        %p557 = pneg %p371
        %s558 = sand.u32 %s361, 1
        %s559 = scalar_lea.sflag [#allocation6], %s558
        %s560 = sand.u32 %s361, 1
        %s561 = smul.addr %s560, 8
        %s562 = scalar_lea.vmem [#allocation10], %s561
        %p563 = pneg %p402
        %p564 = pneg %p399
        %s565 = sand.u32 %s389, 1
        %s566 = scalar_lea.sflag [#allocation12], %s565
        %s567 = sand.u32 %s389, 1
        %s568 = smul.addr %s567, 32
        %s569 = scalar_lea.vmem [#allocation11], %s568
        %p570 = scmp.lt.s32.totalorder %s39, 1
        %s571 = scalar_select %p570, %s39, 1
        %s572 = smul.addr %s571, 2
        %s573 = smul.addr %s572, 8
        %s574 = scalar_lea.vmem %s0, %s573
        %p575 = scmp.lt.s32.totalorder %s39, 1
        %s576 = scalar_select %p575, %s39, 1
        %s577 = scalar_lea.vmem %s1, %s576
        %p578 = scmp.eq.s32.totalorder %s40, 0
        // Predicated region
        $region89: #{tpu_custom_call.1} parent=75 // pred_check
          %p579 = pneg %p578
        $region90: #{tpu_custom_call.1} parent=75 // pred_check_branch
          %581 = sbr.rel (%p579) target = $region92
        $region91: #{tpu_custom_call.1} parent=75 // pred_region
          %v582 = vld [vmem:[%s574] sm:$0xff]
          %v583 = vld [vmem:[%s574 + $0x8] sm:$0xff]
          %v584 = vld [vmem:[%s3] sm:$0xff]
          %v585 = vld [vmem:[%s3 + $0x8] sm:$0xff]
          %v586 = vld [vmem:[%s3 + $0x10] sm:$0xff]
          %v587 = vld [vmem:[%s3 + $0x18] sm:$0xff]
          %vm588 = vcmask 261120
          %v590 = vsel %vm588, %v582, 0
          %v593 = vsel %vm588, %v583, 0
          %595 = vmatprep.subr.mxu0 0.0
          %596 = vmatpush1.msra.mxu0 %v584
          %597 = vmatprep.subr.mxu0 0.0
          %598 = vmatpush1.msra.mxu0 %v585
          %599 = vmatprep.subr.mxu0 0.0
          %600 = vmatpush1.msra.mxu0 %v586
          %601 = vmatprep.subr.mxu0 0.0
          %602 = vmatpush1.msra.mxu0 %v587
          %603 = vmatprep.subr.mxu0 0.0
          %604 = vmatpush1.msra.mxu0 0.0
          %605 = vmatprep.subr.mxu0 0.0
          %606 = vmatpush1.msra.mxu0 0.0
          %607 = vmatprep.subr.mxu0 0.0
          %608 = vmatpush1.msra.mxu0 0.0
          %609 = vmatprep.subr.mxu0 0.0
          %610 = vmatpush1.msra.mxu0 0.0
          %611 = vmatprep.subr.mxu0 0.0
          %612 = vmatpush1.msra.mxu0 0.0
          %613 = vmatprep.subr.mxu0 0.0
          %614 = vmatpush1.msra.mxu0 0.0
          %615 = vmatprep.subr.mxu0 0.0
          %616 = vmatpush1.msra.mxu0 0.0
          %617 = vmatprep.subr.mxu0 0.0
          %618 = vmatpush1.msra.mxu0 0.0
          %619 = vmatprep.subr.mxu0 0.0
          %620 = vmatpush1.msra.mxu0 0.0
          %621 = vmatprep.subr.mxu0 0.0
          %622 = vmatpush1.msra.mxu0 0.0
          %623 = vmatprep.subr.mxu0 0.0
          %624 = vmatpush1.msra.mxu0 0.0
          %625 = vmatprep.subr.mxu0 0.0
          %626 = vmatpush1.msra.mxu0 0.0
          %627 = vmatprep.subr.mxu0 0.0
          %628 = vmatpush1.msra.mxu0 0.0
          %629 = vmatprep.subr.mxu0 0.0
          %630 = vmatpush1.msra.mxu0 0.0
          %631 = vmatprep.subr.mxu0 0.0
          %632 = vmatpush1.msra.mxu0 0.0
          %633 = vmatprep.subr.mxu0 0.0
          %634 = vmatpush1.msra.mxu0 0.0
          %635 = vmatprep.subr.mxu0 0.0
          %636 = vmatpush1.msra.mxu0 0.0
          %637 = vmatprep.subr.mxu0 0.0
          %638 = vmatpush1.msra.mxu0 0.0
          %639 = vmatprep.subr.mxu0 0.0
          %640 = vmatpush1.msra.mxu0 0.0
          %641 = vmatprep.subr.mxu0 0.0
          %642 = vmatpush1.msra.mxu0 0.0
          %643 = vmatprep.subr.mxu0 0.0
          %644 = vmatpush1.msra.mxu0 0.0
          %645 = vmatprep.subr.mxu0 0.0
          %646 = vmatpush1.msra.mxu0 0.0
          %647 = vmatprep.subr.mxu0 0.0
          %648 = vmatpush1.msra.mxu0 0.0
          %649 = vmatprep.subr.mxu0 0.0
          %650 = vmatpush1.msra.mxu0 0.0
          %651 = vmatprep.subr.mxu0 0.0
          %652 = vmatpush1.msra.mxu0 0.0
          %653 = vmatprep.subr.mxu0 0.0
          %654 = vmatpush1.msra.mxu0 0.0
          %655 = vmatprep.subr.mxu0 0.0
          %656 = vmatpush1.msra.mxu0 0.0
          %657 = vmatprep.subr.mxu0 0.0
          %658 = vmatpush1.msra.mxu0 0.0
          %659 = vmatprep.mubr.f32.mxu0 0.0
          %660 = vmatmul.mubr.f32.gmra.mrb[0].mxu0 %v590
          %v661 = vpop.f32.mrb[0].mxu0
          %v662 = vadd.f32 0.0, %v661
          %v663 = vpop.f32.mrb[0].mxu0
          %664 = vmatprep.mubr.f32.mxu0 0.0
          %665 = vmatmul.mubr.f32.gmra.mrb[0].mxu0 %v593
          %v666 = vpop.f32.mrb[0].mxu0
          %v667 = vadd.f32 0.0, %v666
          %v668 = vpop.f32.mrb[0].mxu0
          %669 = vdwg.mxu0
          %670 = vst.msk [vmem:[#allocation2] sm:$0xff] %vm588, %v662
          %671 = vst.msk [vmem:[#allocation2 + $0x8] sm:$0xff] %vm588, %v667
          %v672 = vld [vmem:[#allocation4] sm:$0xff]
          %v673 = vld [vmem:[#allocation4 + $0x8] sm:$0xff]
          %v674 = vld [vmem:[#allocation4 + $0x10] sm:$0xff]
          %v675 = vld [vmem:[#allocation4 + $0x18] sm:$0xff]
          %676 = vmatprep.subr.mxu0 0.0
          %677 = vmatpush1.msra.mxu0 %v672
          %678 = vmatprep.subr.mxu0 0.0
          %679 = vmatpush1.msra.mxu0 %v673
          %680 = vmatprep.subr.mxu0 0.0
          %681 = vmatpush1.msra.mxu0 %v674
          %682 = vmatprep.subr.mxu0 0.0
          %683 = vmatpush1.msra.mxu0 %v675
          %684 = vmatprep.subr.mxu0 0.0
          %685 = vmatpush1.msra.mxu0 0.0
          %686 = vmatprep.subr.mxu0 0.0
          %687 = vmatpush1.msra.mxu0 0.0
          %688 = vmatprep.subr.mxu0 0.0
          %689 = vmatpush1.msra.mxu0 0.0
          %690 = vmatprep.subr.mxu0 0.0
          %691 = vmatpush1.msra.mxu0 0.0
          %692 = vmatprep.subr.mxu0 0.0
          %693 = vmatpush1.msra.mxu0 0.0
          %694 = vmatprep.subr.mxu0 0.0
          %695 = vmatpush1.msra.mxu0 0.0
          %696 = vmatprep.subr.mxu0 0.0
          %697 = vmatpush1.msra.mxu0 0.0
          %698 = vmatprep.subr.mxu0 0.0
          %699 = vmatpush1.msra.mxu0 0.0
          %700 = vmatprep.subr.mxu0 0.0
          %701 = vmatpush1.msra.mxu0 0.0
          %702 = vmatprep.subr.mxu0 0.0
          %703 = vmatpush1.msra.mxu0 0.0
          %704 = vmatprep.subr.mxu0 0.0
          %705 = vmatpush1.msra.mxu0 0.0
          %706 = vmatprep.subr.mxu0 0.0
          %707 = vmatpush1.msra.mxu0 0.0
          %708 = vmatprep.subr.mxu0 0.0
          %709 = vmatpush1.msra.mxu0 0.0
          %710 = vmatprep.subr.mxu0 0.0
          %711 = vmatpush1.msra.mxu0 0.0
          %712 = vmatprep.subr.mxu0 0.0
          %713 = vmatpush1.msra.mxu0 0.0
          %714 = vmatprep.subr.mxu0 0.0
          %715 = vmatpush1.msra.mxu0 0.0
          %716 = vmatprep.subr.mxu0 0.0
          %717 = vmatpush1.msra.mxu0 0.0
          %718 = vmatprep.subr.mxu0 0.0
          %719 = vmatpush1.msra.mxu0 0.0
          %720 = vmatprep.subr.mxu0 0.0
          %721 = vmatpush1.msra.mxu0 0.0
          %722 = vmatprep.subr.mxu0 0.0
          %723 = vmatpush1.msra.mxu0 0.0
          %724 = vmatprep.subr.mxu0 0.0
          %725 = vmatpush1.msra.mxu0 0.0
          %726 = vmatprep.subr.mxu0 0.0
          %727 = vmatpush1.msra.mxu0 0.0
          %728 = vmatprep.subr.mxu0 0.0
          %729 = vmatpush1.msra.mxu0 0.0
          %730 = vmatprep.subr.mxu0 0.0
          %731 = vmatpush1.msra.mxu0 0.0
          %732 = vmatprep.subr.mxu0 0.0
          %733 = vmatpush1.msra.mxu0 0.0
          %734 = vmatprep.subr.mxu0 0.0
          %735 = vmatpush1.msra.mxu0 0.0
          %736 = vmatprep.subr.mxu0 0.0
          %737 = vmatpush1.msra.mxu0 0.0
          %738 = vmatprep.subr.mxu0 0.0
          %739 = vmatpush1.msra.mxu0 0.0
          %740 = vmatprep.mubr.f32.mxu0 0.0
          %741 = vmatmul.mubr.f32.gmra.mrb[0].mxu0 %v590
          %v742 = vpop.f32.mrb[0].mxu0
          %v743 = vadd.f32 0.0, %v742
          %v744 = vpop.f32.mrb[0].mxu0
          %745 = vmatprep.mubr.f32.mxu0 0.0
          %746 = vmatmul.mubr.f32.gmra.mrb[0].mxu0 %v593
          %v747 = vpop.f32.mrb[0].mxu0
          %v748 = vadd.f32 0.0, %v747
          %v749 = vpop.f32.mrb[0].mxu0
          %750 = vdwg.mxu0
          %751 = vst.msk [vmem:[#allocation3] sm:$0xff] %vm588, %v743
          %752 = vst.msk [vmem:[#allocation3 + $0x8] sm:$0xff] %vm588, %v748
        $region92: #{tpu_custom_call.1} parent=75 // pred_fallthru
          _
        %s753 = smul.u32 %s40, 8
        %s754 = scalar_lea.vmem %s574, %s753
        %v755 = vld [vmem:[%s754] sm:$0xff]
        %v756 = vld [vmem:[%s2] sm:$0xff]
        %v757 = vld [vmem:[%s2 + $0x8] sm:$0xff]
        %v758 = vld [vmem:[%s2 + $0x10] sm:$0xff]
        %v759 = vld [vmem:[%s2 + $0x18] sm:$0xff]
        %vm760 = vcmask 261120
        %v762 = vsel %vm760, %v755, 0
        %764 = vmatprep.subr.mxu0 0.0
        %765 = vmatpush1.msra.mxu0 %v756
        %766 = vmatprep.subr.mxu0 0.0
        %767 = vmatpush1.msra.mxu0 %v757
        %768 = vmatprep.subr.mxu0 0.0
        %769 = vmatpush1.msra.mxu0 %v758
        %770 = vmatprep.subr.mxu0 0.0
        %771 = vmatpush1.msra.mxu0 %v759
        %772 = vmatprep.subr.mxu0 0.0
        %773 = vmatpush1.msra.mxu0 0.0
        %774 = vmatprep.subr.mxu0 0.0
        %775 = vmatpush1.msra.mxu0 0.0
        %776 = vmatprep.subr.mxu0 0.0
        %777 = vmatpush1.msra.mxu0 0.0
        %778 = vmatprep.subr.mxu0 0.0
        %779 = vmatpush1.msra.mxu0 0.0
        %780 = vmatprep.subr.mxu0 0.0
        %781 = vmatpush1.msra.mxu0 0.0
        %782 = vmatprep.subr.mxu0 0.0
        %783 = vmatpush1.msra.mxu0 0.0
        %784 = vmatprep.subr.mxu0 0.0
        %785 = vmatpush1.msra.mxu0 0.0
        %786 = vmatprep.subr.mxu0 0.0
        %787 = vmatpush1.msra.mxu0 0.0
        %788 = vmatprep.subr.mxu0 0.0
        %789 = vmatpush1.msra.mxu0 0.0
        %790 = vmatprep.subr.mxu0 0.0
        %791 = vmatpush1.msra.mxu0 0.0
        %792 = vmatprep.subr.mxu0 0.0
        %793 = vmatpush1.msra.mxu0 0.0
        %794 = vmatprep.subr.mxu0 0.0
        %795 = vmatpush1.msra.mxu0 0.0
        %796 = vmatprep.subr.mxu0 0.0
        %797 = vmatpush1.msra.mxu0 0.0
        %798 = vmatprep.subr.mxu0 0.0
        %799 = vmatpush1.msra.mxu0 0.0
        %800 = vmatprep.subr.mxu0 0.0
        %801 = vmatpush1.msra.mxu0 0.0
        %802 = vmatprep.subr.mxu0 0.0
        %803 = vmatpush1.msra.mxu0 0.0
        %804 = vmatprep.subr.mxu0 0.0
        %805 = vmatpush1.msra.mxu0 0.0
        %806 = vmatprep.subr.mxu0 0.0
        %807 = vmatpush1.msra.mxu0 0.0
        %808 = vmatprep.subr.mxu0 0.0
        %809 = vmatpush1.msra.mxu0 0.0
        %810 = vmatprep.subr.mxu0 0.0
        %811 = vmatpush1.msra.mxu0 0.0
        %812 = vmatprep.subr.mxu0 0.0
        %813 = vmatpush1.msra.mxu0 0.0
        %814 = vmatprep.subr.mxu0 0.0
        %815 = vmatpush1.msra.mxu0 0.0
        %816 = vmatprep.subr.mxu0 0.0
        %817 = vmatpush1.msra.mxu0 0.0
        %818 = vmatprep.subr.mxu0 0.0
        %819 = vmatpush1.msra.mxu0 0.0
        %820 = vmatprep.subr.mxu0 0.0
        %821 = vmatpush1.msra.mxu0 0.0
        %822 = vmatprep.subr.mxu0 0.0
        %823 = vmatpush1.msra.mxu0 0.0
        %824 = vmatprep.subr.mxu0 0.0
        %825 = vmatpush1.msra.mxu0 0.0
        %826 = vmatprep.subr.mxu0 0.0
        %827 = vmatpush1.msra.mxu0 0.0
        %828 = vmatprep.mubr.f32.mxu0 0.0
        %829 = vmatmul.mubr.f32.gmra.mrb[0].mxu0 %v762
        %v830 = vpop.f32.mrb[0].mxu0
        %v831 = vadd.f32 0.0, %v830
        %v832 = vpop.f32.mrb[0].mxu0
        %833 = vdwg.mxu0
        %v834 = vmul.f32 %v831, 0.35355338
        %v835 = vld [vmem:[%s577] sm:$0x1]
        %vm836 = vcmp.eq.s32.totalorder %v835, 0
        %v837 = vsel %vm836, -1e+09, 0.0
        %v838 = vld [vmem:[#allocation2] sm:$0xff]
        %v839 = vld [vmem:[#allocation2 + $0x8] sm:$0xff]
        %v840 = vld [vmem:[#allocation3] sm:$0xff]
        %v841 = vld [vmem:[#allocation3 + $0x8] sm:$0xff]
        %v843 = vlaneseq
        %v844 = vshrl.u32 %v843, 7
        %v845 = vsub.s32 0, %v844
        %v846 = vrot.slane %v837, %v845
        %vm848 = vcmask 64512
        %v850 = vsel %vm848, %v834, 0
        %v853 = vsel %vm848, %v838, 0
        %v856 = vsel %vm848, %v839, 0
        %858 = vmatprep.subr.mxu0 0.0
        %859 = vmatpush1.xpose.msra.mxu0 %v853
        %860 = vmatprep.subr.mxu0 0.0
        %861 = vmatpush1.xpose.msra.mxu0 %v856
        %862 = vmatprep.subr.mxu0 0.0
        %863 = vmatpush1.xpose.msra.mxu0 0.0
        %864 = vmatprep.subr.mxu0 0.0
        %865 = vmatpush1.xpose.msra.mxu0 0.0
        %866 = vmatprep.subr.mxu0 0.0
        %867 = vmatpush1.xpose.msra.mxu0 0.0
        %868 = vmatprep.subr.mxu0 0.0
        %869 = vmatpush1.xpose.msra.mxu0 0.0
        %870 = vmatprep.subr.mxu0 0.0
        %871 = vmatpush1.xpose.msra.mxu0 0.0
        %872 = vmatprep.subr.mxu0 0.0
        %873 = vmatpush1.xpose.msra.mxu0 0.0
        %874 = vmatprep.subr.mxu0 0.0
        %875 = vmatpush1.xpose.msra.mxu0 0.0
        %876 = vmatprep.subr.mxu0 0.0
        %877 = vmatpush1.xpose.msra.mxu0 0.0
        %878 = vmatprep.subr.mxu0 0.0
        %879 = vmatpush1.xpose.msra.mxu0 0.0
        %880 = vmatprep.subr.mxu0 0.0
        %881 = vmatpush1.xpose.msra.mxu0 0.0
        %882 = vmatprep.subr.mxu0 0.0
        %883 = vmatpush1.xpose.msra.mxu0 0.0
        %884 = vmatprep.subr.mxu0 0.0
        %885 = vmatpush1.xpose.msra.mxu0 0.0
        %886 = vmatprep.subr.mxu0 0.0
        %887 = vmatpush1.xpose.msra.mxu0 0.0
        %888 = vmatprep.subr.mxu0 0.0
        %889 = vmatpush1.xpose.msra.mxu0 0.0
        %890 = vmatprep.subr.mxu0 0.0
        %891 = vmatpush1.xpose.msra.mxu0 0.0
        %892 = vmatprep.subr.mxu0 0.0
        %893 = vmatpush1.xpose.msra.mxu0 0.0
        %894 = vmatprep.subr.mxu0 0.0
        %895 = vmatpush1.xpose.msra.mxu0 0.0
        %896 = vmatprep.subr.mxu0 0.0
        %897 = vmatpush1.xpose.msra.mxu0 0.0
        %898 = vmatprep.subr.mxu0 0.0
        %899 = vmatpush1.xpose.msra.mxu0 0.0
        %900 = vmatprep.subr.mxu0 0.0
        %901 = vmatpush1.xpose.msra.mxu0 0.0
        %902 = vmatprep.subr.mxu0 0.0
        %903 = vmatpush1.xpose.msra.mxu0 0.0
        %904 = vmatprep.subr.mxu0 0.0
        %905 = vmatpush1.xpose.msra.mxu0 0.0
        %906 = vmatprep.subr.mxu0 0.0
        %907 = vmatpush1.xpose.msra.mxu0 0.0
        %908 = vmatprep.subr.mxu0 0.0
        %909 = vmatpush1.xpose.msra.mxu0 0.0
        %910 = vmatprep.subr.mxu0 0.0
        %911 = vmatpush1.xpose.msra.mxu0 0.0
        %912 = vmatprep.subr.mxu0 0.0
        %913 = vmatpush1.xpose.msra.mxu0 0.0
        %914 = vmatprep.subr.mxu0 0.0
        %915 = vmatpush1.xpose.msra.mxu0 0.0
        %916 = vmatprep.subr.mxu0 0.0
        %917 = vmatpush1.xpose.msra.mxu0 0.0
        %918 = vmatprep.subr.mxu0 0.0
        %919 = vmatpush1.xpose.msra.mxu0 0.0
        %920 = vmatprep.subr.mxu0 0.0
        %921 = vmatpush1.xpose.msra.mxu0 0.0
        %922 = vmatprep.mubr.f32.mxu0 0.0
        %923 = vmatmul.mubr.f32.gmra.mrb[0].mxu0 %v850
        %v924 = vpop.f32.mrb[0].mxu0
        %v925 = vadd.f32 %v846, %v924
        %v926 = vpop.f32.mrb[0].mxu0
        %927 = vdwg.mxu0
        %vm928 = vcmask 130048
        %v929 = vsel %vm928, %v925, -inf
        %930 = vmax.xlane.f32.xlu0 %v929
        %v931 = vpop.xlane.xlu0 %930
        %v932 = vsub.f32 %v925, %v931
        %v933 = vmul.f32 %v932, 1.442695
        %v934 = vpow.pop %v933
        %v935 = vsel %vm928, %v934, 0.0
        %936 = vadd.xlane.f32.xlu0 %v935
        %v937 = vpop.xlane.xlu0 %936
        %v938 = vrcp.pop %v937
        %v939 = vmul.f32 %v934, %v938
        %940 = vst.msk [vmem:[%s569] sm:$0xff] %vm928, %v939
        %v942 = vsel %vm928, %v939, 0
        %944 = vmatprep.subr.mxu0 0.0
        %945 = vmatpush1.msra.mxu0 %v840
        %946 = vmatprep.subr.mxu0 0.0
        %947 = vmatpush1.msra.mxu0 %v841
        %948 = vmatprep.subr.mxu0 0.0
        %949 = vmatpush1.msra.mxu0 0.0
        %950 = vmatprep.subr.mxu0 0.0
        %951 = vmatpush1.msra.mxu0 0.0
        %952 = vmatprep.subr.mxu0 0.0
        %953 = vmatpush1.msra.mxu0 0.0
        %954 = vmatprep.subr.mxu0 0.0
        %955 = vmatpush1.msra.mxu0 0.0
        %956 = vmatprep.subr.mxu0 0.0
        %957 = vmatpush1.msra.mxu0 0.0
        %958 = vmatprep.subr.mxu0 0.0
        %959 = vmatpush1.msra.mxu0 0.0
        %960 = vmatprep.subr.mxu0 0.0
        %961 = vmatpush1.msra.mxu0 0.0
        %962 = vmatprep.subr.mxu0 0.0
        %963 = vmatpush1.msra.mxu0 0.0
        %964 = vmatprep.subr.mxu0 0.0
        %965 = vmatpush1.msra.mxu0 0.0
        %966 = vmatprep.subr.mxu0 0.0
        %967 = vmatpush1.msra.mxu0 0.0
        %968 = vmatprep.subr.mxu0 0.0
        %969 = vmatpush1.msra.mxu0 0.0
        %970 = vmatprep.subr.mxu0 0.0
        %971 = vmatpush1.msra.mxu0 0.0
        %972 = vmatprep.subr.mxu0 0.0
        %973 = vmatpush1.msra.mxu0 0.0
        %974 = vmatprep.subr.mxu0 0.0
        %975 = vmatpush1.msra.mxu0 0.0
        %976 = vmatprep.subr.mxu0 0.0
        %977 = vmatpush1.msra.mxu0 0.0
        %978 = vmatprep.subr.mxu0 0.0
        %979 = vmatpush1.msra.mxu0 0.0
        %980 = vmatprep.subr.mxu0 0.0
        %981 = vmatpush1.msra.mxu0 0.0
        %982 = vmatprep.subr.mxu0 0.0
        %983 = vmatpush1.msra.mxu0 0.0
        %984 = vmatprep.subr.mxu0 0.0
        %985 = vmatpush1.msra.mxu0 0.0
        %986 = vmatprep.subr.mxu0 0.0
        %987 = vmatpush1.msra.mxu0 0.0
        %988 = vmatprep.subr.mxu0 0.0
        %989 = vmatpush1.msra.mxu0 0.0
        %990 = vmatprep.subr.mxu0 0.0
        %991 = vmatpush1.msra.mxu0 0.0
        %992 = vmatprep.subr.mxu0 0.0
        %993 = vmatpush1.msra.mxu0 0.0
        %994 = vmatprep.subr.mxu0 0.0
        %995 = vmatpush1.msra.mxu0 0.0
        %996 = vmatprep.subr.mxu0 0.0
        %997 = vmatpush1.msra.mxu0 0.0
        %998 = vmatprep.subr.mxu0 0.0
        %999 = vmatpush1.msra.mxu0 0.0
        %1000 = vmatprep.subr.mxu0 0.0
        %1001 = vmatpush1.msra.mxu0 0.0
        %1002 = vmatprep.subr.mxu0 0.0
        %1003 = vmatpush1.msra.mxu0 0.0
        %1004 = vmatprep.subr.mxu0 0.0
        %1005 = vmatpush1.msra.mxu0 0.0
        %1006 = vmatprep.subr.mxu0 0.0
        %1007 = vmatpush1.msra.mxu0 0.0
        %1008 = vmatprep.mubr.f32.mxu0 0.0
        %1009 = vmatmul.mubr.f32.gmra.mrb[0].mxu0 %v942
        %v1010 = vpop.f32.mrb[0].mxu0
        %v1011 = vadd.f32 0.0, %v1010
        %v1012 = vpop.f32.mrb[0].mxu0
        %1013 = vdwg.mxu0
        %v1014 = vld [vmem:[#allocation2] sm:$0xff]
        %v1015 = vld [vmem:[#allocation2 + $0x8] sm:$0xff]
        %v1016 = vld [vmem:[#allocation3] sm:$0xff]
        %v1017 = vld [vmem:[#allocation3 + $0x8] sm:$0xff]
        %1018 = vrot.lane.b32.xlu0 %v834, 120
        %v1019 = vpop.permute.xlu0 %1018
        %1022 = vrot.lane.b32.xlu0 %v1014, 120
        %v1023 = vpop.permute.xlu0 %1022
        %1024 = vrot.lane.b32.xlu0 %v1015, 120
        %v1025 = vpop.permute.xlu0 %1024
        %v1026 = vsel %vm848, %v1019, 0
        %v1028 = vsel %vm848, %v1023, 0
        %v1030 = vsel %vm848, %v1025, 0
        %1032 = vmatprep.subr.mxu0 0.0
        %1033 = vmatpush1.xpose.msra.mxu0 %v1028
        %1034 = vmatprep.subr.mxu0 0.0
        %1035 = vmatpush1.xpose.msra.mxu0 %v1030
        %1036 = vmatprep.subr.mxu0 0.0
        %1037 = vmatpush1.xpose.msra.mxu0 0.0
        %1038 = vmatprep.subr.mxu0 0.0
        %1039 = vmatpush1.xpose.msra.mxu0 0.0
        %1040 = vmatprep.subr.mxu0 0.0
        %1041 = vmatpush1.xpose.msra.mxu0 0.0
        %1042 = vmatprep.subr.mxu0 0.0
        %1043 = vmatpush1.xpose.msra.mxu0 0.0
        %1044 = vmatprep.subr.mxu0 0.0
        %1045 = vmatpush1.xpose.msra.mxu0 0.0
        %1046 = vmatprep.subr.mxu0 0.0
        %1047 = vmatpush1.xpose.msra.mxu0 0.0
        %1048 = vmatprep.subr.mxu0 0.0
        %1049 = vmatpush1.xpose.msra.mxu0 0.0
        %1050 = vmatprep.subr.mxu0 0.0
        %1051 = vmatpush1.xpose.msra.mxu0 0.0
        %1052 = vmatprep.subr.mxu0 0.0
        %1053 = vmatpush1.xpose.msra.mxu0 0.0
        %1054 = vmatprep.subr.mxu0 0.0
        %1055 = vmatpush1.xpose.msra.mxu0 0.0
        %1056 = vmatprep.subr.mxu0 0.0
        %1057 = vmatpush1.xpose.msra.mxu0 0.0
        %1058 = vmatprep.subr.mxu0 0.0
        %1059 = vmatpush1.xpose.msra.mxu0 0.0
        %1060 = vmatprep.subr.mxu0 0.0
        %1061 = vmatpush1.xpose.msra.mxu0 0.0
        %1062 = vmatprep.subr.mxu0 0.0
        %1063 = vmatpush1.xpose.msra.mxu0 0.0
        %1064 = vmatprep.subr.mxu0 0.0
        %1065 = vmatpush1.xpose.msra.mxu0 0.0
        %1066 = vmatprep.subr.mxu0 0.0
        %1067 = vmatpush1.xpose.msra.mxu0 0.0
        %1068 = vmatprep.subr.mxu0 0.0
        %1069 = vmatpush1.xpose.msra.mxu0 0.0
        %1070 = vmatprep.subr.mxu0 0.0
        %1071 = vmatpush1.xpose.msra.mxu0 0.0
        %1072 = vmatprep.subr.mxu0 0.0
        %1073 = vmatpush1.xpose.msra.mxu0 0.0
        %1074 = vmatprep.subr.mxu0 0.0
        %1075 = vmatpush1.xpose.msra.mxu0 0.0
        %1076 = vmatprep.subr.mxu0 0.0
        %1077 = vmatpush1.xpose.msra.mxu0 0.0
        %1078 = vmatprep.subr.mxu0 0.0
        %1079 = vmatpush1.xpose.msra.mxu0 0.0
        %1080 = vmatprep.subr.mxu0 0.0
        %1081 = vmatpush1.xpose.msra.mxu0 0.0
        %1082 = vmatprep.subr.mxu0 0.0
        %1083 = vmatpush1.xpose.msra.mxu0 0.0
        %1084 = vmatprep.subr.mxu0 0.0
        %1085 = vmatpush1.xpose.msra.mxu0 0.0
        %1086 = vmatprep.subr.mxu0 0.0
        %1087 = vmatpush1.xpose.msra.mxu0 0.0
        %1088 = vmatprep.subr.mxu0 0.0
        %1089 = vmatpush1.xpose.msra.mxu0 0.0
        %1090 = vmatprep.subr.mxu0 0.0
        %1091 = vmatpush1.xpose.msra.mxu0 0.0
        %1092 = vmatprep.subr.mxu0 0.0
        %1093 = vmatpush1.xpose.msra.mxu0 0.0
        %1094 = vmatprep.subr.mxu0 0.0
        %1095 = vmatpush1.xpose.msra.mxu0 0.0
        %1096 = vmatprep.mubr.f32.mxu0 0.0
        %1097 = vmatmul.mubr.f32.gmra.mrb[0].mxu0 %v1026
        %v1098 = vpop.f32.mrb[0].mxu0
        %v1099 = vadd.f32 %v846, %v1098
        %v1100 = vpop.f32.mrb[0].mxu0
        %1101 = vdwg.mxu0
        %v1102 = vsel %vm928, %v1099, -inf
        %1103 = vmax.xlane.f32.xlu0 %v1102
        %v1104 = vpop.xlane.xlu0 %1103
        %v1105 = vsub.f32 %v1099, %v1104
        %v1106 = vmul.f32 %v1105, 1.442695
        %v1107 = vpow.pop %v1106
        %v1108 = vsel %vm928, %v1107, 0.0
        %1109 = vadd.xlane.f32.xlu0 %v1108
        %v1110 = vpop.xlane.xlu0 %1109
        %v1111 = vrcp.pop %v1110
        %v1112 = vmul.f32 %v1107, %v1111
        %s1113 = scalar_lea.vmem %s569, 8 [#allocation11]
        %1114 = vst.msk [vmem:[%s1113] sm:$0xff] %vm928, %v1112
        %1117 = vrot.lane.b32.xlu0 %v1016, 120
        %v1118 = vpop.permute.xlu0 %1117
        %1119 = vrot.lane.b32.xlu0 %v1017, 120
        %v1120 = vpop.permute.xlu0 %1119
        %v1124 = vsel %vm928, %v1112, 0
        %1126 = vmatprep.subr.mxu0 0.0
        %1127 = vmatpush1.msra.mxu0 %v1118
        %1128 = vmatprep.subr.mxu0 0.0
        %1129 = vmatpush1.msra.mxu0 %v1120
        %1130 = vmatprep.subr.mxu0 0.0
        %1131 = vmatpush1.msra.mxu0 0.0
        %1132 = vmatprep.subr.mxu0 0.0
        %1133 = vmatpush1.msra.mxu0 0.0
        %1134 = vmatprep.subr.mxu0 0.0
        %1135 = vmatpush1.msra.mxu0 0.0
        %1136 = vmatprep.subr.mxu0 0.0
        %1137 = vmatpush1.msra.mxu0 0.0
        %1138 = vmatprep.subr.mxu0 0.0
        %1139 = vmatpush1.msra.mxu0 0.0
        %1140 = vmatprep.subr.mxu0 0.0
        %1141 = vmatpush1.msra.mxu0 0.0
        %1142 = vmatprep.subr.mxu0 0.0
        %1143 = vmatpush1.msra.mxu0 0.0
        %1144 = vmatprep.subr.mxu0 0.0
        %1145 = vmatpush1.msra.mxu0 0.0
        %1146 = vmatprep.subr.mxu0 0.0
        %1147 = vmatpush1.msra.mxu0 0.0
        %1148 = vmatprep.subr.mxu0 0.0
        %1149 = vmatpush1.msra.mxu0 0.0
        %1150 = vmatprep.subr.mxu0 0.0
        %1151 = vmatpush1.msra.mxu0 0.0
        %1152 = vmatprep.subr.mxu0 0.0
        %1153 = vmatpush1.msra.mxu0 0.0
        %1154 = vmatprep.subr.mxu0 0.0
        %1155 = vmatpush1.msra.mxu0 0.0
        %1156 = vmatprep.subr.mxu0 0.0
        %1157 = vmatpush1.msra.mxu0 0.0
        %1158 = vmatprep.subr.mxu0 0.0
        %1159 = vmatpush1.msra.mxu0 0.0
        %1160 = vmatprep.subr.mxu0 0.0
        %1161 = vmatpush1.msra.mxu0 0.0
        %1162 = vmatprep.subr.mxu0 0.0
        %1163 = vmatpush1.msra.mxu0 0.0
        %1164 = vmatprep.subr.mxu0 0.0
        %1165 = vmatpush1.msra.mxu0 0.0
        %1166 = vmatprep.subr.mxu0 0.0
        %1167 = vmatpush1.msra.mxu0 0.0
        %1168 = vmatprep.subr.mxu0 0.0
        %1169 = vmatpush1.msra.mxu0 0.0
        %1170 = vmatprep.subr.mxu0 0.0
        %1171 = vmatpush1.msra.mxu0 0.0
        %1172 = vmatprep.subr.mxu0 0.0
        %1173 = vmatpush1.msra.mxu0 0.0
        %1174 = vmatprep.subr.mxu0 0.0
        %1175 = vmatpush1.msra.mxu0 0.0
        %1176 = vmatprep.subr.mxu0 0.0
        %1177 = vmatpush1.msra.mxu0 0.0
        %1178 = vmatprep.subr.mxu0 0.0
        %1179 = vmatpush1.msra.mxu0 0.0
        %1180 = vmatprep.subr.mxu0 0.0
        %1181 = vmatpush1.msra.mxu0 0.0
        %1182 = vmatprep.subr.mxu0 0.0
        %1183 = vmatpush1.msra.mxu0 0.0
        %1184 = vmatprep.subr.mxu0 0.0
        %1185 = vmatpush1.msra.mxu0 0.0
        %1186 = vmatprep.subr.mxu0 0.0
        %1187 = vmatpush1.msra.mxu0 0.0
        %1188 = vmatprep.subr.mxu0 0.0
        %1189 = vmatpush1.msra.mxu0 0.0
        %1190 = vmatprep.mubr.f32.mxu0 0.0
        %1191 = vmatmul.mubr.f32.gmra.mrb[0].mxu0 %v1124
        %v1192 = vpop.f32.mrb[0].mxu0
        %v1193 = vadd.f32 0.0, %v1192
        %v1194 = vpop.f32.mrb[0].mxu0
        %1195 = vdwg.mxu0
        %v1196 = vld [vmem:[#allocation2] sm:$0xff]
        %v1197 = vld [vmem:[#allocation2 + $0x8] sm:$0xff]
        %v1198 = vld [vmem:[#allocation3] sm:$0xff]
        %v1199 = vld [vmem:[#allocation3 + $0x8] sm:$0xff]
        %1200 = vrot.lane.b32.xlu0 %v834, 112
        %v1201 = vpop.permute.xlu0 %1200
        %1204 = vrot.lane.b32.xlu0 %v1196, 112
        %v1205 = vpop.permute.xlu0 %1204
        %1206 = vrot.lane.b32.xlu0 %v1197, 112
        %v1207 = vpop.permute.xlu0 %1206
        %v1208 = vsel %vm848, %v1201, 0
        %v1210 = vsel %vm848, %v1205, 0
        %v1212 = vsel %vm848, %v1207, 0
        %1214 = vmatprep.subr.mxu0 0.0
        %1215 = vmatpush1.xpose.msra.mxu0 %v1210
        %1216 = vmatprep.subr.mxu0 0.0
        %1217 = vmatpush1.xpose.msra.mxu0 %v1212
        %1218 = vmatprep.subr.mxu0 0.0
        %1219 = vmatpush1.xpose.msra.mxu0 0.0
        %1220 = vmatprep.subr.mxu0 0.0
        %1221 = vmatpush1.xpose.msra.mxu0 0.0
        %1222 = vmatprep.subr.mxu0 0.0
        %1223 = vmatpush1.xpose.msra.mxu0 0.0
        %1224 = vmatprep.subr.mxu0 0.0
        %1225 = vmatpush1.xpose.msra.mxu0 0.0
        %1226 = vmatprep.subr.mxu0 0.0
        %1227 = vmatpush1.xpose.msra.mxu0 0.0
        %1228 = vmatprep.subr.mxu0 0.0
        %1229 = vmatpush1.xpose.msra.mxu0 0.0
        %1230 = vmatprep.subr.mxu0 0.0
        %1231 = vmatpush1.xpose.msra.mxu0 0.0
        %1232 = vmatprep.subr.mxu0 0.0
        %1233 = vmatpush1.xpose.msra.mxu0 0.0
        %1234 = vmatprep.subr.mxu0 0.0
        %1235 = vmatpush1.xpose.msra.mxu0 0.0
        %1236 = vmatprep.subr.mxu0 0.0
        %1237 = vmatpush1.xpose.msra.mxu0 0.0
        %1238 = vmatprep.subr.mxu0 0.0
        %1239 = vmatpush1.xpose.msra.mxu0 0.0
        %1240 = vmatprep.subr.mxu0 0.0
        %1241 = vmatpush1.xpose.msra.mxu0 0.0
        %1242 = vmatprep.subr.mxu0 0.0
        %1243 = vmatpush1.xpose.msra.mxu0 0.0
        %1244 = vmatprep.subr.mxu0 0.0
        %1245 = vmatpush1.xpose.msra.mxu0 0.0
        %1246 = vmatprep.subr.mxu0 0.0
        %1247 = vmatpush1.xpose.msra.mxu0 0.0
        %1248 = vmatprep.subr.mxu0 0.0
        %1249 = vmatpush1.xpose.msra.mxu0 0.0
        %1250 = vmatprep.subr.mxu0 0.0
        %1251 = vmatpush1.xpose.msra.mxu0 0.0
        %1252 = vmatprep.subr.mxu0 0.0
        %1253 = vmatpush1.xpose.msra.mxu0 0.0
        %1254 = vmatprep.subr.mxu0 0.0
        %1255 = vmatpush1.xpose.msra.mxu0 0.0
        %1256 = vmatprep.subr.mxu0 0.0
        %1257 = vmatpush1.xpose.msra.mxu0 0.0
        %1258 = vmatprep.subr.mxu0 0.0
        %1259 = vmatpush1.xpose.msra.mxu0 0.0
        %1260 = vmatprep.subr.mxu0 0.0
        %1261 = vmatpush1.xpose.msra.mxu0 0.0
        %1262 = vmatprep.subr.mxu0 0.0
        %1263 = vmatpush1.xpose.msra.mxu0 0.0
        %1264 = vmatprep.subr.mxu0 0.0
        %1265 = vmatpush1.xpose.msra.mxu0 0.0
        %1266 = vmatprep.subr.mxu0 0.0
        %1267 = vmatpush1.xpose.msra.mxu0 0.0
        %1268 = vmatprep.subr.mxu0 0.0
        %1269 = vmatpush1.xpose.msra.mxu0 0.0
        %1270 = vmatprep.subr.mxu0 0.0
        %1271 = vmatpush1.xpose.msra.mxu0 0.0
        %1272 = vmatprep.subr.mxu0 0.0
        %1273 = vmatpush1.xpose.msra.mxu0 0.0
        %1274 = vmatprep.subr.mxu0 0.0
        %1275 = vmatpush1.xpose.msra.mxu0 0.0
        %1276 = vmatprep.subr.mxu0 0.0
        %1277 = vmatpush1.xpose.msra.mxu0 0.0
        %1278 = vmatprep.mubr.f32.mxu0 0.0
        %1279 = vmatmul.mubr.f32.gmra.mrb[0].mxu0 %v1208
        %v1280 = vpop.f32.mrb[0].mxu0
        %v1281 = vadd.f32 %v846, %v1280
        %v1282 = vpop.f32.mrb[0].mxu0
        %1283 = vdwg.mxu0
        %v1284 = vsel %vm928, %v1281, -inf
        %1285 = vmax.xlane.f32.xlu0 %v1284
        %v1286 = vpop.xlane.xlu0 %1285
        %v1287 = vsub.f32 %v1281, %v1286
        %v1288 = vmul.f32 %v1287, 1.442695
        %v1289 = vpow.pop %v1288
        %v1290 = vsel %vm928, %v1289, 0.0
        %1291 = vadd.xlane.f32.xlu0 %v1290
        %v1292 = vpop.xlane.xlu0 %1291
        %v1293 = vrcp.pop %v1292
        %v1294 = vmul.f32 %v1289, %v1293
        %s1295 = scalar_lea.vmem %s569, 16 [#allocation11]
        %1296 = vst.msk [vmem:[%s1295] sm:$0xff] %vm928, %v1294
        %1299 = vrot.lane.b32.xlu0 %v1198, 112
        %v1300 = vpop.permute.xlu0 %1299
        %1301 = vrot.lane.b32.xlu0 %v1199, 112
        %v1302 = vpop.permute.xlu0 %1301
        %v1306 = vsel %vm928, %v1294, 0
        %1308 = vmatprep.subr.mxu0 0.0
        %1309 = vmatpush1.msra.mxu0 %v1300
        %1310 = vmatprep.subr.mxu0 0.0
        %1311 = vmatpush1.msra.mxu0 %v1302
        %1312 = vmatprep.subr.mxu0 0.0
        %1313 = vmatpush1.msra.mxu0 0.0
        %1314 = vmatprep.subr.mxu0 0.0
        %1315 = vmatpush1.msra.mxu0 0.0
        %1316 = vmatprep.subr.mxu0 0.0
        %1317 = vmatpush1.msra.mxu0 0.0
        %1318 = vmatprep.subr.mxu0 0.0
        %1319 = vmatpush1.msra.mxu0 0.0
        %1320 = vmatprep.subr.mxu0 0.0
        %1321 = vmatpush1.msra.mxu0 0.0
        %1322 = vmatprep.subr.mxu0 0.0
        %1323 = vmatpush1.msra.mxu0 0.0
        %1324 = vmatprep.subr.mxu0 0.0
        %1325 = vmatpush1.msra.mxu0 0.0
        %1326 = vmatprep.subr.mxu0 0.0
        %1327 = vmatpush1.msra.mxu0 0.0
        %1328 = vmatprep.subr.mxu0 0.0
        %1329 = vmatpush1.msra.mxu0 0.0
        %1330 = vmatprep.subr.mxu0 0.0
        %1331 = vmatpush1.msra.mxu0 0.0
        %1332 = vmatprep.subr.mxu0 0.0
        %1333 = vmatpush1.msra.mxu0 0.0
        %1334 = vmatprep.subr.mxu0 0.0
        %1335 = vmatpush1.msra.mxu0 0.0
        %1336 = vmatprep.subr.mxu0 0.0
        %1337 = vmatpush1.msra.mxu0 0.0
        %1338 = vmatprep.subr.mxu0 0.0
        %1339 = vmatpush1.msra.mxu0 0.0
        %1340 = vmatprep.subr.mxu0 0.0
        %1341 = vmatpush1.msra.mxu0 0.0
        %1342 = vmatprep.subr.mxu0 0.0
        %1343 = vmatpush1.msra.mxu0 0.0
        %1344 = vmatprep.subr.mxu0 0.0
        %1345 = vmatpush1.msra.mxu0 0.0
        %1346 = vmatprep.subr.mxu0 0.0
        %1347 = vmatpush1.msra.mxu0 0.0
        %1348 = vmatprep.subr.mxu0 0.0
        %1349 = vmatpush1.msra.mxu0 0.0
        %1350 = vmatprep.subr.mxu0 0.0
        %1351 = vmatpush1.msra.mxu0 0.0
        %1352 = vmatprep.subr.mxu0 0.0
        %1353 = vmatpush1.msra.mxu0 0.0
        %1354 = vmatprep.subr.mxu0 0.0
        %1355 = vmatpush1.msra.mxu0 0.0
        %1356 = vmatprep.subr.mxu0 0.0
        %1357 = vmatpush1.msra.mxu0 0.0
        %1358 = vmatprep.subr.mxu0 0.0
        %1359 = vmatpush1.msra.mxu0 0.0
        %1360 = vmatprep.subr.mxu0 0.0
        %1361 = vmatpush1.msra.mxu0 0.0
        %1362 = vmatprep.subr.mxu0 0.0
        %1363 = vmatpush1.msra.mxu0 0.0
        %1364 = vmatprep.subr.mxu0 0.0
        %1365 = vmatpush1.msra.mxu0 0.0
        %1366 = vmatprep.subr.mxu0 0.0
        %1367 = vmatpush1.msra.mxu0 0.0
        %1368 = vmatprep.subr.mxu0 0.0
        %1369 = vmatpush1.msra.mxu0 0.0
        %1370 = vmatprep.subr.mxu0 0.0
        %1371 = vmatpush1.msra.mxu0 0.0
        %1372 = vmatprep.mubr.f32.mxu0 0.0
        %1373 = vmatmul.mubr.f32.gmra.mrb[0].mxu0 %v1306
        %v1374 = vpop.f32.mrb[0].mxu0
        %v1375 = vadd.f32 0.0, %v1374
        %v1376 = vpop.f32.mrb[0].mxu0
        %1377 = vdwg.mxu0
        %v1378 = vld [vmem:[#allocation2] sm:$0xff]
        %v1379 = vld [vmem:[#allocation2 + $0x8] sm:$0xff]
        %v1380 = vld [vmem:[#allocation3] sm:$0xff]
        %v1381 = vld [vmem:[#allocation3 + $0x8] sm:$0xff]
        %1382 = vrot.lane.b32.xlu0 %v834, 104
        %v1383 = vpop.permute.xlu0 %1382
        %1386 = vrot.lane.b32.xlu0 %v1378, 104
        %v1387 = vpop.permute.xlu0 %1386
        %1388 = vrot.lane.b32.xlu0 %v1379, 104
        %v1389 = vpop.permute.xlu0 %1388
        %v1390 = vsel %vm848, %v1383, 0
        %v1392 = vsel %vm848, %v1387, 0
        %v1394 = vsel %vm848, %v1389, 0
        %1396 = vmatprep.subr.mxu0 0.0
        %1397 = vmatpush1.xpose.msra.mxu0 %v1392
        %1398 = vmatprep.subr.mxu0 0.0
        %1399 = vmatpush1.xpose.msra.mxu0 %v1394
        %1400 = vmatprep.subr.mxu0 0.0
        %1401 = vmatpush1.xpose.msra.mxu0 0.0
        %1402 = vmatprep.subr.mxu0 0.0
        %1403 = vmatpush1.xpose.msra.mxu0 0.0
        %1404 = vmatprep.subr.mxu0 0.0
        %1405 = vmatpush1.xpose.msra.mxu0 0.0
        %1406 = vmatprep.subr.mxu0 0.0
        %1407 = vmatpush1.xpose.msra.mxu0 0.0
        %1408 = vmatprep.subr.mxu0 0.0
        %1409 = vmatpush1.xpose.msra.mxu0 0.0
        %1410 = vmatprep.subr.mxu0 0.0
        %1411 = vmatpush1.xpose.msra.mxu0 0.0
        %1412 = vmatprep.subr.mxu0 0.0
        %1413 = vmatpush1.xpose.msra.mxu0 0.0
        %1414 = vmatprep.subr.mxu0 0.0
        %1415 = vmatpush1.xpose.msra.mxu0 0.0
        %1416 = vmatprep.subr.mxu0 0.0
        %1417 = vmatpush1.xpose.msra.mxu0 0.0
        %1418 = vmatprep.subr.mxu0 0.0
        %1419 = vmatpush1.xpose.msra.mxu0 0.0
        %1420 = vmatprep.subr.mxu0 0.0
        %1421 = vmatpush1.xpose.msra.mxu0 0.0
        %1422 = vmatprep.subr.mxu0 0.0
        %1423 = vmatpush1.xpose.msra.mxu0 0.0
        %1424 = vmatprep.subr.mxu0 0.0
        %1425 = vmatpush1.xpose.msra.mxu0 0.0
        %1426 = vmatprep.subr.mxu0 0.0
        %1427 = vmatpush1.xpose.msra.mxu0 0.0
        %1428 = vmatprep.subr.mxu0 0.0
        %1429 = vmatpush1.xpose.msra.mxu0 0.0
        %1430 = vmatprep.subr.mxu0 0.0
        %1431 = vmatpush1.xpose.msra.mxu0 0.0
        %1432 = vmatprep.subr.mxu0 0.0
        %1433 = vmatpush1.xpose.msra.mxu0 0.0
        %1434 = vmatprep.subr.mxu0 0.0
        %1435 = vmatpush1.xpose.msra.mxu0 0.0
        %1436 = vmatprep.subr.mxu0 0.0
        %1437 = vmatpush1.xpose.msra.mxu0 0.0
        %1438 = vmatprep.subr.mxu0 0.0
        %1439 = vmatpush1.xpose.msra.mxu0 0.0
        %1440 = vmatprep.subr.mxu0 0.0
        %1441 = vmatpush1.xpose.msra.mxu0 0.0
        %1442 = vmatprep.subr.mxu0 0.0
        %1443 = vmatpush1.xpose.msra.mxu0 0.0
        %1444 = vmatprep.subr.mxu0 0.0
        %1445 = vmatpush1.xpose.msra.mxu0 0.0
        %1446 = vmatprep.subr.mxu0 0.0
        %1447 = vmatpush1.xpose.msra.mxu0 0.0
        %1448 = vmatprep.subr.mxu0 0.0
        %1449 = vmatpush1.xpose.msra.mxu0 0.0
        %1450 = vmatprep.subr.mxu0 0.0
        %1451 = vmatpush1.xpose.msra.mxu0 0.0
        %1452 = vmatprep.subr.mxu0 0.0
        %1453 = vmatpush1.xpose.msra.mxu0 0.0
        %1454 = vmatprep.subr.mxu0 0.0
        %1455 = vmatpush1.xpose.msra.mxu0 0.0
        %1456 = vmatprep.subr.mxu0 0.0
        %1457 = vmatpush1.xpose.msra.mxu0 0.0
        %1458 = vmatprep.subr.mxu0 0.0
        %1459 = vmatpush1.xpose.msra.mxu0 0.0
        %1460 = vmatprep.mubr.f32.mxu0 0.0
        %1461 = vmatmul.mubr.f32.gmra.mrb[0].mxu0 %v1390
        %v1462 = vpop.f32.mrb[0].mxu0
        %v1463 = vadd.f32 %v846, %v1462
        %v1464 = vpop.f32.mrb[0].mxu0
        %1465 = vdwg.mxu0
        %v1466 = vsel %vm928, %v1463, -inf
        %1467 = vmax.xlane.f32.xlu0 %v1466
        %v1468 = vpop.xlane.xlu0 %1467
        %v1469 = vsub.f32 %v1463, %v1468
        %v1470 = vmul.f32 %v1469, 1.442695
        %v1471 = vpow.pop %v1470
        %v1472 = vsel %vm928, %v1471, 0.0
        %1473 = vadd.xlane.f32.xlu0 %v1472
        %v1474 = vpop.xlane.xlu0 %1473
        %v1475 = vrcp.pop %v1474
        %v1476 = vmul.f32 %v1471, %v1475
        %s1477 = scalar_lea.vmem %s569, 24 [#allocation11]
        %1478 = vst.msk [vmem:[%s1477] sm:$0xff] %vm928, %v1476
        %1481 = vrot.lane.b32.xlu0 %v1380, 104
        %v1482 = vpop.permute.xlu0 %1481
        %1483 = vrot.lane.b32.xlu0 %v1381, 104
        %v1484 = vpop.permute.xlu0 %1483
        %v1488 = vsel %vm928, %v1476, 0
        %1490 = vmatprep.subr.mxu0 0.0
        %1491 = vmatpush1.msra.mxu0 %v1482
        %1492 = vmatprep.subr.mxu0 0.0
        %1493 = vmatpush1.msra.mxu0 %v1484
        %1494 = vmatprep.subr.mxu0 0.0
        %1495 = vmatpush1.msra.mxu0 0.0
        %1496 = vmatprep.subr.mxu0 0.0
        %1497 = vmatpush1.msra.mxu0 0.0
        %1498 = vmatprep.subr.mxu0 0.0
        %1499 = vmatpush1.msra.mxu0 0.0
        %1500 = vmatprep.subr.mxu0 0.0
        %1501 = vmatpush1.msra.mxu0 0.0
        %1502 = vmatprep.subr.mxu0 0.0
        %1503 = vmatpush1.msra.mxu0 0.0
        %1504 = vmatprep.subr.mxu0 0.0
        %1505 = vmatpush1.msra.mxu0 0.0
        %1506 = vmatprep.subr.mxu0 0.0
        %1507 = vmatpush1.msra.mxu0 0.0
        %1508 = vmatprep.subr.mxu0 0.0
        %1509 = vmatpush1.msra.mxu0 0.0
        %1510 = vmatprep.subr.mxu0 0.0
        %1511 = vmatpush1.msra.mxu0 0.0
        %1512 = vmatprep.subr.mxu0 0.0
        %1513 = vmatpush1.msra.mxu0 0.0
        %1514 = vmatprep.subr.mxu0 0.0
        %1515 = vmatpush1.msra.mxu0 0.0
        %1516 = vmatprep.subr.mxu0 0.0
        %1517 = vmatpush1.msra.mxu0 0.0
        %1518 = vmatprep.subr.mxu0 0.0
        %1519 = vmatpush1.msra.mxu0 0.0
        %1520 = vmatprep.subr.mxu0 0.0
        %1521 = vmatpush1.msra.mxu0 0.0
        %1522 = vmatprep.subr.mxu0 0.0
        %1523 = vmatpush1.msra.mxu0 0.0
        %1524 = vmatprep.subr.mxu0 0.0
        %1525 = vmatpush1.msra.mxu0 0.0
        %1526 = vmatprep.subr.mxu0 0.0
        %1527 = vmatpush1.msra.mxu0 0.0
        %1528 = vmatprep.subr.mxu0 0.0
        %1529 = vmatpush1.msra.mxu0 0.0
        %1530 = vmatprep.subr.mxu0 0.0
        %1531 = vmatpush1.msra.mxu0 0.0
        %1532 = vmatprep.subr.mxu0 0.0
        %1533 = vmatpush1.msra.mxu0 0.0
        %1534 = vmatprep.subr.mxu0 0.0
        %1535 = vmatpush1.msra.mxu0 0.0
        %1536 = vmatprep.subr.mxu0 0.0
        %1537 = vmatpush1.msra.mxu0 0.0
        %1538 = vmatprep.subr.mxu0 0.0
        %1539 = vmatpush1.msra.mxu0 0.0
        %1540 = vmatprep.subr.mxu0 0.0
        %1541 = vmatpush1.msra.mxu0 0.0
        %1542 = vmatprep.subr.mxu0 0.0
        %1543 = vmatpush1.msra.mxu0 0.0
        %1544 = vmatprep.subr.mxu0 0.0
        %1545 = vmatpush1.msra.mxu0 0.0
        %1546 = vmatprep.subr.mxu0 0.0
        %1547 = vmatpush1.msra.mxu0 0.0
        %1548 = vmatprep.subr.mxu0 0.0
        %1549 = vmatpush1.msra.mxu0 0.0
        %1550 = vmatprep.subr.mxu0 0.0
        %1551 = vmatpush1.msra.mxu0 0.0
        %1552 = vmatprep.subr.mxu0 0.0
        %1553 = vmatpush1.msra.mxu0 0.0
        %1554 = vmatprep.mubr.f32.mxu0 0.0
        %1555 = vmatmul.mubr.f32.gmra.mrb[0].mxu0 %v1488
        %v1556 = vpop.f32.mrb[0].mxu0
        %v1557 = vadd.f32 0.0, %v1556
        %v1558 = vpop.f32.mrb[0].mxu0
        %1559 = vdwg.mxu0
        %1561 = vrot.lane.b32.xlu0 %v1193, 8
        %v1562 = vpop.permute.xlu0 %1561
        %1565 = vrot.lane.b32.xlu0 %v1375, 16
        %v1566 = vpop.permute.xlu0 %1565
        %1569 = vrot.lane.b32.xlu0 %v1557, 24
        %v1570 = vpop.permute.xlu0 %1569
        %v1572 = vsel %vm848, %v1011, %v1562
        %v1573 = vsel %vm928, %v1572, %v1566
        %vm1574 = vcmask 195584
        %v1575 = vsel %vm1574, %v1573, %v1570
        %v1576 = vld [vmem:[#allocation7] sm:$0xff]
        %v1577 = vld [vmem:[#allocation7 + $0x8] sm:$0xff]
        %v1578 = vld [vmem:[#allocation7 + $0x10] sm:$0xff]
        %v1579 = vld [vmem:[#allocation7 + $0x18] sm:$0xff]
        %v1581 = vsel %vm760, %v1575, 0
        %1583 = vmatprep.subr.mxu0 0.0
        %1584 = vmatpush1.msra.mxu0 %v1576
        %1585 = vmatprep.subr.mxu0 0.0
        %1586 = vmatpush1.msra.mxu0 %v1577
        %1587 = vmatprep.subr.mxu0 0.0
        %1588 = vmatpush1.msra.mxu0 %v1578
        %1589 = vmatprep.subr.mxu0 0.0
        %1590 = vmatpush1.msra.mxu0 %v1579
        %1591 = vmatprep.subr.mxu0 0.0
        %1592 = vmatpush1.msra.mxu0 0.0
        %1593 = vmatprep.subr.mxu0 0.0
        %1594 = vmatpush1.msra.mxu0 0.0
        %1595 = vmatprep.subr.mxu0 0.0
        %1596 = vmatpush1.msra.mxu0 0.0
        %1597 = vmatprep.subr.mxu0 0.0
        %1598 = vmatpush1.msra.mxu0 0.0
        %1599 = vmatprep.subr.mxu0 0.0
        %1600 = vmatpush1.msra.mxu0 0.0
        %1601 = vmatprep.subr.mxu0 0.0
        %1602 = vmatpush1.msra.mxu0 0.0
        %1603 = vmatprep.subr.mxu0 0.0
        %1604 = vmatpush1.msra.mxu0 0.0
        %1605 = vmatprep.subr.mxu0 0.0
        %1606 = vmatpush1.msra.mxu0 0.0
        %1607 = vmatprep.subr.mxu0 0.0
        %1608 = vmatpush1.msra.mxu0 0.0
        %1609 = vmatprep.subr.mxu0 0.0
        %1610 = vmatpush1.msra.mxu0 0.0
        %1611 = vmatprep.subr.mxu0 0.0
        %1612 = vmatpush1.msra.mxu0 0.0
        %1613 = vmatprep.subr.mxu0 0.0
        %1614 = vmatpush1.msra.mxu0 0.0
        %1615 = vmatprep.subr.mxu0 0.0
        %1616 = vmatpush1.msra.mxu0 0.0
        %1617 = vmatprep.subr.mxu0 0.0
        %1618 = vmatpush1.msra.mxu0 0.0
        %1619 = vmatprep.subr.mxu0 0.0
        %1620 = vmatpush1.msra.mxu0 0.0
        %1621 = vmatprep.subr.mxu0 0.0
        %1622 = vmatpush1.msra.mxu0 0.0
        %1623 = vmatprep.subr.mxu0 0.0
        %1624 = vmatpush1.msra.mxu0 0.0
        %1625 = vmatprep.subr.mxu0 0.0
        %1626 = vmatpush1.msra.mxu0 0.0
        %1627 = vmatprep.subr.mxu0 0.0
        %1628 = vmatpush1.msra.mxu0 0.0
        %1629 = vmatprep.subr.mxu0 0.0
        %1630 = vmatpush1.msra.mxu0 0.0
        %1631 = vmatprep.subr.mxu0 0.0
        %1632 = vmatpush1.msra.mxu0 0.0
        %1633 = vmatprep.subr.mxu0 0.0
        %1634 = vmatpush1.msra.mxu0 0.0
        %1635 = vmatprep.subr.mxu0 0.0
        %1636 = vmatpush1.msra.mxu0 0.0
        %1637 = vmatprep.subr.mxu0 0.0
        %1638 = vmatpush1.msra.mxu0 0.0
        %1639 = vmatprep.subr.mxu0 0.0
        %1640 = vmatpush1.msra.mxu0 0.0
        %1641 = vmatprep.subr.mxu0 0.0
        %1642 = vmatpush1.msra.mxu0 0.0
        %1643 = vmatprep.subr.mxu0 0.0
        %1644 = vmatpush1.msra.mxu0 0.0
        %1645 = vmatprep.subr.mxu0 0.0
        %1646 = vmatpush1.msra.mxu0 0.0
        %1647 = vmatprep.mubr.f32.mxu0 0.0
        %1648 = vmatmul.mubr.f32.gmra.mrb[0].mxu0 %v1581
        %v1649 = vpop.f32.mrb[0].mxu0
        %v1650 = vadd.f32 %v755, %v1649
        %v1651 = vpop.f32.mrb[0].mxu0
        %1652 = vdwg.mxu0
        %v1653 = vld [vmem:[%s6] sm:$0x1]
        %v1654 = vld [vmem:[%s7] sm:$0x1]
        %v1655 = vsel %vm760, %v1650, 0.0
        %1656 = vadd.xlane.f32.xlu0 %v1655
        %v1657 = vpop.xlane.xlu0 %1656
        %v1658 = vrcp.pop 32.0
        %v1659 = vmul.f32 %v1657, %v1658
        %v1660 = vsub.f32 %v1650, %v1659
        %v1661 = vmul.f32 %v1660, %v1660
        %v1662 = vsel %vm760, %v1661, 0.0
        %1663 = vadd.xlane.f32.xlu0 %v1662
        %v1664 = vpop.xlane.xlu0 %1663
        %v1665 = vmul.f32 %v1664, %v1658
        %v1666 = vadd.f32 %v1665, 1e-06
        %v1667 = vrsqrt.pop %v1666
        %v1668 = vmul.f32 %v1660, %v1667
        %v1670 = vlaneseq
        %v1671 = vshrl.u32 %v1670, 7
        %v1672 = vsub.s32 0, %v1671
        %v1673 = vrot.slane %v1653, %v1672
        %v1675 = vmul.f32 %v1668, %v1673
        %v1677 = vlaneseq
        %v1678 = vshrl.u32 %v1677, 7
        %v1679 = vsub.s32 0, %v1678
        %v1680 = vrot.slane %v1654, %v1679
        %v1682 = vadd.f32 %v1675, %v1680
        %v1683 = vld [vmem:[#allocation9] sm:$0xff]
        %v1684 = vld [vmem:[#allocation9 + $0x8] sm:$0xff]
        %v1685 = vld [vmem:[#allocation9 + $0x10] sm:$0xff]
        %v1686 = vld [vmem:[#allocation9 + $0x18] sm:$0xff]
        %v1687 = vld [vmem:[%s9] sm:$0x1]
        %v1689 = vlaneseq
        %v1690 = vshrl.u32 %v1689, 7
        %v1691 = vsub.s32 0, %v1690
        %v1692 = vrot.slane %v1687, %v1691
        %v1695 = vsel %vm760, %v1682, 0
        %1697 = vmatprep.subr.mxu0 0.0
        %1698 = vmatpush1.msra.mxu0 %v1683
        %1699 = vmatprep.subr.mxu0 0.0
        %1700 = vmatpush1.msra.mxu0 %v1684
        %1701 = vmatprep.subr.mxu0 0.0
        %1702 = vmatpush1.msra.mxu0 %v1685
        %1703 = vmatprep.subr.mxu0 0.0
        %1704 = vmatpush1.msra.mxu0 %v1686
        %1705 = vmatprep.subr.mxu0 0.0
        %1706 = vmatpush1.msra.mxu0 0.0
        %1707 = vmatprep.subr.mxu0 0.0
        %1708 = vmatpush1.msra.mxu0 0.0
        %1709 = vmatprep.subr.mxu0 0.0
        %1710 = vmatpush1.msra.mxu0 0.0
        %1711 = vmatprep.subr.mxu0 0.0
        %1712 = vmatpush1.msra.mxu0 0.0
        %1713 = vmatprep.subr.mxu0 0.0
        %1714 = vmatpush1.msra.mxu0 0.0
        %1715 = vmatprep.subr.mxu0 0.0
        %1716 = vmatpush1.msra.mxu0 0.0
        %1717 = vmatprep.subr.mxu0 0.0
        %1718 = vmatpush1.msra.mxu0 0.0
        %1719 = vmatprep.subr.mxu0 0.0
        %1720 = vmatpush1.msra.mxu0 0.0
        %1721 = vmatprep.subr.mxu0 0.0
        %1722 = vmatpush1.msra.mxu0 0.0
        %1723 = vmatprep.subr.mxu0 0.0
        %1724 = vmatpush1.msra.mxu0 0.0
        %1725 = vmatprep.subr.mxu0 0.0
        %1726 = vmatpush1.msra.mxu0 0.0
        %1727 = vmatprep.subr.mxu0 0.0
        %1728 = vmatpush1.msra.mxu0 0.0
        %1729 = vmatprep.subr.mxu0 0.0
        %1730 = vmatpush1.msra.mxu0 0.0
        %1731 = vmatprep.subr.mxu0 0.0
        %1732 = vmatpush1.msra.mxu0 0.0
        %1733 = vmatprep.subr.mxu0 0.0
        %1734 = vmatpush1.msra.mxu0 0.0
        %1735 = vmatprep.subr.mxu0 0.0
        %1736 = vmatpush1.msra.mxu0 0.0
        %1737 = vmatprep.subr.mxu0 0.0
        %1738 = vmatpush1.msra.mxu0 0.0
        %1739 = vmatprep.subr.mxu0 0.0
        %1740 = vmatpush1.msra.mxu0 0.0
        %1741 = vmatprep.subr.mxu0 0.0
        %1742 = vmatpush1.msra.mxu0 0.0
        %1743 = vmatprep.subr.mxu0 0.0
        %1744 = vmatpush1.msra.mxu0 0.0
        %1745 = vmatprep.subr.mxu0 0.0
        %1746 = vmatpush1.msra.mxu0 0.0
        %1747 = vmatprep.subr.mxu0 0.0
        %1748 = vmatpush1.msra.mxu0 0.0
        %1749 = vmatprep.subr.mxu0 0.0
        %1750 = vmatpush1.msra.mxu0 0.0
        %1751 = vmatprep.subr.mxu0 0.0
        %1752 = vmatpush1.msra.mxu0 0.0
        %1753 = vmatprep.subr.mxu0 0.0
        %1754 = vmatpush1.msra.mxu0 0.0
        %1755 = vmatprep.subr.mxu0 0.0
        %1756 = vmatpush1.msra.mxu0 0.0
        %1757 = vmatprep.subr.mxu0 0.0
        %1758 = vmatpush1.msra.mxu0 0.0
        %1759 = vmatprep.subr.mxu0 0.0
        %1760 = vmatpush1.msra.mxu0 0.0
        %1761 = vmatprep.mubr.f32.mxu0 0.0
        %1762 = vmatmul.mubr.f32.gmra.mrb[0].mxu0 %v1695
        %v1763 = vpop.f32.mrb[0].mxu0
        %v1764 = vadd.f32 %v1692, %v1763
        %v1765 = vpop.f32.mrb[0].mxu0
        %1766 = vdwg.mxu0
        %v1767 = vmax.f32 %v1764, 0.0
        %v1768 = vld [vmem:[%s10] sm:$0xff]
        %v1769 = vld [vmem:[%s10 + $0x8] sm:$0xff]
        %v1770 = vld [vmem:[%s10 + $0x10] sm:$0xff]
        %v1771 = vld [vmem:[%s10 + $0x18] sm:$0xff]
        %v1772 = vld [vmem:[%s10 + $0x20] sm:$0xff]
        %v1773 = vld [vmem:[%s10 + $0x28] sm:$0xff]
        %v1774 = vld [vmem:[%s10 + $0x30] sm:$0xff]
        %v1775 = vld [vmem:[%s10 + $0x38] sm:$0xff]
        %v1776 = vld [vmem:[%s11] sm:$0x1]
        %v1778 = vlaneseq
        %v1779 = vshrl.u32 %v1778, 7
        %v1780 = vsub.s32 0, %v1779
        %v1781 = vrot.slane %v1776, %v1780
        %vm1783 = vcmask 523264
        %v1785 = vsel %vm1783, %v1767, 0
        %1787 = vmatprep.subr.mxu0 0.0
        %1788 = vmatpush1.msra.mxu0 %v1768
        %1789 = vmatprep.subr.mxu0 0.0
        %1790 = vmatpush1.msra.mxu0 %v1769
        %1791 = vmatprep.subr.mxu0 0.0
        %1792 = vmatpush1.msra.mxu0 %v1770
        %1793 = vmatprep.subr.mxu0 0.0
        %1794 = vmatpush1.msra.mxu0 %v1771
        %1795 = vmatprep.subr.mxu0 0.0
        %1796 = vmatpush1.msra.mxu0 %v1772
        %1797 = vmatprep.subr.mxu0 0.0
        %1798 = vmatpush1.msra.mxu0 %v1773
        %1799 = vmatprep.subr.mxu0 0.0
        %1800 = vmatpush1.msra.mxu0 %v1774
        %1801 = vmatprep.subr.mxu0 0.0
        %1802 = vmatpush1.msra.mxu0 %v1775
        %1803 = vmatprep.subr.mxu0 0.0
        %1804 = vmatpush1.msra.mxu0 0.0
        %1805 = vmatprep.subr.mxu0 0.0
        %1806 = vmatpush1.msra.mxu0 0.0
        %1807 = vmatprep.subr.mxu0 0.0
        %1808 = vmatpush1.msra.mxu0 0.0
        %1809 = vmatprep.subr.mxu0 0.0
        %1810 = vmatpush1.msra.mxu0 0.0
        %1811 = vmatprep.subr.mxu0 0.0
        %1812 = vmatpush1.msra.mxu0 0.0
        %1813 = vmatprep.subr.mxu0 0.0
        %1814 = vmatpush1.msra.mxu0 0.0
        %1815 = vmatprep.subr.mxu0 0.0
        %1816 = vmatpush1.msra.mxu0 0.0
        %1817 = vmatprep.subr.mxu0 0.0
        %1818 = vmatpush1.msra.mxu0 0.0
        %1819 = vmatprep.subr.mxu0 0.0
        %1820 = vmatpush1.msra.mxu0 0.0
        %1821 = vmatprep.subr.mxu0 0.0
        %1822 = vmatpush1.msra.mxu0 0.0
        %1823 = vmatprep.subr.mxu0 0.0
        %1824 = vmatpush1.msra.mxu0 0.0
        %1825 = vmatprep.subr.mxu0 0.0
        %1826 = vmatpush1.msra.mxu0 0.0
        %1827 = vmatprep.subr.mxu0 0.0
        %1828 = vmatpush1.msra.mxu0 0.0
        %1829 = vmatprep.subr.mxu0 0.0
        %1830 = vmatpush1.msra.mxu0 0.0
        %1831 = vmatprep.subr.mxu0 0.0
        %1832 = vmatpush1.msra.mxu0 0.0
        %1833 = vmatprep.subr.mxu0 0.0
        %1834 = vmatpush1.msra.mxu0 0.0
        %1835 = vmatprep.subr.mxu0 0.0
        %1836 = vmatpush1.msra.mxu0 0.0
        %1837 = vmatprep.subr.mxu0 0.0
        %1838 = vmatpush1.msra.mxu0 0.0
        %1839 = vmatprep.subr.mxu0 0.0
        %1840 = vmatpush1.msra.mxu0 0.0
        %1841 = vmatprep.subr.mxu0 0.0
        %1842 = vmatpush1.msra.mxu0 0.0
        %1843 = vmatprep.subr.mxu0 0.0
        %1844 = vmatpush1.msra.mxu0 0.0
        %1845 = vmatprep.subr.mxu0 0.0
        %1846 = vmatpush1.msra.mxu0 0.0
        %1847 = vmatprep.subr.mxu0 0.0
        %1848 = vmatpush1.msra.mxu0 0.0
        %1849 = vmatprep.subr.mxu0 0.0
        %1850 = vmatpush1.msra.mxu0 0.0
        %1851 = vmatprep.mubr.f32.mxu0 0.0
        %1852 = vmatmul.mubr.f32.gmra.mrb[0].mxu0 %v1785
        %v1853 = vpop.f32.mrb[0].mxu0
        %v1854 = vadd.f32 %v1781, %v1853
        %v1855 = vpop.f32.mrb[0].mxu0
        %1856 = vdwg.mxu0
        %v1857 = vadd.f32 %v1854, %v1682
        %v1858 = vld [vmem:[%s12] sm:$0x1]
        %v1859 = vld [vmem:[%s13] sm:$0x1]
        %v1860 = vsel %vm760, %v1857, 0.0
        %1861 = vadd.xlane.f32.xlu0 %v1860
        %v1862 = vpop.xlane.xlu0 %1861
        %v1863 = vmul.f32 %v1862, %v1658
        %v1864 = vsub.f32 %v1857, %v1863
        %v1865 = vmul.f32 %v1864, %v1864
        %v1866 = vsel %vm760, %v1865, 0.0
        %1867 = vadd.xlane.f32.xlu0 %v1866
        %v1868 = vpop.xlane.xlu0 %1867
        %v1869 = vmul.f32 %v1868, %v1658
        %v1870 = vadd.f32 %v1869, 1e-06
        %v1871 = vrsqrt.pop %v1870
        %v1872 = vmul.f32 %v1864, %v1871
        %v1874 = vlaneseq
        %v1875 = vshrl.u32 %v1874, 7
        %v1876 = vsub.s32 0, %v1875
        %v1877 = vrot.slane %v1858, %v1876
        %v1879 = vmul.f32 %v1872, %v1877
        %v1881 = vlaneseq
        %v1882 = vshrl.u32 %v1881, 7
        %v1883 = vsub.s32 0, %v1882
        %v1884 = vrot.slane %v1859, %v1883
        %v1886 = vadd.f32 %v1879, %v1884
        %1887 = vst.msk [vmem:[%s562] sm:$0xff] %vm760, %v1886
        %s1888 = sand.u32 %s361, 1
        %s1889 = scalar_lea.sflag [#allocation6], %s1888
        %s1890 = sand.u32 %s361, 1
        %s1891 = smul.addr %s1890, 8
        %s1892 = scalar_lea.vmem [#allocation10], %s1891
        %s1893 = sand.u32 %s389, 1
        %s1894 = scalar_lea.sflag [#allocation12], %s1893
        %s1895 = sand.u32 %s389, 1
        %s1896 = smul.addr %s1895, 32
        %s1897 = scalar_lea.vmem [#allocation11], %s1896
        // Predicated region
        $region93: #{tpu_custom_call.1} parent=75 // pred_check
          %p1898 = pneg %p371
        $region94: #{tpu_custom_call.1} parent=75 // pred_check_branch
          %1900 = sbr.rel (%p1898) target = $region96
        $region95: #{tpu_custom_call.1} parent=75 // pred_region
          %s1902 = ssub.s32 128, 128
          %1903 = vsyncadd %s1889, %s1902
          %s1904 = smul.addr %s39, 2
          %s1905 = sadd.s32 %s40, %s1904
          %s1906 = smul.addr %s1905, 128
          %s1907 = scalar_lea.hbm %s14, %s1906
          %s1909 = sshll.u32 %s1892, 4
          %s1910 = int_to_ptr.vmem [resolvable:$true] %s1909
          %1912 = dma.vmem_to_hbm [thread:$0]  %s1910, 128, %s1907, %s1889
        $region96: #{tpu_custom_call.1} parent=75 // pred_fallthru
          _
        // Predicated region
        $region97: #{tpu_custom_call.1} parent=75 // pred_check
          %p1913 = pneg %p399
        $region98: #{tpu_custom_call.1} parent=75 // pred_check_branch
          %1915 = sbr.rel (%p1913) target = $region100
        $region99: #{tpu_custom_call.1} parent=75 // pred_region
          %s1917 = ssub.s32 512, 512
          %1918 = vsyncadd %s1894, %s1917
          %s1919 = smul.addr %s39, 8
          %s1920 = sadd.s32 %s40, %s1919
          %s1921 = smul.addr %s1920, 128
          %s1922 = scalar_lea.hbm %s15, %s1921
          %s1923 = sshll.u32 %s1897, 4
          %s1924 = int_to_ptr.vmem [resolvable:$true] %s1923
          %1929 = dma.vmem_to_hbm [thread:$0]  %s1924, 512, %s1922, %s1894, 128, 256, 8
        $region100: #{tpu_custom_call.1} parent=75 // pred_fallthru
          _
      $region76: #{tpu_custom_call.1} parent=5 // pred_fallthru
        _
      %p1930 = scmp.le.s32.totalorder 2, %s30
      // Predicated region
      $region101: #{tpu_custom_call.1} parent=5 // pred_check
        %p1931 = pneg %p1930
      $region102: #{tpu_custom_call.1} parent=5 // pred_check_branch
        %1933 = sbr.rel (%p1931) target = $region104
      $region103: #{tpu_custom_call.1} parent=5 // pred_region
        %s1934 = ssub.s32 %s30, 2
        // Predicated region
        $region105: #{tpu_custom_call.1} parent=103 // pred_check
          %p1935 = pneg %p377
        $region106: #{tpu_custom_call.1} parent=103 // pred_check_branch
          %1937 = sbr.rel (%p1935) target = $region108
        $region107: #{tpu_custom_call.1} parent=103 // pred_region
          %s1938 = sand.u32 %s362, 1
          %s1939 = scalar_lea.sflag [#allocation6], %s1938
          %s1940 = sand.u32 %s362, 1
          %s1941 = smul.addr %s1940, 8
          %s1942 = scalar_lea.vmem [#allocation10], %s1941
          %1943 = dma.done %s1939, 128
        $region108: #{tpu_custom_call.1} parent=103 // pred_fallthru
          _
        // Predicated region
        $region109: #{tpu_custom_call.1} parent=103 // pred_check
          %p1944 = pneg %p405
        $region110: #{tpu_custom_call.1} parent=103 // pred_check_branch
          %1946 = sbr.rel (%p1944) target = $region112
        $region111: #{tpu_custom_call.1} parent=103 // pred_region
          %s1947 = sand.u32 %s390, 1
          %s1948 = scalar_lea.sflag [#allocation12], %s1947
          %s1949 = sand.u32 %s390, 1
          %s1950 = smul.addr %s1949, 32
          %s1951 = scalar_lea.vmem [#allocation11], %s1950
          %1952 = dma.done %s1948, 512
        $region112: #{tpu_custom_call.1} parent=103 // pred_fallthru
          _
      $region104: #{tpu_custom_call.1} parent=5 // pred_fallthru
        _
    $region6: #{tpu_custom_call.1} parent=1 // loop_footer
      %s34 = sadd.s32 1, %s30
    $region7: #{tpu_custom_call.1} parent=1 // loop_footer_branch
      %29 = sbr.rel target = $region3
    $region8: #{tpu_custom_call.1} parent=1 // loop_exit
      _
    %1953 = vsyncpa [#allocation5], 1
    %s1954 = scalar_lea.sflag [#allocation5], 1
    %1955 = vsyncpa %s1954, 1
    %1956 = vsyncpa [#allocation8], 1
    %1957 = vsyncpa [#allocation6], 1
    %s1958 = scalar_lea.sflag [#allocation6], 1
    %1959 = vsyncpa %s1958, 1
    %1960 = vsyncpa [#allocation12], 1
    %s1961 = scalar_lea.sflag [#allocation12], 1
    %1962 = vsyncpa %s1961, 1

</llo_original>
